<compile_context>
chip_gen: v6e
topology: v6e:2x2x1
jax: 0.10.0
libtpu: 0.0.40
codegen_flags: <defaults>
</compile_context>

<pallas_src>
import math

import jax
import jax.numpy as jnp
from jax.experimental import pallas as pl
from jax.experimental.pallas import tpu as pltpu


def _gru_edge_kernel(xproj_ref, neibs_ref, e_ref, wxn_ref, we_ref, be_ref,
                     out_ref):
    """One tile of edge rows: fused projections + GRU-style blend."""
    tm = neibs_ref.shape[0]
    D = e_ref.shape[1]

    e = e_ref[...]                                    # (tm, D) f32, reused

    # x-path projection [gate1 | gate3 | fc_x] of the x half of the concat
    # (biases already folded in).  Resident (B, 3*D) block replicated down the
    # tile (tm % B == 0 by construction), or streamed per-tile in the fallback.
    xp = xproj_ref[...]
    reps = tm // xp.shape[0]
    if reps > 1:
        xp = jnp.tile(xp, (reps, 1))                  # (tm, 3*D) f32

    # neibs half of the concat: one lane-dense bf16 MXU matmul, f32 accum.
    px = xp + jnp.dot(neibs_ref[...], wxn_ref[...],
                      preferred_element_type=jnp.float32)

    # edge-path projection [gate2 | gate4 | fc_edge]; cast only the matmul
    # copy of e to bf16, keep the blend copy f32.
    pe = jnp.dot(e.astype(we_ref.dtype), we_ref[...],
                 preferred_element_type=jnp.float32) + be_ref[...]

    # Slice the fused result:  [update | reset | candidate]
    update_gate = jax.nn.sigmoid(px[:, 0:D] + pe[:, 0:D])
    reset_gate = jax.nn.sigmoid(px[:, D:2 * D] + pe[:, D:2 * D])
    h_prime = jnp.tanh(px[:, 2 * D:] + reset_gate * pe[:, 2 * D:])

    # emb = u*e + (1-u)*h  ==  h + u*(e - h)
    out_ref[...] = (h_prime + update_gate * (e - h_prime)).astype(out_ref.dtype)


def _choose_tile(E, B, in_dim, D, *, vmem_budget_bytes=12 * 1024 * 1024):
    """VMEM-budgeted row tile; multiple of B (when sublane-aligned) and 8."""
    step = B if B % 8 == 0 else 8
    # Per-row footprint: double-buffered streams (bf16 neibs + f32 edge +
    # f32 out) + f32 px/pe intermediates (3*D each).
    per_row = 2 * (2 * in_dim + 8 * D) + 24 * D
    cap = max(step, (vmem_budget_bytes // per_row) // step * step)
    cap = min(cap, 2048)
    # Aim for >= 4 grid steps on large E, but never shrink tiles below 512
    # rows; always keep >= 2 steps so both v7x TensorCores get work.
    target = max(512, -(-E // 4))
    target = -(-target // step) * step
    tm = min(cap, target)
    tm = min(tm, -(-E // step) * step)        # never exceed (rounded-up) E
    return max(step, tm)


def fuse_params(params):
    """One-time fusion of the six linears into two lane-dense weight slabs."""
    wx = jnp.concatenate([params["w_g1"], params["w_g3"], params["w_fx"]], axis=1)
    bx = jnp.concatenate([params["b_g1"], params["b_g3"], params["b_fx"]], axis=1)
    we = jnp.concatenate([params["w_g2"], params["w_g4"], params["w_fe"]], axis=1)
    be = jnp.concatenate([params["b_g2"], params["b_g4"], params["b_fe"]], axis=1)
    in_dim = wx.shape[0] // 2
    return dict(
        wx_x=wx[:in_dim],                          # f32: tiny XLA x-projection
        wx_n=wx[in_dim:].astype(jnp.bfloat16),     # bf16: resident MXU operand
        bx=bx,                                     # f32 (folded into xproj)
        we=we.astype(jnp.bfloat16),                # bf16: resident MXU operand
        be=be,                                     # f32 (scaled by reset gate)
    )


def gru_edge_forward(x, neibs, edge_emb, mask, fused):
    """x: (B, In); neibs: (E, In); edge_emb: (E, D); mask unused (API parity)."""
    del mask  # unused in the PyTorch forward
    B, in_dim = x.shape
    E, D = edge_emb.shape
    n_sample = E // B
    three_d = 3 * D

    # Hoist the heavily-reused x projection (the same B rows would otherwise
    # be re-multiplied n_sample times) out of the kernel.  Tiny: (B, 3*D).
    xproj = (x @ fused["wx_x"] + fused["bx"]).astype(jnp.float32)

    neibs_bf16 = neibs.astype(jnp.bfloat16)

    tm = _choose_tile(E, B, in_dim, D)
    grid = (pl.cdiv(E, tm),)

    resident_x = (B % 8 == 0) and (tm % B == 0)
    if resident_x:
        xproj_in = xproj                                          # (B, 3*D) resident
        xproj_spec = pl.BlockSpec((B, three_d), lambda i: (0, 0))
    else:
        # Fallback for sublane-unaligned batch sizes: replicate the small x
        # projection in XLA and stream it per tile.
        xproj_in = jnp.tile(xproj, (n_sample, 1))
        xproj_spec = pl.BlockSpec((tm, three_d), lambda i: (i, 0))

    return pl.pallas_call(
        _gru_edge_kernel,
        out_shape=jax.ShapeDtypeStruct((E, D), jnp.float32),
        grid=grid,
        in_specs=[
            xproj_spec,                                            # x-path proj
            pl.BlockSpec((tm, in_dim), lambda i: (i, 0)),          # neibs tile (bf16)
            pl.BlockSpec((tm, D), lambda i: (i, 0)),               # edge tile (f32)
            pl.BlockSpec((in_dim, three_d), lambda i: (0, 0)),     # wx_n (resident)
            pl.BlockSpec((D, three_d), lambda i: (0, 0)),          # we (resident)
            pl.BlockSpec((1, three_d), lambda i: (0, 0)),          # be
        ],
        out_specs=pl.BlockSpec((tm, D), lambda i: (i, 0)),
        compiler_params=pltpu.CompilerParams(
            dimension_semantics=("parallel",)),                    # megacore on v7x
    )(xproj_in, neibs_bf16, edge_emb, fused["wx_n"], fused["we"], fused["be"])


def _linear_init(key, fan_in, fan_out):
    """PyTorch nn.Linear default init: U(-1/sqrt(fan_in), 1/sqrt(fan_in))."""
    kw, kb = jax.random.split(key)
    bound = 1.0 / math.sqrt(fan_in)
    w = jax.random.uniform(kw, (fan_in, fan_out), jnp.float32, -bound, bound)
    b = jax.random.uniform(kb, (1, fan_out), jnp.float32, -bound, bound)
    return w, b


def make_params(key, input_dim, edge_dim):
    keys = jax.random.split(key, 6)
    w_g1, b_g1 = _linear_init(keys[0], 2 * input_dim, edge_dim)  # gate1
    w_g2, b_g2 = _linear_init(keys[1], edge_dim, edge_dim)       # gate2
    w_g3, b_g3 = _linear_init(keys[2], 2 * input_dim, edge_dim)  # gate3
    w_g4, b_g4 = _linear_init(keys[3], edge_dim, edge_dim)       # gate4
    w_fx, b_fx = _linear_init(keys[4], 2 * input_dim, edge_dim)  # fc_x
    w_fe, b_fe = _linear_init(keys[5], edge_dim, edge_dim)       # fc_edge
    return dict(w_g1=w_g1, b_g1=b_g1, w_g2=w_g2, b_g2=b_g2,
                w_g3=w_g3, b_g3=b_g3, w_g4=w_g4, b_g4=b_g4,
                w_fx=w_fx, b_fx=b_fx, w_fe=w_fe, b_fe=b_fe)


def _reference(x, neibs, edge_emb, params, n_sample):
    """Pure-JAX f32 reference mirroring the PyTorch forward."""
    x_input = jnp.concatenate([jnp.tile(x, (n_sample, 1)), neibs], axis=1)

    def lin(v, w, b):
        return v @ w + b

    update = jax.nn.sigmoid(lin(x_input, params["w_g1"], params["b_g1"])
                            + lin(edge_emb, params["w_g2"], params["b_g2"]))
    reset = jax.nn.sigmoid(lin(x_input, params["w_g3"], params["b_g3"])
                           + lin(edge_emb, params["w_g4"], params["b_g4"]))
    h_prime = jnp.tanh(lin(x_input, params["w_fx"], params["b_fx"])
                       + reset * lin(edge_emb, params["w_fe"], params["b_fe"]))
    return update * edge_emb + (1.0 - update) * h_prime


if __name__ == "__main__":
    # Small shapes consistent with GRUEdge.forward:
    #   x: (B, In), neibs: (E, In), edge_emb: (E, D), E = n_sample * B.
    B = 8
    n_sample = 128
    E = B * n_sample            # 1024 edges -> tm=512, grid of 2 (both v7x TCs)
    input_dim = 64              # 2 * input_dim = 128 (lane-dense)
    edge_dim = 128              # D and 3*D lane-dense

    key = jax.random.PRNGKey(0)
    kx, kn, ke, kp = jax.random.split(key, 4)
    x = jax.random.normal(kx, (B, input_dim), jnp.float32)
    neibs = jax.random.normal(kn, (E, input_dim), jnp.float32)
    edge_emb = jax.random.normal(ke, (E, edge_dim), jnp.float32)
    mask = jnp.ones((E,), jnp.float32)   # unused by forward; API parity only

    params = make_params(kp, input_dim, edge_dim)
    fused = fuse_params(params)          # one-time weight fusion / bf16 cast

    emb = gru_edge_forward(x, neibs, edge_emb, mask, fused)
    emb = jax.block_until_ready(emb)
    assert emb.shape == (E, edge_dim)

    ref = jax.block_until_ready(_reference(x, neibs, edge_emb, params, n_sample))
    max_err = float(jnp.max(jnp.abs(emb - ref)))
    assert max_err < 5e-2, f"mismatch vs reference: max_err={max_err}"

    print("KERNEL_OK")
</pallas_src>

<mosaic_0001>
module attributes {stable_mosaic.version = 11 : i64} {
  func.func @_gru_edge_kernel(%arg0: i32, %arg1: memref<8x384xf32, #tpu.memory_space<vmem>>, %arg2: memref<512x64xbf16, #tpu.memory_space<vmem>>, %arg3: memref<512x128xf32, #tpu.memory_space<vmem>>, %arg4: memref<64x384xbf16, #tpu.memory_space<vmem>>, %arg5: memref<128x384xbf16, #tpu.memory_space<vmem>>, %arg6: memref<1x384xf32, #tpu.memory_space<vmem>>, %arg7: memref<512x128xf32, #tpu.memory_space<vmem>>) attributes {dimension_semantics = [#tpu.dimension_semantics<parallel>], iteration_bounds = array<i64: 2>, scalar_prefetch = 0 : i64, scratch_operands = 0 : i64, tpu.core_type = #tpu.core_type<tc>, window_params = [{pipeline_mode = #tpu.pipeline_mode<synchronous>, transform_indices = @transform_0, window_bounds = array<i64: 8, 384>}, {transform_indices = @transform_1, window_bounds = array<i64: 512, 64>}, {transform_indices = @transform_2, window_bounds = array<i64: 512, 128>}, {pipeline_mode = #tpu.pipeline_mode<synchronous>, transform_indices = @transform_3, window_bounds = array<i64: 64, 384>}, {pipeline_mode = #tpu.pipeline_mode<synchronous>, transform_indices = @transform_4, window_bounds = array<i64: 128, 384>}, {pipeline_mode = #tpu.pipeline_mode<synchronous>, transform_indices = @transform_5, window_bounds = array<i64: 1, 384>}, {transform_indices = @transform_6, window_bounds = array<i64: 512, 128>}]} {
    %c0 = arith.constant 0 : index
    %c0_0 = arith.constant 0 : index
    %0 = vector.load %arg3[%c0, %c0_0] : memref<512x128xf32, #tpu.memory_space<vmem>>, vector<512x128xf32>
    %c0_1 = arith.constant 0 : index
    %c0_2 = arith.constant 0 : index
    %1 = vector.load %arg1[%c0_1, %c0_2] : memref<8x384xf32, #tpu.memory_space<vmem>>, vector<8x384xf32>
    %2 = tpu.concatenate %1, %1, %1, %1, %1, %1, %1, %1, %1, %1, %1, %1, %1, %1, %1, %1, %1, %1, %1, %1, %1, %1, %1, %1, %1, %1, %1, %1, %1, %1, %1, %1, %1, %1, %1, %1, %1, %1, %1, %1, %1, %1, %1, %1, %1, %1, %1, %1, %1, %1, %1, %1, %1, %1, %1, %1, %1, %1, %1, %1, %1, %1, %1, %1 in 0 : vector<8x384xf32>, vector<8x384xf32>, vector<8x384xf32>, vector<8x384xf32>, vector<8x384xf32>, vector<8x384xf32>, vector<8x384xf32>, vector<8x384xf32>, vector<8x384xf32>, vector<8x384xf32>, vector<8x384xf32>, vector<8x384xf32>, vector<8x384xf32>, vector<8x384xf32>, vector<8x384xf32>, vector<8x384xf32>, vector<8x384xf32>, vector<8x384xf32>, vector<8x384xf32>, vector<8x384xf32>, vector<8x384xf32>, vector<8x384xf32>, vector<8x384xf32>, vector<8x384xf32>, vector<8x384xf32>, vector<8x384xf32>, vector<8x384xf32>, vector<8x384xf32>, vector<8x384xf32>, vector<8x384xf32>, vector<8x384xf32>, vector<8x384xf32>, vector<8x384xf32>, vector<8x384xf32>, vector<8x384xf32>, vector<8x384xf32>, vector<8x384xf32>, vector<8x384xf32>, vector<8x384xf32>, vector<8x384xf32>, vector<8x384xf32>, vector<8x384xf32>, vector<8x384xf32>, vector<8x384xf32>, vector<8x384xf32>, vector<8x384xf32>, vector<8x384xf32>, vector<8x384xf32>, vector<8x384xf32>, vector<8x384xf32>, vector<8x384xf32>, vector<8x384xf32>, vector<8x384xf32>, vector<8x384xf32>, vector<8x384xf32>, vector<8x384xf32>, vector<8x384xf32>, vector<8x384xf32>, vector<8x384xf32>, vector<8x384xf32>, vector<8x384xf32>, vector<8x384xf32>, vector<8x384xf32>, vector<8x384xf32> -> vector<512x384xf32>
    %c0_3 = arith.constant 0 : index
    %c0_4 = arith.constant 0 : index
    %3 = vector.load %arg2[%c0_3, %c0_4] : memref<512x64xbf16, #tpu.memory_space<vmem>>, vector<512x64xbf16>
    %c0_5 = arith.constant 0 : index
    %c0_6 = arith.constant 0 : index
    %4 = vector.load %arg4[%c0_5, %c0_6] : memref<64x384xbf16, #tpu.memory_space<vmem>>, vector<64x384xbf16>
    %cst = arith.constant dense<0.000000e+00> : vector<512x384xf32>
    %5 = tpu.matmul %3, %4, %cst {dimension_numbers = #tpu.dot_dimension_numbers<[1], [0], [0], [1], [0, 0, 1, 1], [], []>} : vector<512x64xbf16>, vector<64x384xbf16>, vector<512x384xf32> -> vector<512x384xf32>
    %6 = arith.addf %2, %5 : vector<512x384xf32>
    %7 = arith.truncf %0 : vector<512x128xf32> to vector<512x128xbf16>
    %c0_7 = arith.constant 0 : index
    %c0_8 = arith.constant 0 : index
    %8 = vector.load %arg5[%c0_7, %c0_8] : memref<128x384xbf16, #tpu.memory_space<vmem>>, vector<128x384xbf16>
    %cst_9 = arith.constant dense<0.000000e+00> : vector<512x384xf32>
    %9 = tpu.matmul %7, %8, %cst_9 {dimension_numbers = #tpu.dot_dimension_numbers<[1], [0], [0], [1], [0, 0, 1, 1], [], []>} : vector<512x128xbf16>, vector<128x384xbf16>, vector<512x384xf32> -> vector<512x384xf32>
    %c0_10 = arith.constant 0 : index
    %c0_11 = arith.constant 0 : index
    %10 = vector.load %arg6[%c0_10, %c0_11] : memref<1x384xf32, #tpu.memory_space<vmem>>, vector<1x384xf32>
    %11 = vector.broadcast %10 : vector<1x384xf32> to vector<512x384xf32>
    %12 = arith.addf %9, %11 : vector<512x384xf32>
    %13 = vector.extract_strided_slice %6 {offsets = [0, 0], sizes = [512, 128], strides = [1, 1]} : vector<512x384xf32> to vector<512x128xf32>
    %14 = vector.extract_strided_slice %12 {offsets = [0, 0], sizes = [512, 128], strides = [1, 1]} : vector<512x384xf32> to vector<512x128xf32>
    %15 = arith.addf %13, %14 : vector<512x128xf32>
    %16 = arith.negf %15 : vector<512x128xf32>
    %17 = math.exp %16 : vector<512x128xf32>
    %cst_12 = arith.constant 1.000000e+00 : f32
    %18 = vector.broadcast %cst_12 : f32 to vector<512x128xf32>
    %19 = arith.addf %18, %17 : vector<512x128xf32>
    %20 = arith.divf %18, %19 : vector<512x128xf32>
    %21 = vector.extract_strided_slice %6 {offsets = [0, 128], sizes = [512, 128], strides = [1, 1]} : vector<512x384xf32> to vector<512x128xf32>
    %22 = vector.extract_strided_slice %12 {offsets = [0, 128], sizes = [512, 128], strides = [1, 1]} : vector<512x384xf32> to vector<512x128xf32>
    %23 = arith.addf %21, %22 : vector<512x128xf32>
    %24 = arith.negf %23 : vector<512x128xf32>
    %25 = math.exp %24 : vector<512x128xf32>
    %cst_13 = arith.constant 1.000000e+00 : f32
    %26 = vector.broadcast %cst_13 : f32 to vector<512x128xf32>
    %27 = arith.addf %26, %25 : vector<512x128xf32>
    %28 = arith.divf %26, %27 : vector<512x128xf32>
    %29 = vector.extract_strided_slice %6 {offsets = [0, 256], sizes = [512, 128], strides = [1, 1]} : vector<512x384xf32> to vector<512x128xf32>
    %30 = vector.extract_strided_slice %12 {offsets = [0, 256], sizes = [512, 128], strides = [1, 1]} : vector<512x384xf32> to vector<512x128xf32>
    %31 = arith.mulf %28, %30 : vector<512x128xf32>
    %32 = arith.addf %29, %31 : vector<512x128xf32>
    %33 = math.tanh %32 : vector<512x128xf32>
    %34 = arith.subf %0, %33 : vector<512x128xf32>
    %35 = arith.mulf %20, %34 : vector<512x128xf32>
    %36 = arith.addf %33, %35 : vector<512x128xf32>
    %c0_14 = arith.constant 0 : index
    %c0_15 = arith.constant 0 : index
    %37 = vector.load %arg7[%c0_14, %c0_15] : memref<512x128xf32, #tpu.memory_space<vmem>>, vector<512x128xf32>
    tpu.vector_store %arg7[%c0_14, %c0_15], %36 {strides = array<i32>} : memref<512x128xf32, #tpu.memory_space<vmem>>, vector<512x128xf32>,
    return
  }
  func.func @transform_0(%arg0: i32) -> (i32, i32) {
    %c0_i32 = arith.constant 0 : i32
    %c0_i32_0 = arith.constant 0 : i32
    %c0_i32_1 = arith.constant 0 : i32
    return %c0_i32, %c0_i32_0 : i32, i32
  }
  func.func @transform_1(%arg0: i32) -> (i32, i32) {
    %c0_i32 = arith.constant 0 : i32
    %c0_i32_0 = arith.constant 0 : i32
    return %arg0, %c0_i32 : i32, i32
  }
  func.func @transform_2(%arg0: i32) -> (i32, i32) {
    %c0_i32 = arith.constant 0 : i32
    %c0_i32_0 = arith.constant 0 : i32
    return %arg0, %c0_i32 : i32, i32
  }
  func.func @transform_3(%arg0: i32) -> (i32, i32) {
    %c0_i32 = arith.constant 0 : i32
    %c0_i32_0 = arith.constant 0 : i32
    %c0_i32_1 = arith.constant 0 : i32
    return %c0_i32, %c0_i32_0 : i32, i32
  }
  func.func @transform_4(%arg0: i32) -> (i32, i32) {
    %c0_i32 = arith.constant 0 : i32
    %c0_i32_0 = arith.constant 0 : i32
    %c0_i32_1 = arith.constant 0 : i32
    return %c0_i32, %c0_i32_0 : i32, i32
  }
  func.func @transform_5(%arg0: i32) -> (i32, i32) {
    %c0_i32 = arith.constant 0 : i32
    %c0_i32_0 = arith.constant 0 : i32
    %c0_i32_1 = arith.constant 0 : i32
    return %c0_i32, %c0_i32_0 : i32, i32
  }
  func.func @transform_6(%arg0: i32) -> (i32, i32) {
    %c0_i32 = arith.constant 0 : i32
    %c0_i32_0 = arith.constant 0 : i32
    return %arg0, %c0_i32 : i32, i32
  }
}

</mosaic_0001>

<llo_original>
// kernel: tpu_custom_call.1
$region0: #{tpu_custom_call.1}
  #allocation0 [shape = 'u32[]', space=smem, size = 0x4, offset = 0x4, fixed_abs, tag = 'smem constant byte address 0x4 - core index']
  #allocation1 [shape = 'u32[144,128]{1,0:T(1,128)}', space=vmem, size = 0x12000, scoped, tag = 'internal scratch']
  %s0 = inlined_call_operand.vmem [shape: f32[8,384], index: 0, kind: input, shape index: {}]
  %s1 = inlined_call_operand.vmem [shape: bf16[1024,64], index: 1, kind: input, shape index: {}]
  %s2 = inlined_call_operand.hbm [shape: f32[1024,128], index: 2, kind: input, shape index: {}]
  %s3 = inlined_call_operand.vmem [shape: bf16[64,384], index: 3, kind: input, shape index: {}]
  %s4 = inlined_call_operand.vmem [shape: bf16[128,384], index: 4, kind: input, shape index: {}]
  %s5 = inlined_call_operand.vmem [shape: f32[1,384], index: 5, kind: input, shape index: {}]
  %s6 = inlined_call_operand.hbm [shape: f32[1024,128], index: 6, kind: output, shape index: {}]
  %s7 = sld [smem:[#allocation0]]
  $region61: #{tpu_custom_call.1} parent=0
    _
  %s9 = ssub.s32 1, %s7
  %s10 = scalar_select 0, %s9, %s7
  $region1: #{tpu_custom_call.1} parent=0
    #allocation2 [shape = 'u8[524288]{0}', space=vmem, size = 0x80000, scoped, tag = 'input window, operand 2']
    #allocation3 [shape = 's32[2]{0}', space=sflag, size = 0x8, scoped, tag = 'scoped memory for tpu_custom_call.1']
    #allocation4 [shape = 's32[2]{0}', space=sflag, size = 0x8, scoped, tag = 'scoped memory for tpu_custom_call.1']
    #allocation5 [shape = 'u8[524288]{0}', space=vmem, size = 0x80000, scoped, tag = 'output window, operand 0']
    %11 = vsyncpa [#allocation3], 0
    %s12 = scalar_lea.sflag [#allocation3], 1
    %13 = vsyncpa %s12, 0
    %14 = vsyncpa [#allocation4], 0
    %s15 = scalar_lea.sflag [#allocation4], 1
    %16 = vsyncpa %s15, 0
    loop: start=0, step=1, limit=4
    $region2: #{tpu_custom_call.1} parent=1 // loop_pre_header
      _
    $region3: #{tpu_custom_call.1} parent=1 // loop_header
      %s18 = sphi 0, %s22
      %p19 = scmp.ge.s32.totalorder %s18, 4
      %s26 = sphi 0, %s26
      %s28 = sphi 0, %s26
      %s29 = sphi 0, %s28
      %s43 = sphi 0, %s29
      %s49 = sphi 0, %s51
      %s52 = sphi 0, %s49
      %s53 = sphi 0, %s52
      %s69 = sphi 0, %s53
      %s75 = sphi 0, %s77
      %s78 = sphi 0, %s75
      %s79 = sphi 0, %s78
      %s95 = sphi 0, %s79
      %s99 = sphi 0, %s99
      %s101 = sphi 0, %s99
      %s102 = sphi 0, %s101
      %s116 = sphi 0, %s102
      %s120 = sphi 0, %s120
      %s122 = sphi 0, %s120
      %s123 = sphi 0, %s122
      %s137 = sphi 0, %s123
      %s141 = sphi 0, %s141
      %s143 = sphi 0, %s141
      %s144 = sphi 0, %s143
      %s158 = sphi 0, %s144
      %s164 = sphi 0, %s166
      %s167 = sphi 0, %s164
      %s168 = sphi 0, %s167
      %s184 = sphi 0, %s168
    $region4: #{tpu_custom_call.1} parent=1 // loop_header_branch
      %21 = sbr.rel (%p19) target = $region8
    $region5: #{tpu_custom_call.1} parent=1 // loop_body
      %s23 = ssub.s32 %s18, 1
      %s24 = ssub.s32 %s18, 2
      %s25 = sadd.s32 %s18, 1
      %s27 = sadd.s32 %s26, 1
      %p30 = scmp.eq.s32.totalorder %s18, 1
      %p31 = scmp.ne.s32.totalorder %s26, %s28
      %p32 = scmp.eq.s32.totalorder %s18, 0
      %p33 = por %p31, %p32
      %p34 = scmp.ne.s32.totalorder %s26, %s28
      %p35 = scmp.eq.s32.totalorder %s23, 1
      %p36 = por %p34, %p35
      %p37 = scmp.ne.s32.totalorder %s28, %s29
      %p38 = scmp.eq.s32.totalorder %s23, 0
      %p39 = por %p37, %p38
      %p40 = scmp.ne.s32.totalorder %s28, %s29
      %p41 = scmp.eq.s32.totalorder %s24, 1
      %p42 = por %p40, %p41
      %p44 = scmp.ne.s32.totalorder %s29, %s43
      %p45 = scmp.eq.s32.totalorder %s24, 0
      %p46 = por %p44, %p45
      %s47 = ssub.s32 %s18, %s25
      %p48 = scmp.eq.s32.totalorder %s47, 0
      %s50 = sadd.s32 %s49, 1
      %s51 = scalar_select %p48, %s49, %s50
      %p54 = pneg %p48
      %p55 = scmp.eq.s32.totalorder %s18, 1
      %p56 = por %p54, %p55
      %p57 = scmp.ne.s32.totalorder %s49, %s52
      %p58 = scmp.eq.s32.totalorder %s18, 0
      %p59 = por %p57, %p58
      %p60 = scmp.ne.s32.totalorder %s49, %s52
      %p61 = scmp.eq.s32.totalorder %s23, 1
      %p62 = por %p60, %p61
      %p63 = scmp.ne.s32.totalorder %s52, %s53
      %p64 = scmp.eq.s32.totalorder %s23, 0
      %p65 = por %p63, %p64
      %p66 = scmp.ne.s32.totalorder %s52, %s53
      %p67 = scmp.eq.s32.totalorder %s24, 1
      %p68 = por %p66, %p67
      %p70 = scmp.ne.s32.totalorder %s53, %s69
      %p71 = scmp.eq.s32.totalorder %s24, 0
      %p72 = por %p70, %p71
      %s73 = ssub.s32 %s18, %s25
      %p74 = scmp.eq.s32.totalorder %s73, 0
      %s76 = sadd.s32 %s75, 1
      %s77 = scalar_select %p74, %s75, %s76
      %p80 = pneg %p74
      %p81 = scmp.eq.s32.totalorder %s18, 1
      %p82 = por %p80, %p81
      %p83 = scmp.ne.s32.totalorder %s75, %s78
      %p84 = scmp.eq.s32.totalorder %s18, 0
      %p85 = por %p83, %p84
      %p86 = scmp.ne.s32.totalorder %s75, %s78
      %p87 = scmp.eq.s32.totalorder %s23, 1
      %p88 = por %p86, %p87
      %p89 = scmp.ne.s32.totalorder %s78, %s79
      %p90 = scmp.eq.s32.totalorder %s23, 0
      %p91 = por %p89, %p90
      %p92 = scmp.ne.s32.totalorder %s78, %s79
      %p93 = scmp.eq.s32.totalorder %s24, 1
      %p94 = por %p92, %p93
      %p96 = scmp.ne.s32.totalorder %s79, %s95
      %p97 = scmp.eq.s32.totalorder %s24, 0
      %p98 = por %p96, %p97
      %s100 = sadd.s32 %s99, 1
      %p103 = scmp.eq.s32.totalorder %s18, 1
      %p104 = scmp.ne.s32.totalorder %s99, %s101
      %p105 = scmp.eq.s32.totalorder %s18, 0
      %p106 = por %p104, %p105
      %p107 = scmp.ne.s32.totalorder %s99, %s101
      %p108 = scmp.eq.s32.totalorder %s23, 1
      %p109 = por %p107, %p108
      %p110 = scmp.ne.s32.totalorder %s101, %s102
      %p111 = scmp.eq.s32.totalorder %s23, 0
      %p112 = por %p110, %p111
      %p113 = scmp.ne.s32.totalorder %s101, %s102
      %p114 = scmp.eq.s32.totalorder %s24, 1
      %p115 = por %p113, %p114
      %p117 = scmp.ne.s32.totalorder %s102, %s116
      %p118 = scmp.eq.s32.totalorder %s24, 0
      %p119 = por %p117, %p118
      %s121 = sadd.s32 %s120, 1
      %p124 = scmp.eq.s32.totalorder %s18, 1
      %p125 = scmp.ne.s32.totalorder %s120, %s122
      %p126 = scmp.eq.s32.totalorder %s18, 0
      %p127 = por %p125, %p126
      %p128 = scmp.ne.s32.totalorder %s120, %s122
      %p129 = scmp.eq.s32.totalorder %s23, 1
      %p130 = por %p128, %p129
      %p131 = scmp.ne.s32.totalorder %s122, %s123
      %p132 = scmp.eq.s32.totalorder %s23, 0
      %p133 = por %p131, %p132
      %p134 = scmp.ne.s32.totalorder %s122, %s123
      %p135 = scmp.eq.s32.totalorder %s24, 1
      %p136 = por %p134, %p135
      %p138 = scmp.ne.s32.totalorder %s123, %s137
      %p139 = scmp.eq.s32.totalorder %s24, 0
      %p140 = por %p138, %p139
      %s142 = sadd.s32 %s141, 1
      %p145 = scmp.eq.s32.totalorder %s18, 1
      %p146 = scmp.ne.s32.totalorder %s141, %s143
      %p147 = scmp.eq.s32.totalorder %s18, 0
      %p148 = por %p146, %p147
      %p149 = scmp.ne.s32.totalorder %s141, %s143
      %p150 = scmp.eq.s32.totalorder %s23, 1
      %p151 = por %p149, %p150
      %p152 = scmp.ne.s32.totalorder %s143, %s144
      %p153 = scmp.eq.s32.totalorder %s23, 0
      %p154 = por %p152, %p153
      %p155 = scmp.ne.s32.totalorder %s143, %s144
      %p156 = scmp.eq.s32.totalorder %s24, 1
      %p157 = por %p155, %p156
      %p159 = scmp.ne.s32.totalorder %s144, %s158
      %p160 = scmp.eq.s32.totalorder %s24, 0
      %p161 = por %p159, %p160
      %s162 = ssub.s32 %s18, %s25
      %p163 = scmp.eq.s32.totalorder %s162, 0
      %s165 = sadd.s32 %s164, 1
      %s166 = scalar_select %p163, %s164, %s165
      %p169 = pneg %p163
      %p170 = scmp.eq.s32.totalorder %s18, 1
      %p171 = por %p169, %p170
      %p172 = scmp.ne.s32.totalorder %s164, %s167
      %p173 = scmp.eq.s32.totalorder %s18, 0
      %p174 = por %p172, %p173
      %p175 = scmp.ne.s32.totalorder %s164, %s167
      %p176 = scmp.eq.s32.totalorder %s23, 1
      %p177 = por %p175, %p176
      %p178 = scmp.ne.s32.totalorder %s167, %s168
      %p179 = scmp.eq.s32.totalorder %s23, 0
      %p180 = por %p178, %p179
      %p181 = scmp.ne.s32.totalorder %s167, %s168
      %p182 = scmp.eq.s32.totalorder %s24, 1
      %p183 = por %p181, %p182
      %p185 = scmp.ne.s32.totalorder %s168, %s184
      %p186 = scmp.eq.s32.totalorder %s24, 0
      %p187 = por %p185, %p186
      %p188 = scmp.le.s32.totalorder 1, %s18
      %p189 = scmp.lt.s32.totalorder %s18, 3
      %p190 = pnand %p188, %p189
      %p191 = pneg %p190
      // Predicated region
      $region9: #{tpu_custom_call.1} parent=5 // pred_check
        _
      $region10: #{tpu_custom_call.1} parent=5 // pred_check_branch
        %193 = sbr.rel (%p190) target = $region12
      $region11: #{tpu_custom_call.1} parent=5 // pred_region
        %s194 = ssub.s32 %s18, 1
        // Predicated region
        $region13: #{tpu_custom_call.1} parent=11 // pred_check
          %p195 = pneg %p39
        $region14: #{tpu_custom_call.1} parent=11 // pred_check_branch
          %197 = sbr.rel (%p195) target = $region16
        $region15: #{tpu_custom_call.1} parent=11 // pred_region
          _
        $region16: #{tpu_custom_call.1} parent=11 // pred_fallthru
          _
        // Predicated region
        $region17: #{tpu_custom_call.1} parent=11 // pred_check
          %p198 = pneg %p112
        $region18: #{tpu_custom_call.1} parent=11 // pred_check_branch
          %200 = sbr.rel (%p198) target = $region20
        $region19: #{tpu_custom_call.1} parent=11 // pred_region
          _
        $region20: #{tpu_custom_call.1} parent=11 // pred_fallthru
          _
        // Predicated region
        $region21: #{tpu_custom_call.1} parent=11 // pred_check
          %p201 = pneg %p133
        $region22: #{tpu_custom_call.1} parent=11 // pred_check_branch
          %203 = sbr.rel (%p201) target = $region24
        $region23: #{tpu_custom_call.1} parent=11 // pred_region
          _
        $region24: #{tpu_custom_call.1} parent=11 // pred_fallthru
          _
        // Predicated region
        $region25: #{tpu_custom_call.1} parent=11 // pred_check
          %p204 = pneg %p154
        $region26: #{tpu_custom_call.1} parent=11 // pred_check_branch
          %206 = sbr.rel (%p204) target = $region28
        $region27: #{tpu_custom_call.1} parent=11 // pred_region
          _
        $region28: #{tpu_custom_call.1} parent=11 // pred_fallthru
          _
      $region12: #{tpu_custom_call.1} parent=5 // pred_fallthru
        _
      %p207 = scmp.lt.s32.totalorder %s18, 2
      // Predicated region
      $region29: #{tpu_custom_call.1} parent=5 // pred_check
        %p208 = pneg %p207
      $region30: #{tpu_custom_call.1} parent=5 // pred_check_branch
        %210 = sbr.rel (%p208) target = $region32
      $region31: #{tpu_custom_call.1} parent=5 // pred_region
        // Predicated region
        $region33: #{tpu_custom_call.1} parent=31 // pred_check
          %p211 = pneg %p59
        $region34: #{tpu_custom_call.1} parent=31 // pred_check_branch
          %213 = sbr.rel (%p211) target = $region36
        $region35: #{tpu_custom_call.1} parent=31 // pred_region
          %s214 = smul.u32 64, %s18
          %p215 = scmp.lt.s32.totalorder %s214, 127
          %s216 = scalar_select %p215, %s214, 127
          %s217 = smul.addr %s216, 4
          %s218 = scalar_lea.vmem %s1, %s217
          %s219 = smul.u32 64, %s18
        $region36: #{tpu_custom_call.1} parent=31 // pred_fallthru
          _
        // Predicated region
        $region37: #{tpu_custom_call.1} parent=31 // pred_check
          %p220 = pneg %p85
        $region38: #{tpu_custom_call.1} parent=31 // pred_check_branch
          %222 = sbr.rel (%p220) target = $region40
        $region39: #{tpu_custom_call.1} parent=31 // pred_region
          %s223 = sand.u32 %s75, 1
          %s224 = scalar_lea.sflag [#allocation3], %s223
          %s225 = sand.u32 %s75, 1
          %s226 = smul.addr %s225, 512
          %s227 = scalar_lea.vmem [#allocation2], %s226
          %s228 = smul.u32 64, %s18
          %s230 = ssub.s32 8192, 8192
          %231 = vsyncadd %s224, %s230
          %s232 = smul.addr %s228, 128
          %s233 = scalar_lea.hbm %s2, %s232
          %s234 = sshll.u32 %s227, 4
          %s235 = int_to_ptr.vmem [resolvable:$true] %s234
          %240 = dma.hbm_to_vmem [thread:$0]  %s233, 8192, %s235, %s224, 128, 128, 8
        $region40: #{tpu_custom_call.1} parent=31 // pred_fallthru
          _
      $region32: #{tpu_custom_call.1} parent=5 // pred_fallthru
        _
      %p241 = scmp.le.s32.totalorder 1, %s18
      %p242 = scmp.lt.s32.totalorder %s18, 3
      %p243 = pnand %p241, %p242
      %p244 = pneg %p243
      // Predicated region
      $region41: #{tpu_custom_call.1} parent=5 // pred_check
        _
      $region42: #{tpu_custom_call.1} parent=5 // pred_check_branch
        %246 = sbr.rel (%p243) target = $region44
      $region43: #{tpu_custom_call.1} parent=5 // pred_region
        %s247 = ssub.s32 %s18, 1
        %s248 = sand.u32 %s78, 1
        %s249 = scalar_lea.sflag [#allocation3], %s248
        %s250 = sand.u32 %s78, 1
        %s251 = smul.addr %s250, 512
        %s252 = scalar_lea.vmem [#allocation2], %s251
        // Predicated region
        $region45: #{tpu_custom_call.1} parent=43 // pred_check
          %p253 = pneg %p91
        $region46: #{tpu_custom_call.1} parent=43 // pred_check_branch
          %255 = sbr.rel (%p253) target = $region48
        $region47: #{tpu_custom_call.1} parent=43 // pred_region
          %256 = dma.done %s249, 8192
        $region48: #{tpu_custom_call.1} parent=43 // pred_fallthru
          _
        %p257 = pneg %p39
        %p258 = pneg %p36
        %s259 = smul.u32 64, %s23
        %p260 = scmp.lt.s32.totalorder %s259, 127
        %s261 = scalar_select %p260, %s259, 127
        %s262 = smul.addr %s261, 4
        %s263 = scalar_lea.vmem %s1, %s262
        %p264 = pneg %p65
        %p265 = pneg %p62
        %s266 = sand.u32 %s78, 1
        %s267 = scalar_lea.sflag [#allocation3], %s266
        %s268 = sand.u32 %s78, 1
        %s269 = smul.addr %s268, 512
        %s270 = scalar_lea.vmem [#allocation2], %s269
        %p271 = pneg %p91
        %p272 = pneg %p88
        %p273 = pneg %p112
        %p274 = pneg %p109
        %p275 = pneg %p133
        %p276 = pneg %p130
        %p277 = pneg %p154
        %p278 = pneg %p151
        %p279 = pneg %p180
        %p280 = pneg %p177
        %s281 = sand.u32 %s167, 1
        %s282 = scalar_lea.sflag [#allocation4], %s281
        %s283 = sand.u32 %s167, 1
        %s284 = smul.addr %s283, 512
        %s285 = scalar_lea.vmem [#allocation5], %s284
        %s286 = smul.u32 64, %s23
        %p287 = scmp.lt.s32.totalorder %s286, 127
        %s288 = scalar_select %p287, %s286, 127
        %s289 = smul.addr %s288, 4
        %s290 = scalar_lea.vmem %s1, %s289
        %s291 = smul.u32 64, %s23
        %s292 = smul.u32 64, %s23
        %s293 = smul.u32 64, %s23
        %v295 = vld [vmem:[%s252] sm:$0xff]
        %v296 = vld [vmem:[%s252 + $0x8] sm:$0xff]
        %v297 = vld [vmem:[%s252 + $0x10] sm:$0xff]
        %v298 = vld [vmem:[%s252 + $0x18] sm:$0xff]
        %v299 = vld [vmem:[%s252 + $0x20] sm:$0xff]
        %v300 = vld [vmem:[%s252 + $0x28] sm:$0xff]
        %v301 = vld [vmem:[%s252 + $0x30] sm:$0xff]
        %v302 = vld [vmem:[%s252 + $0x38] sm:$0xff]
        %v303 = vld [vmem:[%s252 + $0x40] sm:$0xff]
        %v304 = vld [vmem:[%s252 + $0x48] sm:$0xff]
        %v305 = vld [vmem:[%s252 + $0x50] sm:$0xff]
        %v306 = vld [vmem:[%s252 + $0x58] sm:$0xff]
        %v307 = vld [vmem:[%s252 + $0x60] sm:$0xff]
        %v308 = vld [vmem:[%s252 + $0x68] sm:$0xff]
        %v309 = vld [vmem:[%s252 + $0x70] sm:$0xff]
        %v310 = vld [vmem:[%s252 + $0x78] sm:$0xff]
        %v311 = vld [vmem:[%s252 + $0x80] sm:$0xff]
        %v312 = vld [vmem:[%s252 + $0x88] sm:$0xff]
        %v313 = vld [vmem:[%s252 + $0x90] sm:$0xff]
        %v314 = vld [vmem:[%s252 + $0x98] sm:$0xff]
        %v315 = vld [vmem:[%s252 + $0xa0] sm:$0xff]
        %v316 = vld [vmem:[%s252 + $0xa8] sm:$0xff]
        %v317 = vld [vmem:[%s252 + $0xb0] sm:$0xff]
        %v318 = vld [vmem:[%s252 + $0xb8] sm:$0xff]
        %v319 = vld [vmem:[%s252 + $0xc0] sm:$0xff]
        %v320 = vld [vmem:[%s252 + $0xc8] sm:$0xff]
        %v321 = vld [vmem:[%s252 + $0xd0] sm:$0xff]
        %v322 = vld [vmem:[%s252 + $0xd8] sm:$0xff]
        %v323 = vld [vmem:[%s252 + $0xe0] sm:$0xff]
        %v324 = vld [vmem:[%s252 + $0xe8] sm:$0xff]
        %v325 = vld [vmem:[%s252 + $0xf0] sm:$0xff]
        %v326 = vld [vmem:[%s252 + $0xf8] sm:$0xff]
        %v327 = vld [vmem:[%s252 + $0x100] sm:$0xff]
        %v328 = vld [vmem:[%s252 + $0x108] sm:$0xff]
        %v329 = vld [vmem:[%s252 + $0x110] sm:$0xff]
        %v330 = vld [vmem:[%s252 + $0x118] sm:$0xff]
        %v331 = vld [vmem:[%s252 + $0x120] sm:$0xff]
        %v332 = vld [vmem:[%s252 + $0x128] sm:$0xff]
        %v333 = vld [vmem:[%s252 + $0x130] sm:$0xff]
        %v334 = vld [vmem:[%s252 + $0x138] sm:$0xff]
        %v335 = vld [vmem:[%s252 + $0x140] sm:$0xff]
        %v336 = vld [vmem:[%s252 + $0x148] sm:$0xff]
        %v337 = vld [vmem:[%s252 + $0x150] sm:$0xff]
        %v338 = vld [vmem:[%s252 + $0x158] sm:$0xff]
        %v339 = vld [vmem:[%s252 + $0x160] sm:$0xff]
        %v340 = vld [vmem:[%s252 + $0x168] sm:$0xff]
        %v341 = vld [vmem:[%s252 + $0x170] sm:$0xff]
        %v342 = vld [vmem:[%s252 + $0x178] sm:$0xff]
        %v343 = vld [vmem:[%s252 + $0x180] sm:$0xff]
        %v344 = vld [vmem:[%s252 + $0x188] sm:$0xff]
        %v345 = vld [vmem:[%s252 + $0x190] sm:$0xff]
        %v346 = vld [vmem:[%s252 + $0x198] sm:$0xff]
        %v347 = vld [vmem:[%s252 + $0x1a0] sm:$0xff]
        %v348 = vld [vmem:[%s252 + $0x1a8] sm:$0xff]
        %v349 = vld [vmem:[%s252 + $0x1b0] sm:$0xff]
        %v350 = vld [vmem:[%s252 + $0x1b8] sm:$0xff]
        %v351 = vld [vmem:[%s252 + $0x1c0] sm:$0xff]
        %v352 = vld [vmem:[%s252 + $0x1c8] sm:$0xff]
        %v353 = vld [vmem:[%s252 + $0x1d0] sm:$0xff]
        %v354 = vld [vmem:[%s252 + $0x1d8] sm:$0xff]
        %v355 = vld [vmem:[%s252 + $0x1e0] sm:$0xff]
        %v356 = vld [vmem:[%s252 + $0x1e8] sm:$0xff]
        %v357 = vld [vmem:[%s252 + $0x1f0] sm:$0xff]
        %v358 = vld [vmem:[%s252 + $0x1f8] sm:$0xff]
        %v359 = vld [vmem:[%s0] sm:$0xff]
        %v360 = vld [vmem:[%s0 + $0x8] sm:$0xff]
        %v361 = vld [vmem:[%s0 + $0x10] sm:$0xff]
        %v362 = vld [vmem:[%s290] sm:$0xf]
        %v363 = vld [vmem:[%s290 + $0x4] sm:$0xf]
        %v364 = vld [vmem:[%s290 + $0x8] sm:$0xf]
        %v365 = vld [vmem:[%s290 + $0xc] sm:$0xf]
        %v366 = vld [vmem:[%s290 + $0x10] sm:$0xf]
        %v367 = vld [vmem:[%s290 + $0x14] sm:$0xf]
        %v368 = vld [vmem:[%s290 + $0x18] sm:$0xf]
        %v369 = vld [vmem:[%s290 + $0x1c] sm:$0xf]
        %v370 = vld [vmem:[%s290 + $0x20] sm:$0xf]
        %v371 = vld [vmem:[%s290 + $0x24] sm:$0xf]
        %v372 = vld [vmem:[%s290 + $0x28] sm:$0xf]
        %v373 = vld [vmem:[%s290 + $0x2c] sm:$0xf]
        %v374 = vld [vmem:[%s290 + $0x30] sm:$0xf]
        %v375 = vld [vmem:[%s290 + $0x34] sm:$0xf]
        %v376 = vld [vmem:[%s290 + $0x38] sm:$0xf]
        %v377 = vld [vmem:[%s290 + $0x3c] sm:$0xf]
        %v378 = vld [vmem:[%s290 + $0x40] sm:$0xf]
        %v379 = vld [vmem:[%s290 + $0x44] sm:$0xf]
        %v380 = vld [vmem:[%s290 + $0x48] sm:$0xf]
        %v381 = vld [vmem:[%s290 + $0x4c] sm:$0xf]
        %v382 = vld [vmem:[%s290 + $0x50] sm:$0xf]
        %v383 = vld [vmem:[%s290 + $0x54] sm:$0xf]
        %v384 = vld [vmem:[%s290 + $0x58] sm:$0xf]
        %v385 = vld [vmem:[%s290 + $0x5c] sm:$0xf]
        %v386 = vld [vmem:[%s290 + $0x60] sm:$0xf]
        %v387 = vld [vmem:[%s290 + $0x64] sm:$0xf]
        %v388 = vld [vmem:[%s290 + $0x68] sm:$0xf]
        %v389 = vld [vmem:[%s290 + $0x6c] sm:$0xf]
        %v390 = vld [vmem:[%s290 + $0x70] sm:$0xf]
        %v391 = vld [vmem:[%s290 + $0x74] sm:$0xf]
        %v392 = vld [vmem:[%s290 + $0x78] sm:$0xf]
        %v393 = vld [vmem:[%s290 + $0x7c] sm:$0xf]
        %v394 = vld [vmem:[%s290 + $0x80] sm:$0xf]
        %v395 = vld [vmem:[%s290 + $0x84] sm:$0xf]
        %v396 = vld [vmem:[%s290 + $0x88] sm:$0xf]
        %v397 = vld [vmem:[%s290 + $0x8c] sm:$0xf]
        %v398 = vld [vmem:[%s290 + $0x90] sm:$0xf]
        %v399 = vld [vmem:[%s290 + $0x94] sm:$0xf]
        %v400 = vld [vmem:[%s290 + $0x98] sm:$0xf]
        %v401 = vld [vmem:[%s290 + $0x9c] sm:$0xf]
        %v402 = vld [vmem:[%s290 + $0xa0] sm:$0xf]
        %v403 = vld [vmem:[%s290 + $0xa4] sm:$0xf]
        %v404 = vld [vmem:[%s290 + $0xa8] sm:$0xf]
        %v405 = vld [vmem:[%s290 + $0xac] sm:$0xf]
        %v406 = vld [vmem:[%s290 + $0xb0] sm:$0xf]
        %v407 = vld [vmem:[%s290 + $0xb4] sm:$0xf]
        %v408 = vld [vmem:[%s290 + $0xb8] sm:$0xf]
        %v409 = vld [vmem:[%s290 + $0xbc] sm:$0xf]
        %v410 = vld [vmem:[%s290 + $0xc0] sm:$0xf]
        %v411 = vld [vmem:[%s290 + $0xc4] sm:$0xf]
        %v412 = vld [vmem:[%s290 + $0xc8] sm:$0xf]
        %v413 = vld [vmem:[%s290 + $0xcc] sm:$0xf]
        %v414 = vld [vmem:[%s290 + $0xd0] sm:$0xf]
        %v415 = vld [vmem:[%s290 + $0xd4] sm:$0xf]
        %v416 = vld [vmem:[%s290 + $0xd8] sm:$0xf]
        %v417 = vld [vmem:[%s290 + $0xdc] sm:$0xf]
        %v418 = vld [vmem:[%s290 + $0xe0] sm:$0xf]
        %v419 = vld [vmem:[%s290 + $0xe4] sm:$0xf]
        %v420 = vld [vmem:[%s290 + $0xe8] sm:$0xf]
        %v421 = vld [vmem:[%s290 + $0xec] sm:$0xf]
        %v422 = vld [vmem:[%s290 + $0xf0] sm:$0xf]
        %v423 = vld [vmem:[%s290 + $0xf4] sm:$0xf]
        %v424 = vld [vmem:[%s290 + $0xf8] sm:$0xf]
        %v425 = vld [vmem:[%s290 + $0xfc] sm:$0xf]
        %v426 = vld [vmem:[%s3] sm:$0xff]
        %v427 = vld [vmem:[%s3 + $0x8] sm:$0xf]
        %v428 = vld [vmem:[%s3 + $0xc] sm:$0xff]
        %v429 = vld [vmem:[%s3 + $0x14] sm:$0xf]
        %v430 = vld [vmem:[%s3 + $0x18] sm:$0xff]
        %v431 = vld [vmem:[%s3 + $0x20] sm:$0xf]
        %v432 = vld [vmem:[%s3 + $0x24] sm:$0xff]
        %v433 = vld [vmem:[%s3 + $0x2c] sm:$0xf]
        %v434 = vld [vmem:[%s3 + $0x30] sm:$0xff]
        %v435 = vld [vmem:[%s3 + $0x38] sm:$0xf]
        %v436 = vld [vmem:[%s3 + $0x3c] sm:$0xff]
        %v437 = vld [vmem:[%s3 + $0x44] sm:$0xf]
        %v438 = vld [vmem:[%s3 + $0x48] sm:$0xff]
        %v439 = vld [vmem:[%s3 + $0x50] sm:$0xf]
        %v440 = vld [vmem:[%s3 + $0x54] sm:$0xff]
        %v441 = vld [vmem:[%s3 + $0x5c] sm:$0xf]
        %v506 = vunpack.c.l.b16 %v362
        %v507 = vunpack.c.l.b16 %v363
        %v508 = vunpack.c.l.b16 %v364
        %v509 = vunpack.c.l.b16 %v365
        %v510 = vunpack.c.l.b16 %v366
        %v511 = vunpack.c.l.b16 %v367
        %v512 = vunpack.c.l.b16 %v368
        %v513 = vunpack.c.l.b16 %v369
        %v514 = vunpack.c.l.b16 %v370
        %v515 = vunpack.c.l.b16 %v371
        %v516 = vunpack.c.l.b16 %v372
        %v517 = vunpack.c.l.b16 %v373
        %v518 = vunpack.c.l.b16 %v374
        %v519 = vunpack.c.l.b16 %v375
        %v520 = vunpack.c.l.b16 %v376
        %v521 = vunpack.c.l.b16 %v377
        %v522 = vunpack.c.l.b16 %v378
        %v523 = vunpack.c.l.b16 %v379
        %v524 = vunpack.c.l.b16 %v380
        %v525 = vunpack.c.l.b16 %v381
        %v526 = vunpack.c.l.b16 %v382
        %v527 = vunpack.c.l.b16 %v383
        %v528 = vunpack.c.l.b16 %v384
        %v529 = vunpack.c.l.b16 %v385
        %v530 = vunpack.c.l.b16 %v386
        %v531 = vunpack.c.l.b16 %v387
        %v532 = vunpack.c.l.b16 %v388
        %v533 = vunpack.c.l.b16 %v389
        %v534 = vunpack.c.l.b16 %v390
        %v535 = vunpack.c.l.b16 %v391
        %v536 = vunpack.c.l.b16 %v392
        %v537 = vunpack.c.l.b16 %v393
        %v538 = vunpack.c.l.b16 %v394
        %v539 = vunpack.c.l.b16 %v395
        %v540 = vunpack.c.l.b16 %v396
        %v541 = vunpack.c.l.b16 %v397
        %v542 = vunpack.c.l.b16 %v398
        %v543 = vunpack.c.l.b16 %v399
        %v544 = vunpack.c.l.b16 %v400
        %v545 = vunpack.c.l.b16 %v401
        %v546 = vunpack.c.l.b16 %v402
        %v547 = vunpack.c.l.b16 %v403
        %v548 = vunpack.c.l.b16 %v404
        %v549 = vunpack.c.l.b16 %v405
        %v550 = vunpack.c.l.b16 %v406
        %v551 = vunpack.c.l.b16 %v407
        %v552 = vunpack.c.l.b16 %v408
        %v553 = vunpack.c.l.b16 %v409
        %v554 = vunpack.c.l.b16 %v410
        %v555 = vunpack.c.l.b16 %v411
        %v556 = vunpack.c.l.b16 %v412
        %v557 = vunpack.c.l.b16 %v413
        %v558 = vunpack.c.l.b16 %v414
        %v559 = vunpack.c.l.b16 %v415
        %v560 = vunpack.c.l.b16 %v416
        %v561 = vunpack.c.l.b16 %v417
        %v562 = vunpack.c.l.b16 %v418
        %v563 = vunpack.c.l.b16 %v419
        %v564 = vunpack.c.l.b16 %v420
        %v565 = vunpack.c.l.b16 %v421
        %v566 = vunpack.c.l.b16 %v422
        %v567 = vunpack.c.l.b16 %v423
        %v568 = vunpack.c.l.b16 %v424
        %v569 = vunpack.c.l.b16 %v425
        %v570 = vpack.c.b16 %v507, %v506
        %v571 = vpack.c.b16 %v509, %v508
        %v572 = vpack.c.b16 %v511, %v510
        %v573 = vpack.c.b16 %v513, %v512
        %v574 = vpack.c.b16 %v515, %v514
        %v575 = vpack.c.b16 %v517, %v516
        %v576 = vpack.c.b16 %v519, %v518
        %v577 = vpack.c.b16 %v521, %v520
        %v578 = vpack.c.b16 %v523, %v522
        %v579 = vpack.c.b16 %v525, %v524
        %v580 = vpack.c.b16 %v527, %v526
        %v581 = vpack.c.b16 %v529, %v528
        %v582 = vpack.c.b16 %v531, %v530
        %v583 = vpack.c.b16 %v533, %v532
        %v584 = vpack.c.b16 %v535, %v534
        %v585 = vpack.c.b16 %v537, %v536
        %v586 = vpack.c.b16 %v539, %v538
        %v587 = vpack.c.b16 %v541, %v540
        %v588 = vpack.c.b16 %v543, %v542
        %v589 = vpack.c.b16 %v545, %v544
        %v590 = vpack.c.b16 %v547, %v546
        %v591 = vpack.c.b16 %v549, %v548
        %v592 = vpack.c.b16 %v551, %v550
        %v593 = vpack.c.b16 %v553, %v552
        %v594 = vpack.c.b16 %v555, %v554
        %v595 = vpack.c.b16 %v557, %v556
        %v596 = vpack.c.b16 %v559, %v558
        %v597 = vpack.c.b16 %v561, %v560
        %v598 = vpack.c.b16 %v563, %v562
        %v599 = vpack.c.b16 %v565, %v564
        %v600 = vpack.c.b16 %v567, %v566
        %v601 = vpack.c.b16 %v569, %v568
        %v618 = vunpack.c.l.b16 %v426
        %v619 = vunpack.c.h.b16 %v426
        %v620 = vunpack.c.l.b16 %v427
        %v621 = vunpack.c.l.b16 %v428
        %v622 = vunpack.c.h.b16 %v428
        %v623 = vunpack.c.l.b16 %v429
        %v624 = vunpack.c.l.b16 %v430
        %v625 = vunpack.c.h.b16 %v430
        %v626 = vunpack.c.l.b16 %v431
        %v627 = vunpack.c.l.b16 %v432
        %v628 = vunpack.c.h.b16 %v432
        %v629 = vunpack.c.l.b16 %v433
        %v630 = vunpack.c.l.b16 %v434
        %v631 = vunpack.c.h.b16 %v434
        %v632 = vunpack.c.l.b16 %v435
        %v633 = vunpack.c.l.b16 %v436
        %v634 = vunpack.c.h.b16 %v436
        %v635 = vunpack.c.l.b16 %v437
        %v636 = vunpack.c.l.b16 %v438
        %v637 = vunpack.c.h.b16 %v438
        %v638 = vunpack.c.l.b16 %v439
        %v639 = vunpack.c.l.b16 %v440
        %v640 = vunpack.c.h.b16 %v440
        %v641 = vunpack.c.l.b16 %v441
        %v642 = vpack.c.b16 %v621, %v618
        %v643 = vpack.c.b16 %v622, %v619
        %v644 = vpack.c.b16 %v623, %v620
        %v645 = vpack.c.b16 %v627, %v624
        %v646 = vpack.c.b16 %v628, %v625
        %v647 = vpack.c.b16 %v629, %v626
        %v648 = vpack.c.b16 %v633, %v630
        %v649 = vpack.c.b16 %v634, %v631
        %v650 = vpack.c.b16 %v635, %v632
        %v651 = vpack.c.b16 %v639, %v636
        %v652 = vpack.c.b16 %v640, %v637
        %v653 = vpack.c.b16 %v641, %v638
        %vm666 = vcmask 523264
        %v668 = vsel %vm666, %v570, 0
        %v671 = vsel %vm666, %v571, 0
        %v674 = vsel %vm666, %v572, 0
        %v677 = vsel %vm666, %v573, 0
        %v680 = vsel %vm666, %v574, 0
        %v683 = vsel %vm666, %v575, 0
        %v686 = vsel %vm666, %v576, 0
        %v689 = vsel %vm666, %v577, 0
        %v692 = vsel %vm666, %v578, 0
        %v695 = vsel %vm666, %v579, 0
        %v698 = vsel %vm666, %v580, 0
        %v701 = vsel %vm666, %v581, 0
        %v704 = vsel %vm666, %v582, 0
        %v707 = vsel %vm666, %v583, 0
        %v710 = vsel %vm666, %v584, 0
        %v713 = vsel %vm666, %v585, 0
        %v716 = vsel %vm666, %v586, 0
        %v719 = vsel %vm666, %v587, 0
        %v722 = vsel %vm666, %v588, 0
        %v725 = vsel %vm666, %v589, 0
        %v728 = vsel %vm666, %v590, 0
        %v731 = vsel %vm666, %v591, 0
        %v734 = vsel %vm666, %v592, 0
        %v737 = vsel %vm666, %v593, 0
        %v740 = vsel %vm666, %v594, 0
        %v743 = vsel %vm666, %v595, 0
        %v746 = vsel %vm666, %v596, 0
        %v749 = vsel %vm666, %v597, 0
        %v752 = vsel %vm666, %v598, 0
        %v755 = vsel %vm666, %v599, 0
        %v758 = vsel %vm666, %v600, 0
        %v761 = vsel %vm666, %v601, 0
        %763 = vmatprep.subr.bf16.mxu0 0
        %764 = vmatpush1.bf16.msra.mxu0 0
        %765 = vmatprep.subr.bf16.mxu0 0
        %766 = vmatpush1.bf16.msra.mxu0 0
        %767 = vmatprep.subr.bf16.mxu0 0
        %768 = vmatpush1.bf16.msra.mxu0 0
        %769 = vmatprep.subr.bf16.mxu0 0
        %770 = vmatpush1.bf16.msra.mxu0 0
        %771 = vmatprep.subr.bf16.mxu0 %v652
        %772 = vmatpush1.bf16.msra.mxu0 %v651
        %773 = vmatprep.subr.bf16.mxu0 %v649
        %774 = vmatpush1.bf16.msra.mxu0 %v648
        %775 = vmatprep.subr.bf16.mxu0 %v646
        %776 = vmatpush1.bf16.msra.mxu0 %v645
        %777 = vmatprep.subr.bf16.mxu0 %v643
        %778 = vmatpush1.bf16.msra.mxu0 %v642
        %779 = vmatprep.subr.bf16.mxu0 0
        %780 = vmatpush2.bf16.msra.mxu0 0
        %781 = vmatprep.subr.bf16.mxu0 0
        %782 = vmatpush2.bf16.msra.mxu0 0
        %783 = vmatprep.subr.bf16.mxu0 0
        %784 = vmatpush2.bf16.msra.mxu0 0
        %785 = vmatprep.subr.bf16.mxu0 0
        %786 = vmatpush2.bf16.msra.mxu0 0
        %787 = vmatprep.subr.bf16.mxu0 0
        %788 = vmatpush2.bf16.msra.mxu0 0
        %789 = vmatprep.subr.bf16.mxu0 0
        %790 = vmatpush2.bf16.msra.mxu0 0
        %791 = vmatprep.subr.bf16.mxu0 0
        %792 = vmatpush2.bf16.msra.mxu0 0
        %793 = vmatprep.subr.bf16.mxu0 0
        %794 = vmatpush2.bf16.msra.mxu0 0
        %795 = vmatprep.mubr.bf16.mxu0 0
        %796 = vmatmul.mubr.bf16.gmra.mxu0 %v668
        %v797 = vpop.f32.mrf.mxu0
        %v798 = vadd.f32 0.0, %v797
        %v799 = vpop.f32.mrf.mxu0
        %v800 = vadd.f32 0.0, %v799
        %v801 = vpop.f32.mrf.mxu0
        %v802 = vadd.f32 0.0, %v801
        %v803 = vpop.f32.mrf.mxu0
        %v804 = vadd.f32 0.0, %v803
        %805 = vmatprep.mubr.bf16.mxu0 0
        %806 = vmatmul.mubr.bf16.gmra.mxu0 %v671
        %v807 = vpop.f32.mrf.mxu0
        %v808 = vadd.f32 0.0, %v807
        %v809 = vpop.f32.mrf.mxu0
        %v810 = vadd.f32 0.0, %v809
        %v811 = vpop.f32.mrf.mxu0
        %v812 = vadd.f32 0.0, %v811
        %v813 = vpop.f32.mrf.mxu0
        %v814 = vadd.f32 0.0, %v813
        %815 = vmatprep.mubr.bf16.mxu0 0
        %816 = vmatmul.mubr.bf16.gmra.mxu0 %v674
        %v817 = vpop.f32.mrf.mxu0
        %v818 = vadd.f32 0.0, %v817
        %v819 = vpop.f32.mrf.mxu0
        %v820 = vadd.f32 0.0, %v819
        %v821 = vpop.f32.mrf.mxu0
        %v822 = vadd.f32 0.0, %v821
        %v823 = vpop.f32.mrf.mxu0
        %v824 = vadd.f32 0.0, %v823
        %825 = vmatprep.mubr.bf16.mxu0 0
        %826 = vmatmul.mubr.bf16.gmra.mxu0 %v677
        %v827 = vpop.f32.mrf.mxu0
        %v828 = vadd.f32 0.0, %v827
        %v829 = vpop.f32.mrf.mxu0
        %v830 = vadd.f32 0.0, %v829
        %v831 = vpop.f32.mrf.mxu0
        %v832 = vadd.f32 0.0, %v831
        %v833 = vpop.f32.mrf.mxu0
        %v834 = vadd.f32 0.0, %v833
        %835 = vmatprep.mubr.bf16.mxu0 0
        %836 = vmatmul.mubr.bf16.gmra.mxu0 %v680
        %v837 = vpop.f32.mrf.mxu0
        %v838 = vadd.f32 0.0, %v837
        %v839 = vpop.f32.mrf.mxu0
        %v840 = vadd.f32 0.0, %v839
        %v841 = vpop.f32.mrf.mxu0
        %v842 = vadd.f32 0.0, %v841
        %v843 = vpop.f32.mrf.mxu0
        %v844 = vadd.f32 0.0, %v843
        %845 = vmatprep.mubr.bf16.mxu0 0
        %846 = vmatmul.mubr.bf16.gmra.mxu0 %v683
        %v847 = vpop.f32.mrf.mxu0
        %v848 = vadd.f32 0.0, %v847
        %v849 = vpop.f32.mrf.mxu0
        %v850 = vadd.f32 0.0, %v849
        %v851 = vpop.f32.mrf.mxu0
        %v852 = vadd.f32 0.0, %v851
        %v853 = vpop.f32.mrf.mxu0
        %v854 = vadd.f32 0.0, %v853
        %855 = vmatprep.mubr.bf16.mxu0 0
        %856 = vmatmul.mubr.bf16.gmra.mxu0 %v686
        %v857 = vpop.f32.mrf.mxu0
        %v858 = vadd.f32 0.0, %v857
        %v859 = vpop.f32.mrf.mxu0
        %v860 = vadd.f32 0.0, %v859
        %v861 = vpop.f32.mrf.mxu0
        %v862 = vadd.f32 0.0, %v861
        %v863 = vpop.f32.mrf.mxu0
        %v864 = vadd.f32 0.0, %v863
        %865 = vmatprep.mubr.bf16.mxu0 0
        %866 = vmatmul.mubr.bf16.gmra.mxu0 %v689
        %v867 = vpop.f32.mrf.mxu0
        %v868 = vadd.f32 0.0, %v867
        %v869 = vpop.f32.mrf.mxu0
        %v870 = vadd.f32 0.0, %v869
        %v871 = vpop.f32.mrf.mxu0
        %v872 = vadd.f32 0.0, %v871
        %v873 = vpop.f32.mrf.mxu0
        %v874 = vadd.f32 0.0, %v873
        %875 = vmatprep.mubr.bf16.mxu0 0
        %876 = vmatmul.mubr.bf16.gmra.mxu0 %v692
        %v877 = vpop.f32.mrf.mxu0
        %v878 = vadd.f32 0.0, %v877
        %v879 = vpop.f32.mrf.mxu0
        %v880 = vadd.f32 0.0, %v879
        %v881 = vpop.f32.mrf.mxu0
        %v882 = vadd.f32 0.0, %v881
        %v883 = vpop.f32.mrf.mxu0
        %v884 = vadd.f32 0.0, %v883
        %885 = vmatprep.mubr.bf16.mxu0 0
        %886 = vmatmul.mubr.bf16.gmra.mxu0 %v695
        %v887 = vpop.f32.mrf.mxu0
        %v888 = vadd.f32 0.0, %v887
        %v889 = vpop.f32.mrf.mxu0
        %v890 = vadd.f32 0.0, %v889
        %v891 = vpop.f32.mrf.mxu0
        %v892 = vadd.f32 0.0, %v891
        %v893 = vpop.f32.mrf.mxu0
        %v894 = vadd.f32 0.0, %v893
        %895 = vmatprep.mubr.bf16.mxu0 0
        %896 = vmatmul.mubr.bf16.gmra.mxu0 %v698
        %v897 = vpop.f32.mrf.mxu0
        %v898 = vadd.f32 0.0, %v897
        %v899 = vpop.f32.mrf.mxu0
        %v900 = vadd.f32 0.0, %v899
        %v901 = vpop.f32.mrf.mxu0
        %v902 = vadd.f32 0.0, %v901
        %v903 = vpop.f32.mrf.mxu0
        %v904 = vadd.f32 0.0, %v903
        %905 = vmatprep.mubr.bf16.mxu0 0
        %906 = vmatmul.mubr.bf16.gmra.mxu0 %v701
        %v907 = vpop.f32.mrf.mxu0
        %v908 = vadd.f32 0.0, %v907
        %v909 = vpop.f32.mrf.mxu0
        %v910 = vadd.f32 0.0, %v909
        %v911 = vpop.f32.mrf.mxu0
        %v912 = vadd.f32 0.0, %v911
        %v913 = vpop.f32.mrf.mxu0
        %v914 = vadd.f32 0.0, %v913
        %915 = vmatprep.mubr.bf16.mxu0 0
        %916 = vmatmul.mubr.bf16.gmra.mxu0 %v704
        %v917 = vpop.f32.mrf.mxu0
        %v918 = vadd.f32 0.0, %v917
        %v919 = vpop.f32.mrf.mxu0
        %v920 = vadd.f32 0.0, %v919
        %v921 = vpop.f32.mrf.mxu0
        %v922 = vadd.f32 0.0, %v921
        %v923 = vpop.f32.mrf.mxu0
        %v924 = vadd.f32 0.0, %v923
        %925 = vmatprep.mubr.bf16.mxu0 0
        %926 = vmatmul.mubr.bf16.gmra.mxu0 %v707
        %v927 = vpop.f32.mrf.mxu0
        %v928 = vadd.f32 0.0, %v927
        %v929 = vpop.f32.mrf.mxu0
        %v930 = vadd.f32 0.0, %v929
        %v931 = vpop.f32.mrf.mxu0
        %v932 = vadd.f32 0.0, %v931
        %v933 = vpop.f32.mrf.mxu0
        %v934 = vadd.f32 0.0, %v933
        %935 = vmatprep.mubr.bf16.mxu0 0
        %936 = vmatmul.mubr.bf16.gmra.mxu0 %v710
        %v937 = vpop.f32.mrf.mxu0
        %v938 = vadd.f32 0.0, %v937
        %v939 = vpop.f32.mrf.mxu0
        %v940 = vadd.f32 0.0, %v939
        %v941 = vpop.f32.mrf.mxu0
        %v942 = vadd.f32 0.0, %v941
        %v943 = vpop.f32.mrf.mxu0
        %v944 = vadd.f32 0.0, %v943
        %945 = vmatprep.mubr.bf16.mxu0 0
        %946 = vmatmul.mubr.bf16.gmra.mxu0 %v713
        %v947 = vpop.f32.mrf.mxu0
        %v948 = vadd.f32 0.0, %v947
        %v949 = vpop.f32.mrf.mxu0
        %v950 = vadd.f32 0.0, %v949
        %v951 = vpop.f32.mrf.mxu0
        %v952 = vadd.f32 0.0, %v951
        %v953 = vpop.f32.mrf.mxu0
        %v954 = vadd.f32 0.0, %v953
        %955 = vmatprep.mubr.bf16.mxu0 0
        %956 = vmatmul.mubr.bf16.gmra.mxu0 %v716
        %v957 = vpop.f32.mrf.mxu0
        %v958 = vadd.f32 0.0, %v957
        %v959 = vpop.f32.mrf.mxu0
        %v960 = vadd.f32 0.0, %v959
        %v961 = vpop.f32.mrf.mxu0
        %v962 = vadd.f32 0.0, %v961
        %v963 = vpop.f32.mrf.mxu0
        %v964 = vadd.f32 0.0, %v963
        %965 = vmatprep.mubr.bf16.mxu0 0
        %966 = vmatmul.mubr.bf16.gmra.mxu0 %v719
        %v967 = vpop.f32.mrf.mxu0
        %v968 = vadd.f32 0.0, %v967
        %v969 = vpop.f32.mrf.mxu0
        %v970 = vadd.f32 0.0, %v969
        %v971 = vpop.f32.mrf.mxu0
        %v972 = vadd.f32 0.0, %v971
        %v973 = vpop.f32.mrf.mxu0
        %v974 = vadd.f32 0.0, %v973
        %975 = vmatprep.mubr.bf16.mxu0 0
        %976 = vmatmul.mubr.bf16.gmra.mxu0 %v722
        %v977 = vpop.f32.mrf.mxu0
        %v978 = vadd.f32 0.0, %v977
        %v979 = vpop.f32.mrf.mxu0
        %v980 = vadd.f32 0.0, %v979
        %v981 = vpop.f32.mrf.mxu0
        %v982 = vadd.f32 0.0, %v981
        %v983 = vpop.f32.mrf.mxu0
        %v984 = vadd.f32 0.0, %v983
        %985 = vmatprep.mubr.bf16.mxu0 0
        %986 = vmatmul.mubr.bf16.gmra.mxu0 %v725
        %v987 = vpop.f32.mrf.mxu0
        %v988 = vadd.f32 0.0, %v987
        %v989 = vpop.f32.mrf.mxu0
        %v990 = vadd.f32 0.0, %v989
        %v991 = vpop.f32.mrf.mxu0
        %v992 = vadd.f32 0.0, %v991
        %v993 = vpop.f32.mrf.mxu0
        %v994 = vadd.f32 0.0, %v993
        %995 = vmatprep.mubr.bf16.mxu0 0
        %996 = vmatmul.mubr.bf16.gmra.mxu0 %v728
        %v997 = vpop.f32.mrf.mxu0
        %v998 = vadd.f32 0.0, %v997
        %v999 = vpop.f32.mrf.mxu0
        %v1000 = vadd.f32 0.0, %v999
        %v1001 = vpop.f32.mrf.mxu0
        %v1002 = vadd.f32 0.0, %v1001
        %v1003 = vpop.f32.mrf.mxu0
        %v1004 = vadd.f32 0.0, %v1003
        %1005 = vmatprep.mubr.bf16.mxu0 0
        %1006 = vmatmul.mubr.bf16.gmra.mxu0 %v731
        %v1007 = vpop.f32.mrf.mxu0
        %v1008 = vadd.f32 0.0, %v1007
        %v1009 = vpop.f32.mrf.mxu0
        %v1010 = vadd.f32 0.0, %v1009
        %v1011 = vpop.f32.mrf.mxu0
        %v1012 = vadd.f32 0.0, %v1011
        %v1013 = vpop.f32.mrf.mxu0
        %v1014 = vadd.f32 0.0, %v1013
        %1015 = vmatprep.mubr.bf16.mxu0 0
        %1016 = vmatmul.mubr.bf16.gmra.mxu0 %v734
        %v1017 = vpop.f32.mrf.mxu0
        %v1018 = vadd.f32 0.0, %v1017
        %v1019 = vpop.f32.mrf.mxu0
        %v1020 = vadd.f32 0.0, %v1019
        %v1021 = vpop.f32.mrf.mxu0
        %v1022 = vadd.f32 0.0, %v1021
        %v1023 = vpop.f32.mrf.mxu0
        %v1024 = vadd.f32 0.0, %v1023
        %1025 = vmatprep.mubr.bf16.mxu0 0
        %1026 = vmatmul.mubr.bf16.gmra.mxu0 %v737
        %v1027 = vpop.f32.mrf.mxu0
        %v1028 = vadd.f32 0.0, %v1027
        %v1029 = vpop.f32.mrf.mxu0
        %v1030 = vadd.f32 0.0, %v1029
        %v1031 = vpop.f32.mrf.mxu0
        %v1032 = vadd.f32 0.0, %v1031
        %v1033 = vpop.f32.mrf.mxu0
        %v1034 = vadd.f32 0.0, %v1033
        %1035 = vmatprep.mubr.bf16.mxu0 0
        %1036 = vmatmul.mubr.bf16.gmra.mxu0 %v740
        %v1037 = vpop.f32.mrf.mxu0
        %v1038 = vadd.f32 0.0, %v1037
        %v1039 = vpop.f32.mrf.mxu0
        %v1040 = vadd.f32 0.0, %v1039
        %v1041 = vpop.f32.mrf.mxu0
        %v1042 = vadd.f32 0.0, %v1041
        %v1043 = vpop.f32.mrf.mxu0
        %v1044 = vadd.f32 0.0, %v1043
        %1045 = vmatprep.mubr.bf16.mxu0 0
        %1046 = vmatmul.mubr.bf16.gmra.mxu0 %v743
        %v1047 = vpop.f32.mrf.mxu0
        %v1048 = vadd.f32 0.0, %v1047
        %v1049 = vpop.f32.mrf.mxu0
        %v1050 = vadd.f32 0.0, %v1049
        %v1051 = vpop.f32.mrf.mxu0
        %v1052 = vadd.f32 0.0, %v1051
        %v1053 = vpop.f32.mrf.mxu0
        %v1054 = vadd.f32 0.0, %v1053
        %1055 = vmatprep.mubr.bf16.mxu0 0
        %1056 = vmatmul.mubr.bf16.gmra.mxu0 %v746
        %v1057 = vpop.f32.mrf.mxu0
        %v1058 = vadd.f32 0.0, %v1057
        %v1059 = vpop.f32.mrf.mxu0
        %v1060 = vadd.f32 0.0, %v1059
        %v1061 = vpop.f32.mrf.mxu0
        %v1062 = vadd.f32 0.0, %v1061
        %v1063 = vpop.f32.mrf.mxu0
        %v1064 = vadd.f32 0.0, %v1063
        %1065 = vmatprep.mubr.bf16.mxu0 0
        %1066 = vmatmul.mubr.bf16.gmra.mxu0 %v749
        %v1067 = vpop.f32.mrf.mxu0
        %v1068 = vadd.f32 0.0, %v1067
        %v1069 = vpop.f32.mrf.mxu0
        %v1070 = vadd.f32 0.0, %v1069
        %v1071 = vpop.f32.mrf.mxu0
        %v1072 = vadd.f32 0.0, %v1071
        %v1073 = vpop.f32.mrf.mxu0
        %v1074 = vadd.f32 0.0, %v1073
        %1075 = vmatprep.mubr.bf16.mxu0 0
        %1076 = vmatmul.mubr.bf16.gmra.mxu0 %v752
        %v1077 = vpop.f32.mrf.mxu0
        %v1078 = vadd.f32 0.0, %v1077
        %v1079 = vpop.f32.mrf.mxu0
        %v1080 = vadd.f32 0.0, %v1079
        %v1081 = vpop.f32.mrf.mxu0
        %v1082 = vadd.f32 0.0, %v1081
        %v1083 = vpop.f32.mrf.mxu0
        %v1084 = vadd.f32 0.0, %v1083
        %1085 = vmatprep.mubr.bf16.mxu0 0
        %1086 = vmatmul.mubr.bf16.gmra.mxu0 %v755
        %v1087 = vpop.f32.mrf.mxu0
        %v1088 = vadd.f32 0.0, %v1087
        %v1089 = vpop.f32.mrf.mxu0
        %v1090 = vadd.f32 0.0, %v1089
        %v1091 = vpop.f32.mrf.mxu0
        %v1092 = vadd.f32 0.0, %v1091
        %v1093 = vpop.f32.mrf.mxu0
        %v1094 = vadd.f32 0.0, %v1093
        %1095 = vmatprep.mubr.bf16.mxu0 0
        %1096 = vmatmul.mubr.bf16.gmra.mxu0 %v758
        %v1097 = vpop.f32.mrf.mxu0
        %v1098 = vadd.f32 0.0, %v1097
        %v1099 = vpop.f32.mrf.mxu0
        %v1100 = vadd.f32 0.0, %v1099
        %v1101 = vpop.f32.mrf.mxu0
        %v1102 = vadd.f32 0.0, %v1101
        %v1103 = vpop.f32.mrf.mxu0
        %v1104 = vadd.f32 0.0, %v1103
        %1105 = vmatprep.mubr.bf16.mxu0 0
        %1106 = vmatmul.mubr.bf16.gmra.mxu0 %v761
        %v1107 = vpop.f32.mrf.mxu0
        %v1108 = vadd.f32 0.0, %v1107
        %v1109 = vpop.f32.mrf.mxu0
        %v1110 = vadd.f32 0.0, %v1109
        %v1111 = vpop.f32.mrf.mxu0
        %v1112 = vadd.f32 0.0, %v1111
        %v1113 = vpop.f32.mrf.mxu0
        %v1114 = vadd.f32 0.0, %v1113
        %1115 = vdwg.mxu0
        %1116 = vmatprep.subr.bf16.mxu0 0
        %1117 = vmatpush1.bf16.msra.mxu0 0
        %1118 = vmatprep.subr.bf16.mxu0 0
        %1119 = vmatpush1.bf16.msra.mxu0 0
        %1120 = vmatprep.subr.bf16.mxu0 0
        %1121 = vmatpush1.bf16.msra.mxu0 0
        %1122 = vmatprep.subr.bf16.mxu0 0
        %1123 = vmatpush1.bf16.msra.mxu0 0
        %1124 = vmatprep.subr.bf16.mxu0 0
        %1125 = vmatpush1.bf16.msra.mxu0 %v653
        %1126 = vmatprep.subr.bf16.mxu0 0
        %1127 = vmatpush1.bf16.msra.mxu0 %v650
        %1128 = vmatprep.subr.bf16.mxu0 0
        %1129 = vmatpush1.bf16.msra.mxu0 %v647
        %1130 = vmatprep.subr.bf16.mxu0 0
        %1131 = vmatpush1.bf16.msra.mxu0 %v644
        %1132 = vmatprep.subr.bf16.mxu0 0
        %1133 = vmatpush2.bf16.msra.mxu0 0
        %1134 = vmatprep.subr.bf16.mxu0 0
        %1135 = vmatpush2.bf16.msra.mxu0 0
        %1136 = vmatprep.subr.bf16.mxu0 0
        %1137 = vmatpush2.bf16.msra.mxu0 0
        %1138 = vmatprep.subr.bf16.mxu0 0
        %1139 = vmatpush2.bf16.msra.mxu0 0
        %1140 = vmatprep.subr.bf16.mxu0 0
        %1141 = vmatpush2.bf16.msra.mxu0 0
        %1142 = vmatprep.subr.bf16.mxu0 0
        %1143 = vmatpush2.bf16.msra.mxu0 0
        %1144 = vmatprep.subr.bf16.mxu0 0
        %1145 = vmatpush2.bf16.msra.mxu0 0
        %1146 = vmatprep.subr.bf16.mxu0 0
        %1147 = vmatpush2.bf16.msra.mxu0 0
        %1148 = vmatprep.mubr.bf16.mxu0 0
        %1149 = vmatmul.mubr.bf16.gmra.mxu0 %v668
        %v1150 = vpop.f32.mrf.mxu0
        %v1151 = vadd.f32 0.0, %v1150
        %v1152 = vpop.f32.mrf.mxu0
        %v1153 = vpop.f32.mrf.mxu0
        %v1154 = vadd.f32 0.0, %v1153
        %v1155 = vpop.f32.mrf.mxu0
        %1156 = vmatprep.mubr.bf16.mxu0 0
        %1157 = vmatmul.mubr.bf16.gmra.mxu0 %v671
        %v1158 = vpop.f32.mrf.mxu0
        %v1159 = vadd.f32 0.0, %v1158
        %v1160 = vpop.f32.mrf.mxu0
        %v1161 = vpop.f32.mrf.mxu0
        %v1162 = vadd.f32 0.0, %v1161
        %v1163 = vpop.f32.mrf.mxu0
        %1164 = vmatprep.mubr.bf16.mxu0 0
        %1165 = vmatmul.mubr.bf16.gmra.mxu0 %v674
        %v1166 = vpop.f32.mrf.mxu0
        %v1167 = vadd.f32 0.0, %v1166
        %v1168 = vpop.f32.mrf.mxu0
        %v1169 = vpop.f32.mrf.mxu0
        %v1170 = vadd.f32 0.0, %v1169
        %v1171 = vpop.f32.mrf.mxu0
        %1172 = vmatprep.mubr.bf16.mxu0 0
        %1173 = vmatmul.mubr.bf16.gmra.mxu0 %v677
        %v1174 = vpop.f32.mrf.mxu0
        %v1175 = vadd.f32 0.0, %v1174
        %v1176 = vpop.f32.mrf.mxu0
        %v1177 = vpop.f32.mrf.mxu0
        %v1178 = vadd.f32 0.0, %v1177
        %v1179 = vpop.f32.mrf.mxu0
        %1180 = vmatprep.mubr.bf16.mxu0 0
        %1181 = vmatmul.mubr.bf16.gmra.mxu0 %v680
        %v1182 = vpop.f32.mrf.mxu0
        %v1183 = vadd.f32 0.0, %v1182
        %v1184 = vpop.f32.mrf.mxu0
        %v1185 = vpop.f32.mrf.mxu0
        %v1186 = vadd.f32 0.0, %v1185
        %v1187 = vpop.f32.mrf.mxu0
        %1188 = vmatprep.mubr.bf16.mxu0 0
        %1189 = vmatmul.mubr.bf16.gmra.mxu0 %v683
        %v1190 = vpop.f32.mrf.mxu0
        %v1191 = vadd.f32 0.0, %v1190
        %v1192 = vpop.f32.mrf.mxu0
        %v1193 = vpop.f32.mrf.mxu0
        %v1194 = vadd.f32 0.0, %v1193
        %v1195 = vpop.f32.mrf.mxu0
        %1196 = vmatprep.mubr.bf16.mxu0 0
        %1197 = vmatmul.mubr.bf16.gmra.mxu0 %v686
        %v1198 = vpop.f32.mrf.mxu0
        %v1199 = vadd.f32 0.0, %v1198
        %v1200 = vpop.f32.mrf.mxu0
        %v1201 = vpop.f32.mrf.mxu0
        %v1202 = vadd.f32 0.0, %v1201
        %v1203 = vpop.f32.mrf.mxu0
        %1204 = vmatprep.mubr.bf16.mxu0 0
        %1205 = vmatmul.mubr.bf16.gmra.mxu0 %v689
        %v1206 = vpop.f32.mrf.mxu0
        %v1207 = vadd.f32 0.0, %v1206
        %v1208 = vpop.f32.mrf.mxu0
        %v1209 = vpop.f32.mrf.mxu0
        %v1210 = vadd.f32 0.0, %v1209
        %v1211 = vpop.f32.mrf.mxu0
        %1212 = vmatprep.mubr.bf16.mxu0 0
        %1213 = vmatmul.mubr.bf16.gmra.mxu0 %v692
        %v1214 = vpop.f32.mrf.mxu0
        %v1215 = vadd.f32 0.0, %v1214
        %v1216 = vpop.f32.mrf.mxu0
        %v1217 = vpop.f32.mrf.mxu0
        %v1218 = vadd.f32 0.0, %v1217
        %v1219 = vpop.f32.mrf.mxu0
        %1220 = vmatprep.mubr.bf16.mxu0 0
        %1221 = vmatmul.mubr.bf16.gmra.mxu0 %v695
        %v1222 = vpop.f32.mrf.mxu0
        %v1223 = vadd.f32 0.0, %v1222
        %v1224 = vpop.f32.mrf.mxu0
        %v1225 = vpop.f32.mrf.mxu0
        %v1226 = vadd.f32 0.0, %v1225
        %v1227 = vpop.f32.mrf.mxu0
        %1228 = vmatprep.mubr.bf16.mxu0 0
        %1229 = vmatmul.mubr.bf16.gmra.mxu0 %v698
        %v1230 = vpop.f32.mrf.mxu0
        %v1231 = vadd.f32 0.0, %v1230
        %v1232 = vpop.f32.mrf.mxu0
        %v1233 = vpop.f32.mrf.mxu0
        %v1234 = vadd.f32 0.0, %v1233
        %v1235 = vpop.f32.mrf.mxu0
        %1236 = vmatprep.mubr.bf16.mxu0 0
        %1237 = vmatmul.mubr.bf16.gmra.mxu0 %v701
        %v1238 = vpop.f32.mrf.mxu0
        %v1239 = vadd.f32 0.0, %v1238
        %v1240 = vpop.f32.mrf.mxu0
        %v1241 = vpop.f32.mrf.mxu0
        %v1242 = vadd.f32 0.0, %v1241
        %v1243 = vpop.f32.mrf.mxu0
        %1244 = vmatprep.mubr.bf16.mxu0 0
        %1245 = vmatmul.mubr.bf16.gmra.mxu0 %v704
        %v1246 = vpop.f32.mrf.mxu0
        %v1247 = vadd.f32 0.0, %v1246
        %v1248 = vpop.f32.mrf.mxu0
        %v1249 = vpop.f32.mrf.mxu0
        %v1250 = vadd.f32 0.0, %v1249
        %v1251 = vpop.f32.mrf.mxu0
        %1252 = vmatprep.mubr.bf16.mxu0 0
        %1253 = vmatmul.mubr.bf16.gmra.mxu0 %v707
        %v1254 = vpop.f32.mrf.mxu0
        %v1255 = vadd.f32 0.0, %v1254
        %v1256 = vpop.f32.mrf.mxu0
        %v1257 = vpop.f32.mrf.mxu0
        %v1258 = vadd.f32 0.0, %v1257
        %v1259 = vpop.f32.mrf.mxu0
        %1260 = vmatprep.mubr.bf16.mxu0 0
        %1261 = vmatmul.mubr.bf16.gmra.mxu0 %v710
        %v1262 = vpop.f32.mrf.mxu0
        %v1263 = vadd.f32 0.0, %v1262
        %v1264 = vpop.f32.mrf.mxu0
        %v1265 = vpop.f32.mrf.mxu0
        %v1266 = vadd.f32 0.0, %v1265
        %v1267 = vpop.f32.mrf.mxu0
        %1268 = vmatprep.mubr.bf16.mxu0 0
        %1269 = vmatmul.mubr.bf16.gmra.mxu0 %v713
        %v1270 = vpop.f32.mrf.mxu0
        %v1271 = vadd.f32 0.0, %v1270
        %v1272 = vpop.f32.mrf.mxu0
        %v1273 = vpop.f32.mrf.mxu0
        %v1274 = vadd.f32 0.0, %v1273
        %v1275 = vpop.f32.mrf.mxu0
        %1276 = vmatprep.mubr.bf16.mxu0 0
        %1277 = vmatmul.mubr.bf16.gmra.mxu0 %v716
        %v1278 = vpop.f32.mrf.mxu0
        %v1279 = vadd.f32 0.0, %v1278
        %v1280 = vpop.f32.mrf.mxu0
        %v1281 = vpop.f32.mrf.mxu0
        %v1282 = vadd.f32 0.0, %v1281
        %v1283 = vpop.f32.mrf.mxu0
        %1284 = vmatprep.mubr.bf16.mxu0 0
        %1285 = vmatmul.mubr.bf16.gmra.mxu0 %v719
        %v1286 = vpop.f32.mrf.mxu0
        %v1287 = vadd.f32 0.0, %v1286
        %v1288 = vpop.f32.mrf.mxu0
        %v1289 = vpop.f32.mrf.mxu0
        %v1290 = vadd.f32 0.0, %v1289
        %v1291 = vpop.f32.mrf.mxu0
        %1292 = vmatprep.mubr.bf16.mxu0 0
        %1293 = vmatmul.mubr.bf16.gmra.mxu0 %v722
        %v1294 = vpop.f32.mrf.mxu0
        %v1295 = vadd.f32 0.0, %v1294
        %v1296 = vpop.f32.mrf.mxu0
        %v1297 = vpop.f32.mrf.mxu0
        %v1298 = vadd.f32 0.0, %v1297
        %v1299 = vpop.f32.mrf.mxu0
        %1300 = vmatprep.mubr.bf16.mxu0 0
        %1301 = vmatmul.mubr.bf16.gmra.mxu0 %v725
        %v1302 = vpop.f32.mrf.mxu0
        %v1303 = vadd.f32 0.0, %v1302
        %v1304 = vpop.f32.mrf.mxu0
        %v1305 = vpop.f32.mrf.mxu0
        %v1306 = vadd.f32 0.0, %v1305
        %v1307 = vpop.f32.mrf.mxu0
        %1308 = vmatprep.mubr.bf16.mxu0 0
        %1309 = vmatmul.mubr.bf16.gmra.mxu0 %v728
        %v1310 = vpop.f32.mrf.mxu0
        %v1311 = vadd.f32 0.0, %v1310
        %v1312 = vpop.f32.mrf.mxu0
        %v1313 = vpop.f32.mrf.mxu0
        %v1314 = vadd.f32 0.0, %v1313
        %v1315 = vpop.f32.mrf.mxu0
        %1316 = vmatprep.mubr.bf16.mxu0 0
        %1317 = vmatmul.mubr.bf16.gmra.mxu0 %v731
        %v1318 = vpop.f32.mrf.mxu0
        %v1319 = vadd.f32 0.0, %v1318
        %v1320 = vpop.f32.mrf.mxu0
        %v1321 = vpop.f32.mrf.mxu0
        %v1322 = vadd.f32 0.0, %v1321
        %v1323 = vpop.f32.mrf.mxu0
        %1324 = vmatprep.mubr.bf16.mxu0 0
        %1325 = vmatmul.mubr.bf16.gmra.mxu0 %v734
        %v1326 = vpop.f32.mrf.mxu0
        %v1327 = vadd.f32 0.0, %v1326
        %v1328 = vpop.f32.mrf.mxu0
        %v1329 = vpop.f32.mrf.mxu0
        %v1330 = vadd.f32 0.0, %v1329
        %v1331 = vpop.f32.mrf.mxu0
        %1332 = vmatprep.mubr.bf16.mxu0 0
        %1333 = vmatmul.mubr.bf16.gmra.mxu0 %v737
        %v1334 = vpop.f32.mrf.mxu0
        %v1335 = vadd.f32 0.0, %v1334
        %v1336 = vpop.f32.mrf.mxu0
        %v1337 = vpop.f32.mrf.mxu0
        %v1338 = vadd.f32 0.0, %v1337
        %v1339 = vpop.f32.mrf.mxu0
        %1340 = vmatprep.mubr.bf16.mxu0 0
        %1341 = vmatmul.mubr.bf16.gmra.mxu0 %v740
        %v1342 = vpop.f32.mrf.mxu0
        %v1343 = vadd.f32 0.0, %v1342
        %v1344 = vpop.f32.mrf.mxu0
        %v1345 = vpop.f32.mrf.mxu0
        %v1346 = vadd.f32 0.0, %v1345
        %v1347 = vpop.f32.mrf.mxu0
        %1348 = vmatprep.mubr.bf16.mxu0 0
        %1349 = vmatmul.mubr.bf16.gmra.mxu0 %v743
        %v1350 = vpop.f32.mrf.mxu0
        %v1351 = vadd.f32 0.0, %v1350
        %v1352 = vpop.f32.mrf.mxu0
        %v1353 = vpop.f32.mrf.mxu0
        %v1354 = vadd.f32 0.0, %v1353
        %v1355 = vpop.f32.mrf.mxu0
        %1356 = vmatprep.mubr.bf16.mxu0 0
        %1357 = vmatmul.mubr.bf16.gmra.mxu0 %v746
        %v1358 = vpop.f32.mrf.mxu0
        %v1359 = vadd.f32 0.0, %v1358
        %v1360 = vpop.f32.mrf.mxu0
        %v1361 = vpop.f32.mrf.mxu0
        %v1362 = vadd.f32 0.0, %v1361
        %v1363 = vpop.f32.mrf.mxu0
        %1364 = vmatprep.mubr.bf16.mxu0 0
        %1365 = vmatmul.mubr.bf16.gmra.mxu0 %v749
        %v1366 = vpop.f32.mrf.mxu0
        %v1367 = vadd.f32 0.0, %v1366
        %v1368 = vpop.f32.mrf.mxu0
        %v1369 = vpop.f32.mrf.mxu0
        %v1370 = vadd.f32 0.0, %v1369
        %v1371 = vpop.f32.mrf.mxu0
        %1372 = vmatprep.mubr.bf16.mxu0 0
        %1373 = vmatmul.mubr.bf16.gmra.mxu0 %v752
        %v1374 = vpop.f32.mrf.mxu0
        %v1375 = vadd.f32 0.0, %v1374
        %v1376 = vpop.f32.mrf.mxu0
        %v1377 = vpop.f32.mrf.mxu0
        %v1378 = vadd.f32 0.0, %v1377
        %v1379 = vpop.f32.mrf.mxu0
        %1380 = vmatprep.mubr.bf16.mxu0 0
        %1381 = vmatmul.mubr.bf16.gmra.mxu0 %v755
        %v1382 = vpop.f32.mrf.mxu0
        %v1383 = vadd.f32 0.0, %v1382
        %v1384 = vpop.f32.mrf.mxu0
        %v1385 = vpop.f32.mrf.mxu0
        %v1386 = vadd.f32 0.0, %v1385
        %v1387 = vpop.f32.mrf.mxu0
        %1388 = vmatprep.mubr.bf16.mxu0 0
        %1389 = vmatmul.mubr.bf16.gmra.mxu0 %v758
        %v1390 = vpop.f32.mrf.mxu0
        %v1391 = vadd.f32 0.0, %v1390
        %v1392 = vpop.f32.mrf.mxu0
        %v1393 = vpop.f32.mrf.mxu0
        %v1394 = vadd.f32 0.0, %v1393
        %v1395 = vpop.f32.mrf.mxu0
        %1396 = vmatprep.mubr.bf16.mxu0 0
        %1397 = vmatmul.mubr.bf16.gmra.mxu0 %v761
        %v1398 = vpop.f32.mrf.mxu0
        %v1399 = vadd.f32 0.0, %v1398
        %v1400 = vpop.f32.mrf.mxu0
        %v1401 = vpop.f32.mrf.mxu0
        %v1402 = vadd.f32 0.0, %v1401
        %v1403 = vpop.f32.mrf.mxu0
        %1404 = vdwg.mxu0
        %v1405 = vadd.f32 %v359, %v798
        %v1406 = vadd.f32 %v360, %v800
        %v1407 = vadd.f32 %v361, %v1151
        %v1408 = vadd.f32 %v359, %v802
        %v1409 = vadd.f32 %v360, %v804
        %v1410 = vadd.f32 %v361, %v1154
        %v1411 = vadd.f32 %v359, %v808
        %v1412 = vadd.f32 %v360, %v810
        %v1413 = vadd.f32 %v361, %v1159
        %v1414 = vadd.f32 %v359, %v812
        %v1415 = vadd.f32 %v360, %v814
        %v1416 = vadd.f32 %v361, %v1162
        %v1417 = vadd.f32 %v359, %v818
        %v1418 = vadd.f32 %v360, %v820
        %v1419 = vadd.f32 %v361, %v1167
        %v1420 = vadd.f32 %v359, %v822
        %v1421 = vadd.f32 %v360, %v824
        %v1422 = vadd.f32 %v361, %v1170
        %v1423 = vadd.f32 %v359, %v828
        %v1424 = vadd.f32 %v360, %v830
        %v1425 = vadd.f32 %v361, %v1175
        %v1426 = vadd.f32 %v359, %v832
        %v1427 = vadd.f32 %v360, %v834
        %v1428 = vadd.f32 %v361, %v1178
        %v1429 = vadd.f32 %v359, %v838
        %v1430 = vadd.f32 %v360, %v840
        %v1431 = vadd.f32 %v361, %v1183
        %v1432 = vadd.f32 %v359, %v842
        %v1433 = vadd.f32 %v360, %v844
        %v1434 = vadd.f32 %v361, %v1186
        %v1435 = vadd.f32 %v359, %v848
        %v1436 = vadd.f32 %v360, %v850
        %v1437 = vadd.f32 %v361, %v1191
        %v1438 = vadd.f32 %v359, %v852
        %v1439 = vadd.f32 %v360, %v854
        %v1440 = vadd.f32 %v361, %v1194
        %v1441 = vadd.f32 %v359, %v858
        %v1442 = vadd.f32 %v360, %v860
        %v1443 = vadd.f32 %v361, %v1199
        %v1444 = vadd.f32 %v359, %v862
        %v1445 = vadd.f32 %v360, %v864
        %v1446 = vadd.f32 %v361, %v1202
        %v1447 = vadd.f32 %v359, %v868
        %v1448 = vadd.f32 %v360, %v870
        %v1449 = vadd.f32 %v361, %v1207
        %v1450 = vadd.f32 %v359, %v872
        %v1451 = vadd.f32 %v360, %v874
        %v1452 = vadd.f32 %v361, %v1210
        %v1453 = vadd.f32 %v359, %v878
        %v1454 = vadd.f32 %v360, %v880
        %v1455 = vadd.f32 %v361, %v1215
        %v1456 = vadd.f32 %v359, %v882
        %v1457 = vadd.f32 %v360, %v884
        %v1458 = vadd.f32 %v361, %v1218
        %v1459 = vadd.f32 %v359, %v888
        %v1460 = vadd.f32 %v360, %v890
        %v1461 = vadd.f32 %v361, %v1223
        %v1462 = vadd.f32 %v359, %v892
        %v1463 = vadd.f32 %v360, %v894
        %v1464 = vadd.f32 %v361, %v1226
        %v1465 = vadd.f32 %v359, %v898
        %v1466 = vadd.f32 %v360, %v900
        %v1467 = vadd.f32 %v361, %v1231
        %v1468 = vadd.f32 %v359, %v902
        %v1469 = vadd.f32 %v360, %v904
        %v1470 = vadd.f32 %v361, %v1234
        %v1471 = vadd.f32 %v359, %v908
        %v1472 = vadd.f32 %v360, %v910
        %v1473 = vadd.f32 %v361, %v1239
        %v1474 = vadd.f32 %v359, %v912
        %v1475 = vadd.f32 %v360, %v914
        %v1476 = vadd.f32 %v361, %v1242
        %v1477 = vadd.f32 %v359, %v918
        %v1478 = vadd.f32 %v360, %v920
        %v1479 = vadd.f32 %v361, %v1247
        %v1480 = vadd.f32 %v359, %v922
        %v1481 = vadd.f32 %v360, %v924
        %v1482 = vadd.f32 %v361, %v1250
        %v1483 = vadd.f32 %v359, %v928
        %v1484 = vadd.f32 %v360, %v930
        %v1485 = vadd.f32 %v361, %v1255
        %v1486 = vadd.f32 %v359, %v932
        %v1487 = vadd.f32 %v360, %v934
        %v1488 = vadd.f32 %v361, %v1258
        %v1489 = vadd.f32 %v359, %v938
        %v1490 = vadd.f32 %v360, %v940
        %v1491 = vadd.f32 %v361, %v1263
        %v1492 = vadd.f32 %v359, %v942
        %v1493 = vadd.f32 %v360, %v944
        %v1494 = vadd.f32 %v361, %v1266
        %v1495 = vadd.f32 %v359, %v948
        %v1496 = vadd.f32 %v360, %v950
        %v1497 = vadd.f32 %v361, %v1271
        %v1498 = vadd.f32 %v359, %v952
        %v1499 = vadd.f32 %v360, %v954
        %v1500 = vadd.f32 %v361, %v1274
        %v1501 = vadd.f32 %v359, %v958
        %v1502 = vadd.f32 %v360, %v960
        %v1503 = vadd.f32 %v361, %v1279
        %v1504 = vadd.f32 %v359, %v962
        %v1505 = vadd.f32 %v360, %v964
        %v1506 = vadd.f32 %v361, %v1282
        %v1507 = vadd.f32 %v359, %v968
        %v1508 = vadd.f32 %v360, %v970
        %v1509 = vadd.f32 %v361, %v1287
        %v1510 = vadd.f32 %v359, %v972
        %v1511 = vadd.f32 %v360, %v974
        %v1512 = vadd.f32 %v361, %v1290
        %v1513 = vadd.f32 %v359, %v978
        %v1514 = vadd.f32 %v360, %v980
        %v1515 = vadd.f32 %v361, %v1295
        %v1516 = vadd.f32 %v359, %v982
        %v1517 = vadd.f32 %v360, %v984
        %v1518 = vadd.f32 %v361, %v1298
        %v1519 = vadd.f32 %v359, %v988
        %v1520 = vadd.f32 %v360, %v990
        %v1521 = vadd.f32 %v361, %v1303
        %v1522 = vadd.f32 %v359, %v992
        %v1523 = vadd.f32 %v360, %v994
        %v1524 = vadd.f32 %v361, %v1306
        %v1525 = vadd.f32 %v359, %v998
        %v1526 = vadd.f32 %v360, %v1000
        %v1527 = vadd.f32 %v361, %v1311
        %v1528 = vadd.f32 %v359, %v1002
        %v1529 = vadd.f32 %v360, %v1004
        %v1530 = vadd.f32 %v361, %v1314
        %v1531 = vadd.f32 %v359, %v1008
        %v1532 = vadd.f32 %v360, %v1010
        %v1533 = vadd.f32 %v361, %v1319
        %v1534 = vadd.f32 %v359, %v1012
        %v1535 = vadd.f32 %v360, %v1014
        %v1536 = vadd.f32 %v361, %v1322
        %v1537 = vadd.f32 %v359, %v1018
        %v1538 = vadd.f32 %v360, %v1020
        %v1539 = vadd.f32 %v361, %v1327
        %v1540 = vadd.f32 %v359, %v1022
        %v1541 = vadd.f32 %v360, %v1024
        %v1542 = vadd.f32 %v361, %v1330
        %v1543 = vadd.f32 %v359, %v1028
        %v1544 = vadd.f32 %v360, %v1030
        %v1545 = vadd.f32 %v361, %v1335
        %v1546 = vadd.f32 %v359, %v1032
        %v1547 = vadd.f32 %v360, %v1034
        %v1548 = vadd.f32 %v361, %v1338
        %v1549 = vadd.f32 %v359, %v1038
        %v1550 = vadd.f32 %v360, %v1040
        %v1551 = vadd.f32 %v361, %v1343
        %v1552 = vadd.f32 %v359, %v1042
        %v1553 = vadd.f32 %v360, %v1044
        %v1554 = vadd.f32 %v361, %v1346
        %v1555 = vadd.f32 %v359, %v1048
        %v1556 = vadd.f32 %v360, %v1050
        %v1557 = vadd.f32 %v361, %v1351
        %v1558 = vadd.f32 %v359, %v1052
        %v1559 = vadd.f32 %v360, %v1054
        %v1560 = vadd.f32 %v361, %v1354
        %v1561 = vadd.f32 %v359, %v1058
        %v1562 = vadd.f32 %v360, %v1060
        %v1563 = vadd.f32 %v361, %v1359
        %v1564 = vadd.f32 %v359, %v1062
        %v1565 = vadd.f32 %v360, %v1064
        %v1566 = vadd.f32 %v361, %v1362
        %v1567 = vadd.f32 %v359, %v1068
        %v1568 = vadd.f32 %v360, %v1070
        %v1569 = vadd.f32 %v361, %v1367
        %v1570 = vadd.f32 %v359, %v1072
        %v1571 = vadd.f32 %v360, %v1074
        %v1572 = vadd.f32 %v361, %v1370
        %v1573 = vadd.f32 %v359, %v1078
        %v1574 = vadd.f32 %v360, %v1080
        %v1575 = vadd.f32 %v361, %v1375
        %v1576 = vadd.f32 %v359, %v1082
        %v1577 = vadd.f32 %v360, %v1084
        %v1578 = vadd.f32 %v361, %v1378
        %v1579 = vadd.f32 %v359, %v1088
        %v1580 = vadd.f32 %v360, %v1090
        %v1581 = vadd.f32 %v361, %v1383
        %v1582 = vadd.f32 %v359, %v1092
        %v1583 = vadd.f32 %v360, %v1094
        %v1584 = vadd.f32 %v361, %v1386
        %v1585 = vadd.f32 %v359, %v1098
        %v1586 = vadd.f32 %v360, %v1100
        %v1587 = vadd.f32 %v361, %v1391
        %v1588 = vadd.f32 %v359, %v1102
        %v1589 = vadd.f32 %v360, %v1104
        %v1590 = vadd.f32 %v361, %v1394
        %v1591 = vadd.f32 %v359, %v1108
        %v1592 = vadd.f32 %v360, %v1110
        %v1593 = vadd.f32 %v361, %v1399
        %v1594 = vadd.f32 %v359, %v1112
        %v1595 = vadd.f32 %v360, %v1114
        %v1596 = vadd.f32 %v361, %v1402
        %v1597 = vpack.c.bf16 %v296, %v295
        %v1598 = vpack.c.bf16 %v298, %v297
        %v1599 = vpack.c.bf16 %v300, %v299
        %v1600 = vpack.c.bf16 %v302, %v301
        %v1601 = vpack.c.bf16 %v304, %v303
        %v1602 = vpack.c.bf16 %v306, %v305
        %v1603 = vpack.c.bf16 %v308, %v307
        %v1604 = vpack.c.bf16 %v310, %v309
        %v1605 = vpack.c.bf16 %v312, %v311
        %v1606 = vpack.c.bf16 %v314, %v313
        %v1607 = vpack.c.bf16 %v316, %v315
        %v1608 = vpack.c.bf16 %v318, %v317
        %v1609 = vpack.c.bf16 %v320, %v319
        %v1610 = vpack.c.bf16 %v322, %v321
        %v1611 = vpack.c.bf16 %v324, %v323
        %v1612 = vpack.c.bf16 %v326, %v325
        %v1613 = vpack.c.bf16 %v328, %v327
        %v1614 = vpack.c.bf16 %v330, %v329
        %v1615 = vpack.c.bf16 %v332, %v331
        %v1616 = vpack.c.bf16 %v334, %v333
        %v1617 = vpack.c.bf16 %v336, %v335
        %v1618 = vpack.c.bf16 %v338, %v337
        %v1619 = vpack.c.bf16 %v340, %v339
        %v1620 = vpack.c.bf16 %v342, %v341
        %v1621 = vpack.c.bf16 %v344, %v343
        %v1622 = vpack.c.bf16 %v346, %v345
        %v1623 = vpack.c.bf16 %v348, %v347
        %v1624 = vpack.c.bf16 %v350, %v349
        %v1625 = vpack.c.bf16 %v352, %v351
        %v1626 = vpack.c.bf16 %v354, %v353
        %v1627 = vpack.c.bf16 %v356, %v355
        %v1628 = vpack.c.bf16 %v358, %v357
        %v1629 = vld [vmem:[%s4] sm:$0xff]
        %v1630 = vld [vmem:[%s4 + $0x8] sm:$0xf]
        %v1631 = vld [vmem:[%s4 + $0xc] sm:$0xff]
        %v1632 = vld [vmem:[%s4 + $0x14] sm:$0xf]
        %v1633 = vld [vmem:[%s4 + $0x18] sm:$0xff]
        %v1634 = vld [vmem:[%s4 + $0x20] sm:$0xf]
        %v1635 = vld [vmem:[%s4 + $0x24] sm:$0xff]
        %v1636 = vld [vmem:[%s4 + $0x2c] sm:$0xf]
        %v1637 = vld [vmem:[%s4 + $0x30] sm:$0xff]
        %v1638 = vld [vmem:[%s4 + $0x38] sm:$0xf]
        %v1639 = vld [vmem:[%s4 + $0x3c] sm:$0xff]
        %v1640 = vld [vmem:[%s4 + $0x44] sm:$0xf]
        %v1641 = vld [vmem:[%s4 + $0x48] sm:$0xff]
        %v1642 = vld [vmem:[%s4 + $0x50] sm:$0xf]
        %v1643 = vld [vmem:[%s4 + $0x54] sm:$0xff]
        %v1644 = vld [vmem:[%s4 + $0x5c] sm:$0xf]
        %v1645 = vld [vmem:[%s4 + $0x60] sm:$0xff]
        %v1646 = vld [vmem:[%s4 + $0x68] sm:$0xf]
        %v1647 = vld [vmem:[%s4 + $0x6c] sm:$0xff]
        %v1648 = vld [vmem:[%s4 + $0x74] sm:$0xf]
        %v1649 = vld [vmem:[%s4 + $0x78] sm:$0xff]
        %v1650 = vld [vmem:[%s4 + $0x80] sm:$0xf]
        %v1651 = vld [vmem:[%s4 + $0x84] sm:$0xff]
        %v1652 = vld [vmem:[%s4 + $0x8c] sm:$0xf]
        %v1653 = vld [vmem:[%s4 + $0x90] sm:$0xff]
        %v1654 = vld [vmem:[%s4 + $0x98] sm:$0xf]
        %v1655 = vld [vmem:[%s4 + $0x9c] sm:$0xff]
        %v1656 = vld [vmem:[%s4 + $0xa4] sm:$0xf]
        %v1657 = vld [vmem:[%s4 + $0xa8] sm:$0xff]
        %v1658 = vld [vmem:[%s4 + $0xb0] sm:$0xf]
        %v1659 = vld [vmem:[%s4 + $0xb4] sm:$0xff]
        %v1660 = vld [vmem:[%s4 + $0xbc] sm:$0xf]
        %v1661 = vld [vmem:[%s5] sm:$0x7]
        %v1663 = vlaneseq
        %v1664 = vshrl.u32 %v1663, 7
        %v1665 = vsub.s32 0, %v1664
        %v1666 = vrot.slane %v1661, %v1665
        %v1667 = vlaneseq
        %v1668 = vshrl.u32 %v1667, 7
        %v1669 = vsub.s32 1, %v1668
        %v1670 = vrot.slane %v1661, %v1669
        %v1671 = vlaneseq
        %v1672 = vshrl.u32 %v1671, 7
        %v1673 = vsub.s32 2, %v1672
        %v1674 = vrot.slane %v1661, %v1673
        %v1710 = vunpack.c.l.b16 %v1629
        %v1711 = vunpack.c.h.b16 %v1629
        %v1712 = vunpack.c.l.b16 %v1630
        %v1713 = vunpack.c.l.b16 %v1631
        %v1714 = vunpack.c.h.b16 %v1631
        %v1715 = vunpack.c.l.b16 %v1632
        %v1716 = vunpack.c.l.b16 %v1633
        %v1717 = vunpack.c.h.b16 %v1633
        %v1718 = vunpack.c.l.b16 %v1634
        %v1719 = vunpack.c.l.b16 %v1635
        %v1720 = vunpack.c.h.b16 %v1635
        %v1721 = vunpack.c.l.b16 %v1636
        %v1722 = vunpack.c.l.b16 %v1637
        %v1723 = vunpack.c.h.b16 %v1637
        %v1724 = vunpack.c.l.b16 %v1638
        %v1725 = vunpack.c.l.b16 %v1639
        %v1726 = vunpack.c.h.b16 %v1639
        %v1727 = vunpack.c.l.b16 %v1640
        %v1728 = vunpack.c.l.b16 %v1641
        %v1729 = vunpack.c.h.b16 %v1641
        %v1730 = vunpack.c.l.b16 %v1642
        %v1731 = vunpack.c.l.b16 %v1643
        %v1732 = vunpack.c.h.b16 %v1643
        %v1733 = vunpack.c.l.b16 %v1644
        %v1734 = vunpack.c.l.b16 %v1645
        %v1735 = vunpack.c.h.b16 %v1645
        %v1736 = vunpack.c.l.b16 %v1646
        %v1737 = vunpack.c.l.b16 %v1647
        %v1738 = vunpack.c.h.b16 %v1647
        %v1739 = vunpack.c.l.b16 %v1648
        %v1740 = vunpack.c.l.b16 %v1649
        %v1741 = vunpack.c.h.b16 %v1649
        %v1742 = vunpack.c.l.b16 %v1650
        %v1743 = vunpack.c.l.b16 %v1651
        %v1744 = vunpack.c.h.b16 %v1651
        %v1745 = vunpack.c.l.b16 %v1652
        %v1746 = vunpack.c.l.b16 %v1653
        %v1747 = vunpack.c.h.b16 %v1653
        %v1748 = vunpack.c.l.b16 %v1654
        %v1749 = vunpack.c.l.b16 %v1655
        %v1750 = vunpack.c.h.b16 %v1655
        %v1751 = vunpack.c.l.b16 %v1656
        %v1752 = vunpack.c.l.b16 %v1657
        %v1753 = vunpack.c.h.b16 %v1657
        %v1754 = vunpack.c.l.b16 %v1658
        %v1755 = vunpack.c.l.b16 %v1659
        %v1756 = vunpack.c.h.b16 %v1659
        %v1757 = vunpack.c.l.b16 %v1660
        %v1758 = vpack.c.b16 %v1713, %v1710
        %v1759 = vpack.c.b16 %v1714, %v1711
        %v1760 = vpack.c.b16 %v1715, %v1712
        %v1761 = vpack.c.b16 %v1719, %v1716
        %v1762 = vpack.c.b16 %v1720, %v1717
        %v1763 = vpack.c.b16 %v1721, %v1718
        %v1764 = vpack.c.b16 %v1725, %v1722
        %v1765 = vpack.c.b16 %v1726, %v1723
        %v1766 = vpack.c.b16 %v1727, %v1724
        %v1767 = vpack.c.b16 %v1731, %v1728
        %v1768 = vpack.c.b16 %v1732, %v1729
        %v1769 = vpack.c.b16 %v1733, %v1730
        %v1770 = vpack.c.b16 %v1737, %v1734
        %v1771 = vpack.c.b16 %v1738, %v1735
        %v1772 = vpack.c.b16 %v1739, %v1736
        %v1773 = vpack.c.b16 %v1743, %v1740
        %v1774 = vpack.c.b16 %v1744, %v1741
        %v1775 = vpack.c.b16 %v1745, %v1742
        %v1776 = vpack.c.b16 %v1749, %v1746
        %v1777 = vpack.c.b16 %v1750, %v1747
        %v1778 = vpack.c.b16 %v1751, %v1748
        %v1779 = vpack.c.b16 %v1755, %v1752
        %v1780 = vpack.c.b16 %v1756, %v1753
        %v1781 = vpack.c.b16 %v1757, %v1754
        %1806 = vmatprep.subr.bf16.mxu0 %v1780
        %1807 = vmatpush1.bf16.msra.mxu0 %v1779
        %1808 = vmatprep.subr.bf16.mxu0 %v1777
        %1809 = vmatpush1.bf16.msra.mxu0 %v1776
        %1810 = vmatprep.subr.bf16.mxu0 %v1774
        %1811 = vmatpush1.bf16.msra.mxu0 %v1773
        %1812 = vmatprep.subr.bf16.mxu0 %v1771
        %1813 = vmatpush1.bf16.msra.mxu0 %v1770
        %1814 = vmatprep.subr.bf16.mxu0 %v1768
        %1815 = vmatpush1.bf16.msra.mxu0 %v1767
        %1816 = vmatprep.subr.bf16.mxu0 %v1765
        %1817 = vmatpush1.bf16.msra.mxu0 %v1764
        %1818 = vmatprep.subr.bf16.mxu0 %v1762
        %1819 = vmatpush1.bf16.msra.mxu0 %v1761
        %1820 = vmatprep.subr.bf16.mxu0 %v1759
        %1821 = vmatpush1.bf16.msra.mxu0 %v1758
        %1822 = vmatprep.subr.bf16.mxu0 0
        %1823 = vmatpush2.bf16.msra.mxu0 0
        %1824 = vmatprep.subr.bf16.mxu0 0
        %1825 = vmatpush2.bf16.msra.mxu0 0
        %1826 = vmatprep.subr.bf16.mxu0 0
        %1827 = vmatpush2.bf16.msra.mxu0 0
        %1828 = vmatprep.subr.bf16.mxu0 0
        %1829 = vmatpush2.bf16.msra.mxu0 0
        %1830 = vmatprep.subr.bf16.mxu0 0
        %1831 = vmatpush2.bf16.msra.mxu0 0
        %1832 = vmatprep.subr.bf16.mxu0 0
        %1833 = vmatpush2.bf16.msra.mxu0 0
        %1834 = vmatprep.subr.bf16.mxu0 0
        %1835 = vmatpush2.bf16.msra.mxu0 0
        %1836 = vmatprep.subr.bf16.mxu0 0
        %1837 = vmatpush2.bf16.msra.mxu0 0
        %1838 = vmatprep.mubr.bf16.mxu0 0
        %1839 = vmatmul.mubr.bf16.gmra.mxu0 %v1597
        %v1840 = vpop.f32.mrf.mxu0
        %v1841 = vadd.f32 %v1666, %v1840
        %v1842 = vpop.f32.mrf.mxu0
        %v1843 = vadd.f32 %v1670, %v1842
        %v1844 = vpop.f32.mrf.mxu0
        %v1845 = vadd.f32 %v1666, %v1844
        %v1846 = vpop.f32.mrf.mxu0
        %v1847 = vadd.f32 %v1670, %v1846
        %1848 = vmatprep.mubr.bf16.mxu0 0
        %1849 = vmatmul.mubr.bf16.gmra.mxu0 %v1598
        %v1850 = vpop.f32.mrf.mxu0
        %v1851 = vadd.f32 %v1666, %v1850
        %v1852 = vpop.f32.mrf.mxu0
        %v1853 = vadd.f32 %v1670, %v1852
        %v1854 = vpop.f32.mrf.mxu0
        %v1855 = vadd.f32 %v1666, %v1854
        %v1856 = vpop.f32.mrf.mxu0
        %v1857 = vadd.f32 %v1670, %v1856
        %1858 = vmatprep.mubr.bf16.mxu0 0
        %1859 = vmatmul.mubr.bf16.gmra.mxu0 %v1599
        %v1860 = vpop.f32.mrf.mxu0
        %v1861 = vadd.f32 %v1666, %v1860
        %v1862 = vpop.f32.mrf.mxu0
        %v1863 = vadd.f32 %v1670, %v1862
        %v1864 = vpop.f32.mrf.mxu0
        %v1865 = vadd.f32 %v1666, %v1864
        %v1866 = vpop.f32.mrf.mxu0
        %v1867 = vadd.f32 %v1670, %v1866
        %1868 = vmatprep.mubr.bf16.mxu0 0
        %1869 = vmatmul.mubr.bf16.gmra.mxu0 %v1600
        %v1870 = vpop.f32.mrf.mxu0
        %v1871 = vadd.f32 %v1666, %v1870
        %v1872 = vpop.f32.mrf.mxu0
        %v1873 = vadd.f32 %v1670, %v1872
        %v1874 = vpop.f32.mrf.mxu0
        %v1875 = vadd.f32 %v1666, %v1874
        %v1876 = vpop.f32.mrf.mxu0
        %v1877 = vadd.f32 %v1670, %v1876
        %1878 = vmatprep.mubr.bf16.mxu0 0
        %1879 = vmatmul.mubr.bf16.gmra.mxu0 %v1601
        %v1880 = vpop.f32.mrf.mxu0
        %v1881 = vadd.f32 %v1666, %v1880
        %v1882 = vpop.f32.mrf.mxu0
        %v1883 = vadd.f32 %v1670, %v1882
        %v1884 = vpop.f32.mrf.mxu0
        %v1885 = vadd.f32 %v1666, %v1884
        %v1886 = vpop.f32.mrf.mxu0
        %v1887 = vadd.f32 %v1670, %v1886
        %1888 = vmatprep.mubr.bf16.mxu0 0
        %1889 = vmatmul.mubr.bf16.gmra.mxu0 %v1602
        %v1890 = vpop.f32.mrf.mxu0
        %v1891 = vadd.f32 %v1666, %v1890
        %v1892 = vpop.f32.mrf.mxu0
        %v1893 = vadd.f32 %v1670, %v1892
        %v1894 = vpop.f32.mrf.mxu0
        %v1895 = vadd.f32 %v1666, %v1894
        %v1896 = vpop.f32.mrf.mxu0
        %v1897 = vadd.f32 %v1670, %v1896
        %1898 = vmatprep.mubr.bf16.mxu0 0
        %1899 = vmatmul.mubr.bf16.gmra.mxu0 %v1603
        %v1900 = vpop.f32.mrf.mxu0
        %v1901 = vadd.f32 %v1666, %v1900
        %v1902 = vpop.f32.mrf.mxu0
        %v1903 = vadd.f32 %v1670, %v1902
        %v1904 = vpop.f32.mrf.mxu0
        %v1905 = vadd.f32 %v1666, %v1904
        %v1906 = vpop.f32.mrf.mxu0
        %v1907 = vadd.f32 %v1670, %v1906
        %1908 = vmatprep.mubr.bf16.mxu0 0
        %1909 = vmatmul.mubr.bf16.gmra.mxu0 %v1604
        %v1910 = vpop.f32.mrf.mxu0
        %v1911 = vadd.f32 %v1666, %v1910
        %v1912 = vpop.f32.mrf.mxu0
        %v1913 = vadd.f32 %v1670, %v1912
        %v1914 = vpop.f32.mrf.mxu0
        %v1915 = vadd.f32 %v1666, %v1914
        %v1916 = vpop.f32.mrf.mxu0
        %v1917 = vadd.f32 %v1670, %v1916
        %1918 = vmatprep.mubr.bf16.mxu0 0
        %1919 = vmatmul.mubr.bf16.gmra.mxu0 %v1605
        %v1920 = vpop.f32.mrf.mxu0
        %v1921 = vadd.f32 %v1666, %v1920
        %v1922 = vpop.f32.mrf.mxu0
        %v1923 = vadd.f32 %v1670, %v1922
        %v1924 = vpop.f32.mrf.mxu0
        %v1925 = vadd.f32 %v1666, %v1924
        %v1926 = vpop.f32.mrf.mxu0
        %v1927 = vadd.f32 %v1670, %v1926
        %1928 = vmatprep.mubr.bf16.mxu0 0
        %1929 = vmatmul.mubr.bf16.gmra.mxu0 %v1606
        %v1930 = vpop.f32.mrf.mxu0
        %v1931 = vadd.f32 %v1666, %v1930
        %v1932 = vpop.f32.mrf.mxu0
        %v1933 = vadd.f32 %v1670, %v1932
        %v1934 = vpop.f32.mrf.mxu0
        %v1935 = vadd.f32 %v1666, %v1934
        %v1936 = vpop.f32.mrf.mxu0
        %v1937 = vadd.f32 %v1670, %v1936
        %1938 = vmatprep.mubr.bf16.mxu0 0
        %1939 = vmatmul.mubr.bf16.gmra.mxu0 %v1607
        %v1940 = vpop.f32.mrf.mxu0
        %v1941 = vadd.f32 %v1666, %v1940
        %v1942 = vpop.f32.mrf.mxu0
        %v1943 = vadd.f32 %v1670, %v1942
        %v1944 = vpop.f32.mrf.mxu0
        %v1945 = vadd.f32 %v1666, %v1944
        %v1946 = vpop.f32.mrf.mxu0
        %v1947 = vadd.f32 %v1670, %v1946
        %1948 = vmatprep.mubr.bf16.mxu0 0
        %1949 = vmatmul.mubr.bf16.gmra.mxu0 %v1608
        %v1950 = vpop.f32.mrf.mxu0
        %v1951 = vadd.f32 %v1666, %v1950
        %v1952 = vpop.f32.mrf.mxu0
        %v1953 = vadd.f32 %v1670, %v1952
        %v1954 = vpop.f32.mrf.mxu0
        %v1955 = vadd.f32 %v1666, %v1954
        %v1956 = vpop.f32.mrf.mxu0
        %v1957 = vadd.f32 %v1670, %v1956
        %1958 = vmatprep.mubr.bf16.mxu0 0
        %1959 = vmatmul.mubr.bf16.gmra.mxu0 %v1609
        %v1960 = vpop.f32.mrf.mxu0
        %v1961 = vadd.f32 %v1666, %v1960
        %v1962 = vpop.f32.mrf.mxu0
        %v1963 = vadd.f32 %v1670, %v1962
        %v1964 = vpop.f32.mrf.mxu0
        %v1965 = vadd.f32 %v1666, %v1964
        %v1966 = vpop.f32.mrf.mxu0
        %v1967 = vadd.f32 %v1670, %v1966
        %1968 = vmatprep.mubr.bf16.mxu0 0
        %1969 = vmatmul.mubr.bf16.gmra.mxu0 %v1610
        %v1970 = vpop.f32.mrf.mxu0
        %v1971 = vadd.f32 %v1666, %v1970
        %v1972 = vpop.f32.mrf.mxu0
        %v1973 = vadd.f32 %v1670, %v1972
        %v1974 = vpop.f32.mrf.mxu0
        %v1975 = vadd.f32 %v1666, %v1974
        %v1976 = vpop.f32.mrf.mxu0
        %v1977 = vadd.f32 %v1670, %v1976
        %1978 = vmatprep.mubr.bf16.mxu0 0
        %1979 = vmatmul.mubr.bf16.gmra.mxu0 %v1611
        %v1980 = vpop.f32.mrf.mxu0
        %v1981 = vadd.f32 %v1666, %v1980
        %v1982 = vpop.f32.mrf.mxu0
        %v1983 = vadd.f32 %v1670, %v1982
        %v1984 = vpop.f32.mrf.mxu0
        %v1985 = vadd.f32 %v1666, %v1984
        %v1986 = vpop.f32.mrf.mxu0
        %v1987 = vadd.f32 %v1670, %v1986
        %1988 = vmatprep.mubr.bf16.mxu0 0
        %1989 = vmatmul.mubr.bf16.gmra.mxu0 %v1612
        %v1990 = vpop.f32.mrf.mxu0
        %v1991 = vadd.f32 %v1666, %v1990
        %v1992 = vpop.f32.mrf.mxu0
        %v1993 = vadd.f32 %v1670, %v1992
        %v1994 = vpop.f32.mrf.mxu0
        %v1995 = vadd.f32 %v1666, %v1994
        %v1996 = vpop.f32.mrf.mxu0
        %v1997 = vadd.f32 %v1670, %v1996
        %1998 = vmatprep.mubr.bf16.mxu0 0
        %1999 = vmatmul.mubr.bf16.gmra.mxu0 %v1613
        %v2000 = vpop.f32.mrf.mxu0
        %v2001 = vadd.f32 %v1666, %v2000
        %v2002 = vpop.f32.mrf.mxu0
        %v2003 = vadd.f32 %v1670, %v2002
        %v2004 = vpop.f32.mrf.mxu0
        %v2005 = vadd.f32 %v1666, %v2004
        %v2006 = vpop.f32.mrf.mxu0
        %v2007 = vadd.f32 %v1670, %v2006
        %2008 = vmatprep.mubr.bf16.mxu0 0
        %2009 = vmatmul.mubr.bf16.gmra.mxu0 %v1614
        %v2010 = vpop.f32.mrf.mxu0
        %v2011 = vadd.f32 %v1666, %v2010
        %v2012 = vpop.f32.mrf.mxu0
        %v2013 = vadd.f32 %v1670, %v2012
        %v2014 = vpop.f32.mrf.mxu0
        %v2015 = vadd.f32 %v1666, %v2014
        %v2016 = vpop.f32.mrf.mxu0
        %v2017 = vadd.f32 %v1670, %v2016
        %2018 = vmatprep.mubr.bf16.mxu0 0
        %2019 = vmatmul.mubr.bf16.gmra.mxu0 %v1615
        %v2020 = vpop.f32.mrf.mxu0
        %v2021 = vadd.f32 %v1666, %v2020
        %v2022 = vpop.f32.mrf.mxu0
        %v2023 = vadd.f32 %v1670, %v2022
        %v2024 = vpop.f32.mrf.mxu0
        %v2025 = vadd.f32 %v1666, %v2024
        %v2026 = vpop.f32.mrf.mxu0
        %v2027 = vadd.f32 %v1670, %v2026
        %2028 = vmatprep.mubr.bf16.mxu0 0
        %2029 = vmatmul.mubr.bf16.gmra.mxu0 %v1616
        %v2030 = vpop.f32.mrf.mxu0
        %v2031 = vadd.f32 %v1666, %v2030
        %v2032 = vpop.f32.mrf.mxu0
        %v2033 = vadd.f32 %v1670, %v2032
        %v2034 = vpop.f32.mrf.mxu0
        %v2035 = vadd.f32 %v1666, %v2034
        %v2036 = vpop.f32.mrf.mxu0
        %v2037 = vadd.f32 %v1670, %v2036
        %2038 = vmatprep.mubr.bf16.mxu0 0
        %2039 = vmatmul.mubr.bf16.gmra.mxu0 %v1617
        %v2040 = vpop.f32.mrf.mxu0
        %v2041 = vadd.f32 %v1666, %v2040
        %v2042 = vpop.f32.mrf.mxu0
        %v2043 = vadd.f32 %v1670, %v2042
        %v2044 = vpop.f32.mrf.mxu0
        %v2045 = vadd.f32 %v1666, %v2044
        %v2046 = vpop.f32.mrf.mxu0
        %v2047 = vadd.f32 %v1670, %v2046
        %2048 = vmatprep.mubr.bf16.mxu0 0
        %2049 = vmatmul.mubr.bf16.gmra.mxu0 %v1618
        %v2050 = vpop.f32.mrf.mxu0
        %v2051 = vadd.f32 %v1666, %v2050
        %v2052 = vpop.f32.mrf.mxu0
        %v2053 = vadd.f32 %v1670, %v2052
        %v2054 = vpop.f32.mrf.mxu0
        %v2055 = vadd.f32 %v1666, %v2054
        %v2056 = vpop.f32.mrf.mxu0
        %v2057 = vadd.f32 %v1670, %v2056
        %2058 = vmatprep.mubr.bf16.mxu0 0
        %2059 = vmatmul.mubr.bf16.gmra.mxu0 %v1619
        %v2060 = vpop.f32.mrf.mxu0
        %v2061 = vadd.f32 %v1666, %v2060
        %v2062 = vpop.f32.mrf.mxu0
        %v2063 = vadd.f32 %v1670, %v2062
        %v2064 = vpop.f32.mrf.mxu0
        %v2065 = vadd.f32 %v1666, %v2064
        %v2066 = vpop.f32.mrf.mxu0
        %v2067 = vadd.f32 %v1670, %v2066
        %2068 = vmatprep.mubr.bf16.mxu0 0
        %2069 = vmatmul.mubr.bf16.gmra.mxu0 %v1620
        %v2070 = vpop.f32.mrf.mxu0
        %v2071 = vadd.f32 %v1666, %v2070
        %v2072 = vpop.f32.mrf.mxu0
        %v2073 = vadd.f32 %v1670, %v2072
        %v2074 = vpop.f32.mrf.mxu0
        %v2075 = vadd.f32 %v1666, %v2074
        %v2076 = vpop.f32.mrf.mxu0
        %v2077 = vadd.f32 %v1670, %v2076
        %2078 = vmatprep.mubr.bf16.mxu0 0
        %2079 = vmatmul.mubr.bf16.gmra.mxu0 %v1621
        %v2080 = vpop.f32.mrf.mxu0
        %v2081 = vadd.f32 %v1666, %v2080
        %v2082 = vpop.f32.mrf.mxu0
        %v2083 = vadd.f32 %v1670, %v2082
        %v2084 = vpop.f32.mrf.mxu0
        %v2085 = vadd.f32 %v1666, %v2084
        %v2086 = vpop.f32.mrf.mxu0
        %v2087 = vadd.f32 %v1670, %v2086
        %2088 = vmatprep.mubr.bf16.mxu0 0
        %2089 = vmatmul.mubr.bf16.gmra.mxu0 %v1622
        %v2090 = vpop.f32.mrf.mxu0
        %v2091 = vadd.f32 %v1666, %v2090
        %v2092 = vpop.f32.mrf.mxu0
        %v2093 = vadd.f32 %v1670, %v2092
        %v2094 = vpop.f32.mrf.mxu0
        %v2095 = vadd.f32 %v1666, %v2094
        %v2096 = vpop.f32.mrf.mxu0
        %v2097 = vadd.f32 %v1670, %v2096
        %2098 = vmatprep.mubr.bf16.mxu0 0
        %2099 = vmatmul.mubr.bf16.gmra.mxu0 %v1623
        %v2100 = vpop.f32.mrf.mxu0
        %v2101 = vadd.f32 %v1666, %v2100
        %v2102 = vpop.f32.mrf.mxu0
        %v2103 = vadd.f32 %v1670, %v2102
        %v2104 = vpop.f32.mrf.mxu0
        %v2105 = vadd.f32 %v1666, %v2104
        %v2106 = vpop.f32.mrf.mxu0
        %v2107 = vadd.f32 %v1670, %v2106
        %2108 = vmatprep.mubr.bf16.mxu0 0
        %2109 = vmatmul.mubr.bf16.gmra.mxu0 %v1624
        %v2110 = vpop.f32.mrf.mxu0
        %v2111 = vadd.f32 %v1666, %v2110
        %v2112 = vpop.f32.mrf.mxu0
        %v2113 = vadd.f32 %v1670, %v2112
        %v2114 = vpop.f32.mrf.mxu0
        %v2115 = vadd.f32 %v1666, %v2114
        %v2116 = vpop.f32.mrf.mxu0
        %v2117 = vadd.f32 %v1670, %v2116
        %2118 = vmatprep.mubr.bf16.mxu0 0
        %2119 = vmatmul.mubr.bf16.gmra.mxu0 %v1625
        %v2120 = vpop.f32.mrf.mxu0
        %v2121 = vadd.f32 %v1666, %v2120
        %v2122 = vpop.f32.mrf.mxu0
        %v2123 = vadd.f32 %v1670, %v2122
        %v2124 = vpop.f32.mrf.mxu0
        %v2125 = vadd.f32 %v1666, %v2124
        %v2126 = vpop.f32.mrf.mxu0
        %v2127 = vadd.f32 %v1670, %v2126
        %2128 = vmatprep.mubr.bf16.mxu0 0
        %2129 = vmatmul.mubr.bf16.gmra.mxu0 %v1626
        %v2130 = vpop.f32.mrf.mxu0
        %v2131 = vadd.f32 %v1666, %v2130
        %v2132 = vpop.f32.mrf.mxu0
        %v2133 = vadd.f32 %v1670, %v2132
        %v2134 = vpop.f32.mrf.mxu0
        %v2135 = vadd.f32 %v1666, %v2134
        %v2136 = vpop.f32.mrf.mxu0
        %v2137 = vadd.f32 %v1670, %v2136
        %2138 = vmatprep.mubr.bf16.mxu0 0
        %2139 = vmatmul.mubr.bf16.gmra.mxu0 %v1627
        %v2140 = vpop.f32.mrf.mxu0
        %v2141 = vadd.f32 %v1666, %v2140
        %v2142 = vpop.f32.mrf.mxu0
        %v2143 = vadd.f32 %v1670, %v2142
        %v2144 = vpop.f32.mrf.mxu0
        %v2145 = vadd.f32 %v1666, %v2144
        %v2146 = vpop.f32.mrf.mxu0
        %v2147 = vadd.f32 %v1670, %v2146
        %2148 = vmatprep.mubr.bf16.mxu0 0
        %2149 = vmatmul.mubr.bf16.gmra.mxu0 %v1628
        %v2150 = vpop.f32.mrf.mxu0
        %v2151 = vadd.f32 %v1666, %v2150
        %v2152 = vpop.f32.mrf.mxu0
        %v2153 = vadd.f32 %v1670, %v2152
        %v2154 = vpop.f32.mrf.mxu0
        %v2155 = vadd.f32 %v1666, %v2154
        %v2156 = vpop.f32.mrf.mxu0
        %v2157 = vadd.f32 %v1670, %v2156
        %2158 = vdwg.mxu0
        %2159 = vmatprep.subr.bf16.mxu0 0
        %2160 = vmatpush1.bf16.msra.mxu0 %v1781
        %2161 = vmatprep.subr.bf16.mxu0 0
        %2162 = vmatpush1.bf16.msra.mxu0 %v1778
        %2163 = vmatprep.subr.bf16.mxu0 0
        %2164 = vmatpush1.bf16.msra.mxu0 %v1775
        %2165 = vmatprep.subr.bf16.mxu0 0
        %2166 = vmatpush1.bf16.msra.mxu0 %v1772
        %2167 = vmatprep.subr.bf16.mxu0 0
        %2168 = vmatpush1.bf16.msra.mxu0 %v1769
        %2169 = vmatprep.subr.bf16.mxu0 0
        %2170 = vmatpush1.bf16.msra.mxu0 %v1766
        %2171 = vmatprep.subr.bf16.mxu0 0
        %2172 = vmatpush1.bf16.msra.mxu0 %v1763
        %2173 = vmatprep.subr.bf16.mxu0 0
        %2174 = vmatpush1.bf16.msra.mxu0 %v1760
        %2175 = vmatprep.subr.bf16.mxu0 0
        %2176 = vmatpush2.bf16.msra.mxu0 0
        %2177 = vmatprep.subr.bf16.mxu0 0
        %2178 = vmatpush2.bf16.msra.mxu0 0
        %2179 = vmatprep.subr.bf16.mxu0 0
        %2180 = vmatpush2.bf16.msra.mxu0 0
        %2181 = vmatprep.subr.bf16.mxu0 0
        %2182 = vmatpush2.bf16.msra.mxu0 0
        %2183 = vmatprep.subr.bf16.mxu0 0
        %2184 = vmatpush2.bf16.msra.mxu0 0
        %2185 = vmatprep.subr.bf16.mxu0 0
        %2186 = vmatpush2.bf16.msra.mxu0 0
        %2187 = vmatprep.subr.bf16.mxu0 0
        %2188 = vmatpush2.bf16.msra.mxu0 0
        %2189 = vmatprep.subr.bf16.mxu0 0
        %2190 = vmatpush2.bf16.msra.mxu0 0
        %2191 = vmatprep.mubr.bf16.mxu0 0
        %2192 = vmatmul.mubr.bf16.gmra.mxu0 %v1597
        %v2193 = vpop.f32.mrf.mxu0
        %v2194 = vadd.f32 %v1674, %v2193
        %v2195 = vpop.f32.mrf.mxu0
        %v2196 = vpop.f32.mrf.mxu0
        %v2197 = vadd.f32 %v1674, %v2196
        %v2198 = vpop.f32.mrf.mxu0
        %2199 = vmatprep.mubr.bf16.mxu0 0
        %2200 = vmatmul.mubr.bf16.gmra.mxu0 %v1598
        %v2201 = vpop.f32.mrf.mxu0
        %v2202 = vadd.f32 %v1674, %v2201
        %v2203 = vpop.f32.mrf.mxu0
        %v2204 = vpop.f32.mrf.mxu0
        %v2205 = vadd.f32 %v1674, %v2204
        %v2206 = vpop.f32.mrf.mxu0
        %2207 = vmatprep.mubr.bf16.mxu0 0
        %2208 = vmatmul.mubr.bf16.gmra.mxu0 %v1599
        %v2209 = vpop.f32.mrf.mxu0
        %v2210 = vadd.f32 %v1674, %v2209
        %v2211 = vpop.f32.mrf.mxu0
        %v2212 = vpop.f32.mrf.mxu0
        %v2213 = vadd.f32 %v1674, %v2212
        %v2214 = vpop.f32.mrf.mxu0
        %2215 = vmatprep.mubr.bf16.mxu0 0
        %2216 = vmatmul.mubr.bf16.gmra.mxu0 %v1600
        %v2217 = vpop.f32.mrf.mxu0
        %v2218 = vadd.f32 %v1674, %v2217
        %v2219 = vpop.f32.mrf.mxu0
        %v2220 = vpop.f32.mrf.mxu0
        %v2221 = vadd.f32 %v1674, %v2220
        %v2222 = vpop.f32.mrf.mxu0
        %2223 = vmatprep.mubr.bf16.mxu0 0
        %2224 = vmatmul.mubr.bf16.gmra.mxu0 %v1601
        %v2225 = vpop.f32.mrf.mxu0
        %v2226 = vadd.f32 %v1674, %v2225
        %v2227 = vpop.f32.mrf.mxu0
        %v2228 = vpop.f32.mrf.mxu0
        %v2229 = vadd.f32 %v1674, %v2228
        %v2230 = vpop.f32.mrf.mxu0
        %2231 = vmatprep.mubr.bf16.mxu0 0
        %2232 = vmatmul.mubr.bf16.gmra.mxu0 %v1602
        %v2233 = vpop.f32.mrf.mxu0
        %v2234 = vadd.f32 %v1674, %v2233
        %v2235 = vpop.f32.mrf.mxu0
        %v2236 = vpop.f32.mrf.mxu0
        %v2237 = vadd.f32 %v1674, %v2236
        %v2238 = vpop.f32.mrf.mxu0
        %2239 = vmatprep.mubr.bf16.mxu0 0
        %2240 = vmatmul.mubr.bf16.gmra.mxu0 %v1603
        %v2241 = vpop.f32.mrf.mxu0
        %v2242 = vadd.f32 %v1674, %v2241
        %v2243 = vpop.f32.mrf.mxu0
        %v2244 = vpop.f32.mrf.mxu0
        %v2245 = vadd.f32 %v1674, %v2244
        %v2246 = vpop.f32.mrf.mxu0
        %2247 = vmatprep.mubr.bf16.mxu0 0
        %2248 = vmatmul.mubr.bf16.gmra.mxu0 %v1604
        %v2249 = vpop.f32.mrf.mxu0
        %v2250 = vadd.f32 %v1674, %v2249
        %v2251 = vpop.f32.mrf.mxu0
        %v2252 = vpop.f32.mrf.mxu0
        %v2253 = vadd.f32 %v1674, %v2252
        %v2254 = vpop.f32.mrf.mxu0
        %2255 = vmatprep.mubr.bf16.mxu0 0
        %2256 = vmatmul.mubr.bf16.gmra.mxu0 %v1605
        %v2257 = vpop.f32.mrf.mxu0
        %v2258 = vadd.f32 %v1674, %v2257
        %v2259 = vpop.f32.mrf.mxu0
        %v2260 = vpop.f32.mrf.mxu0
        %v2261 = vadd.f32 %v1674, %v2260
        %v2262 = vpop.f32.mrf.mxu0
        %2263 = vmatprep.mubr.bf16.mxu0 0
        %2264 = vmatmul.mubr.bf16.gmra.mxu0 %v1606
        %v2265 = vpop.f32.mrf.mxu0
        %v2266 = vadd.f32 %v1674, %v2265
        %v2267 = vpop.f32.mrf.mxu0
        %v2268 = vpop.f32.mrf.mxu0
        %v2269 = vadd.f32 %v1674, %v2268
        %v2270 = vpop.f32.mrf.mxu0
        %2271 = vmatprep.mubr.bf16.mxu0 0
        %2272 = vmatmul.mubr.bf16.gmra.mxu0 %v1607
        %v2273 = vpop.f32.mrf.mxu0
        %v2274 = vadd.f32 %v1674, %v2273
        %v2275 = vpop.f32.mrf.mxu0
        %v2276 = vpop.f32.mrf.mxu0
        %v2277 = vadd.f32 %v1674, %v2276
        %v2278 = vpop.f32.mrf.mxu0
        %2279 = vmatprep.mubr.bf16.mxu0 0
        %2280 = vmatmul.mubr.bf16.gmra.mxu0 %v1608
        %v2281 = vpop.f32.mrf.mxu0
        %v2282 = vadd.f32 %v1674, %v2281
        %v2283 = vpop.f32.mrf.mxu0
        %v2284 = vpop.f32.mrf.mxu0
        %v2285 = vadd.f32 %v1674, %v2284
        %v2286 = vpop.f32.mrf.mxu0
        %2287 = vmatprep.mubr.bf16.mxu0 0
        %2288 = vmatmul.mubr.bf16.gmra.mxu0 %v1609
        %v2289 = vpop.f32.mrf.mxu0
        %v2290 = vadd.f32 %v1674, %v2289
        %v2291 = vpop.f32.mrf.mxu0
        %v2292 = vpop.f32.mrf.mxu0
        %v2293 = vadd.f32 %v1674, %v2292
        %v2294 = vpop.f32.mrf.mxu0
        %2295 = vmatprep.mubr.bf16.mxu0 0
        %2296 = vmatmul.mubr.bf16.gmra.mxu0 %v1610
        %v2297 = vpop.f32.mrf.mxu0
        %v2298 = vadd.f32 %v1674, %v2297
        %v2299 = vpop.f32.mrf.mxu0
        %v2300 = vpop.f32.mrf.mxu0
        %v2301 = vadd.f32 %v1674, %v2300
        %v2302 = vpop.f32.mrf.mxu0
        %2303 = vmatprep.mubr.bf16.mxu0 0
        %2304 = vmatmul.mubr.bf16.gmra.mxu0 %v1611
        %v2305 = vpop.f32.mrf.mxu0
        %v2306 = vadd.f32 %v1674, %v2305
        %v2307 = vpop.f32.mrf.mxu0
        %v2308 = vpop.f32.mrf.mxu0
        %v2309 = vadd.f32 %v1674, %v2308
        %v2310 = vpop.f32.mrf.mxu0
        %2311 = vmatprep.mubr.bf16.mxu0 0
        %2312 = vmatmul.mubr.bf16.gmra.mxu0 %v1612
        %v2313 = vpop.f32.mrf.mxu0
        %v2314 = vadd.f32 %v1674, %v2313
        %v2315 = vpop.f32.mrf.mxu0
        %v2316 = vpop.f32.mrf.mxu0
        %v2317 = vadd.f32 %v1674, %v2316
        %v2318 = vpop.f32.mrf.mxu0
        %2319 = vmatprep.mubr.bf16.mxu0 0
        %2320 = vmatmul.mubr.bf16.gmra.mxu0 %v1613
        %v2321 = vpop.f32.mrf.mxu0
        %v2322 = vadd.f32 %v1674, %v2321
        %v2323 = vpop.f32.mrf.mxu0
        %v2324 = vpop.f32.mrf.mxu0
        %v2325 = vadd.f32 %v1674, %v2324
        %v2326 = vpop.f32.mrf.mxu0
        %2327 = vmatprep.mubr.bf16.mxu0 0
        %2328 = vmatmul.mubr.bf16.gmra.mxu0 %v1614
        %v2329 = vpop.f32.mrf.mxu0
        %v2330 = vadd.f32 %v1674, %v2329
        %v2331 = vpop.f32.mrf.mxu0
        %v2332 = vpop.f32.mrf.mxu0
        %v2333 = vadd.f32 %v1674, %v2332
        %v2334 = vpop.f32.mrf.mxu0
        %2335 = vmatprep.mubr.bf16.mxu0 0
        %2336 = vmatmul.mubr.bf16.gmra.mxu0 %v1615
        %v2337 = vpop.f32.mrf.mxu0
        %v2338 = vadd.f32 %v1674, %v2337
        %v2339 = vpop.f32.mrf.mxu0
        %v2340 = vpop.f32.mrf.mxu0
        %v2341 = vadd.f32 %v1674, %v2340
        %v2342 = vpop.f32.mrf.mxu0
        %2343 = vmatprep.mubr.bf16.mxu0 0
        %2344 = vmatmul.mubr.bf16.gmra.mxu0 %v1616
        %v2345 = vpop.f32.mrf.mxu0
        %v2346 = vadd.f32 %v1674, %v2345
        %v2347 = vpop.f32.mrf.mxu0
        %v2348 = vpop.f32.mrf.mxu0
        %v2349 = vadd.f32 %v1674, %v2348
        %v2350 = vpop.f32.mrf.mxu0
        %2351 = vmatprep.mubr.bf16.mxu0 0
        %2352 = vmatmul.mubr.bf16.gmra.mxu0 %v1617
        %v2353 = vpop.f32.mrf.mxu0
        %v2354 = vadd.f32 %v1674, %v2353
        %v2355 = vpop.f32.mrf.mxu0
        %v2356 = vpop.f32.mrf.mxu0
        %v2357 = vadd.f32 %v1674, %v2356
        %v2358 = vpop.f32.mrf.mxu0
        %2359 = vmatprep.mubr.bf16.mxu0 0
        %2360 = vmatmul.mubr.bf16.gmra.mxu0 %v1618
        %v2361 = vpop.f32.mrf.mxu0
        %v2362 = vadd.f32 %v1674, %v2361
        %v2363 = vpop.f32.mrf.mxu0
        %v2364 = vpop.f32.mrf.mxu0
        %v2365 = vadd.f32 %v1674, %v2364
        %v2366 = vpop.f32.mrf.mxu0
        %2367 = vmatprep.mubr.bf16.mxu0 0
        %2368 = vmatmul.mubr.bf16.gmra.mxu0 %v1619
        %v2369 = vpop.f32.mrf.mxu0
        %v2370 = vadd.f32 %v1674, %v2369
        %v2371 = vpop.f32.mrf.mxu0
        %v2372 = vpop.f32.mrf.mxu0
        %v2373 = vadd.f32 %v1674, %v2372
        %v2374 = vpop.f32.mrf.mxu0
        %2375 = vmatprep.mubr.bf16.mxu0 0
        %2376 = vmatmul.mubr.bf16.gmra.mxu0 %v1620
        %v2377 = vpop.f32.mrf.mxu0
        %v2378 = vadd.f32 %v1674, %v2377
        %v2379 = vpop.f32.mrf.mxu0
        %v2380 = vpop.f32.mrf.mxu0
        %v2381 = vadd.f32 %v1674, %v2380
        %v2382 = vpop.f32.mrf.mxu0
        %2383 = vmatprep.mubr.bf16.mxu0 0
        %2384 = vmatmul.mubr.bf16.gmra.mxu0 %v1621
        %v2385 = vpop.f32.mrf.mxu0
        %v2386 = vadd.f32 %v1674, %v2385
        %v2387 = vpop.f32.mrf.mxu0
        %v2388 = vpop.f32.mrf.mxu0
        %v2389 = vadd.f32 %v1674, %v2388
        %v2390 = vpop.f32.mrf.mxu0
        %2391 = vmatprep.mubr.bf16.mxu0 0
        %2392 = vmatmul.mubr.bf16.gmra.mxu0 %v1622
        %v2393 = vpop.f32.mrf.mxu0
        %v2394 = vadd.f32 %v1674, %v2393
        %v2395 = vpop.f32.mrf.mxu0
        %v2396 = vpop.f32.mrf.mxu0
        %v2397 = vadd.f32 %v1674, %v2396
        %v2398 = vpop.f32.mrf.mxu0
        %2399 = vmatprep.mubr.bf16.mxu0 0
        %2400 = vmatmul.mubr.bf16.gmra.mxu0 %v1623
        %v2401 = vpop.f32.mrf.mxu0
        %v2402 = vadd.f32 %v1674, %v2401
        %v2403 = vpop.f32.mrf.mxu0
        %v2404 = vpop.f32.mrf.mxu0
        %v2405 = vadd.f32 %v1674, %v2404
        %v2406 = vpop.f32.mrf.mxu0
        %2407 = vmatprep.mubr.bf16.mxu0 0
        %2408 = vmatmul.mubr.bf16.gmra.mxu0 %v1624
        %v2409 = vpop.f32.mrf.mxu0
        %v2410 = vadd.f32 %v1674, %v2409
        %v2411 = vpop.f32.mrf.mxu0
        %v2412 = vpop.f32.mrf.mxu0
        %v2413 = vadd.f32 %v1674, %v2412
        %v2414 = vpop.f32.mrf.mxu0
        %2415 = vmatprep.mubr.bf16.mxu0 0
        %2416 = vmatmul.mubr.bf16.gmra.mxu0 %v1625
        %v2417 = vpop.f32.mrf.mxu0
        %v2418 = vadd.f32 %v1674, %v2417
        %v2419 = vpop.f32.mrf.mxu0
        %v2420 = vpop.f32.mrf.mxu0
        %v2421 = vadd.f32 %v1674, %v2420
        %v2422 = vpop.f32.mrf.mxu0
        %2423 = vmatprep.mubr.bf16.mxu0 0
        %2424 = vmatmul.mubr.bf16.gmra.mxu0 %v1626
        %v2425 = vpop.f32.mrf.mxu0
        %v2426 = vadd.f32 %v1674, %v2425
        %v2427 = vpop.f32.mrf.mxu0
        %v2428 = vpop.f32.mrf.mxu0
        %v2429 = vadd.f32 %v1674, %v2428
        %v2430 = vpop.f32.mrf.mxu0
        %2431 = vmatprep.mubr.bf16.mxu0 0
        %2432 = vmatmul.mubr.bf16.gmra.mxu0 %v1627
        %v2433 = vpop.f32.mrf.mxu0
        %v2434 = vadd.f32 %v1674, %v2433
        %v2435 = vpop.f32.mrf.mxu0
        %v2436 = vpop.f32.mrf.mxu0
        %v2437 = vadd.f32 %v1674, %v2436
        %v2438 = vpop.f32.mrf.mxu0
        %2439 = vmatprep.mubr.bf16.mxu0 0
        %2440 = vmatmul.mubr.bf16.gmra.mxu0 %v1628
        %v2441 = vpop.f32.mrf.mxu0
        %v2442 = vadd.f32 %v1674, %v2441
        %v2443 = vpop.f32.mrf.mxu0
        %v2444 = vpop.f32.mrf.mxu0
        %v2445 = vadd.f32 %v1674, %v2444
        %v2446 = vpop.f32.mrf.mxu0
        %2447 = vdwg.mxu0
        %v2448 = vadd.f32 %v1405, %v1841
        %v2449 = vadd.f32 %v1408, %v1845
        %v2450 = vadd.f32 %v1411, %v1851
        %v2451 = vadd.f32 %v1414, %v1855
        %v2452 = vadd.f32 %v1417, %v1861
        %v2453 = vadd.f32 %v1420, %v1865
        %v2454 = vadd.f32 %v1423, %v1871
        %v2455 = vadd.f32 %v1426, %v1875
        %v2456 = vadd.f32 %v1429, %v1881
        %v2457 = vadd.f32 %v1432, %v1885
        %v2458 = vadd.f32 %v1435, %v1891
        %v2459 = vadd.f32 %v1438, %v1895
        %v2460 = vadd.f32 %v1441, %v1901
        %v2461 = vadd.f32 %v1444, %v1905
        %v2462 = vadd.f32 %v1447, %v1911
        %v2463 = vadd.f32 %v1450, %v1915
        %v2464 = vadd.f32 %v1453, %v1921
        %v2465 = vadd.f32 %v1456, %v1925
        %v2466 = vadd.f32 %v1459, %v1931
        %v2467 = vadd.f32 %v1462, %v1935
        %v2468 = vadd.f32 %v1465, %v1941
        %v2469 = vadd.f32 %v1468, %v1945
        %v2470 = vadd.f32 %v1471, %v1951
        %v2471 = vadd.f32 %v1474, %v1955
        %v2472 = vadd.f32 %v1477, %v1961
        %v2473 = vadd.f32 %v1480, %v1965
        %v2474 = vadd.f32 %v1483, %v1971
        %v2475 = vadd.f32 %v1486, %v1975
        %v2476 = vadd.f32 %v1489, %v1981
        %v2477 = vadd.f32 %v1492, %v1985
        %v2478 = vadd.f32 %v1495, %v1991
        %v2479 = vadd.f32 %v1498, %v1995
        %v2480 = vadd.f32 %v1501, %v2001
        %v2481 = vadd.f32 %v1504, %v2005
        %v2482 = vadd.f32 %v1507, %v2011
        %v2483 = vadd.f32 %v1510, %v2015
        %v2484 = vadd.f32 %v1513, %v2021
        %v2485 = vadd.f32 %v1516, %v2025
        %v2486 = vadd.f32 %v1519, %v2031
        %v2487 = vadd.f32 %v1522, %v2035
        %v2488 = vadd.f32 %v1525, %v2041
        %v2489 = vadd.f32 %v1528, %v2045
        %v2490 = vadd.f32 %v1531, %v2051
        %v2491 = vadd.f32 %v1534, %v2055
        %v2492 = vadd.f32 %v1537, %v2061
        %v2493 = vadd.f32 %v1540, %v2065
        %v2494 = vadd.f32 %v1543, %v2071
        %v2495 = vadd.f32 %v1546, %v2075
        %v2496 = vadd.f32 %v1549, %v2081
        %v2497 = vadd.f32 %v1552, %v2085
        %v2498 = vadd.f32 %v1555, %v2091
        %v2499 = vadd.f32 %v1558, %v2095
        %v2500 = vadd.f32 %v1561, %v2101
        %v2501 = vadd.f32 %v1564, %v2105
        %v2502 = vadd.f32 %v1567, %v2111
        %v2503 = vadd.f32 %v1570, %v2115
        %v2504 = vadd.f32 %v1573, %v2121
        %v2505 = vadd.f32 %v1576, %v2125
        %v2506 = vadd.f32 %v1579, %v2131
        %v2507 = vadd.f32 %v1582, %v2135
        %v2508 = vadd.f32 %v1585, %v2141
        %v2509 = vadd.f32 %v1588, %v2145
        %v2510 = vadd.f32 %v1591, %v2151
        %v2511 = vadd.f32 %v1594, %v2155
        %v2512 = vxor.u32 %v2448, 2147483648
        %v2513 = vxor.u32 %v2449, 2147483648
        %v2514 = vxor.u32 %v2450, 2147483648
        %v2515 = vxor.u32 %v2451, 2147483648
        %v2516 = vxor.u32 %v2452, 2147483648
        %v2517 = vxor.u32 %v2453, 2147483648
        %v2518 = vxor.u32 %v2454, 2147483648
        %v2519 = vxor.u32 %v2455, 2147483648
        %v2520 = vxor.u32 %v2456, 2147483648
        %v2521 = vxor.u32 %v2457, 2147483648
        %v2522 = vxor.u32 %v2458, 2147483648
        %v2523 = vxor.u32 %v2459, 2147483648
        %v2524 = vxor.u32 %v2460, 2147483648
        %v2525 = vxor.u32 %v2461, 2147483648
        %v2526 = vxor.u32 %v2462, 2147483648
        %v2527 = vxor.u32 %v2463, 2147483648
        %v2528 = vxor.u32 %v2464, 2147483648
        %v2529 = vxor.u32 %v2465, 2147483648
        %v2530 = vxor.u32 %v2466, 2147483648
        %v2531 = vxor.u32 %v2467, 2147483648
        %v2532 = vxor.u32 %v2468, 2147483648
        %v2533 = vxor.u32 %v2469, 2147483648
        %v2534 = vxor.u32 %v2470, 2147483648
        %v2535 = vxor.u32 %v2471, 2147483648
        %v2536 = vxor.u32 %v2472, 2147483648
        %v2537 = vxor.u32 %v2473, 2147483648
        %v2538 = vxor.u32 %v2474, 2147483648
        %v2539 = vxor.u32 %v2475, 2147483648
        %v2540 = vxor.u32 %v2476, 2147483648
        %v2541 = vxor.u32 %v2477, 2147483648
        %v2542 = vxor.u32 %v2478, 2147483648
        %v2543 = vxor.u32 %v2479, 2147483648
        %v2544 = vxor.u32 %v2480, 2147483648
        %v2545 = vxor.u32 %v2481, 2147483648
        %v2546 = vxor.u32 %v2482, 2147483648
        %v2547 = vxor.u32 %v2483, 2147483648
        %v2548 = vxor.u32 %v2484, 2147483648
        %v2549 = vxor.u32 %v2485, 2147483648
        %v2550 = vxor.u32 %v2486, 2147483648
        %v2551 = vxor.u32 %v2487, 2147483648
        %v2552 = vxor.u32 %v2488, 2147483648
        %v2553 = vxor.u32 %v2489, 2147483648
        %v2554 = vxor.u32 %v2490, 2147483648
        %v2555 = vxor.u32 %v2491, 2147483648
        %v2556 = vxor.u32 %v2492, 2147483648
        %v2557 = vxor.u32 %v2493, 2147483648
        %v2558 = vxor.u32 %v2494, 2147483648
        %v2559 = vxor.u32 %v2495, 2147483648
        %v2560 = vxor.u32 %v2496, 2147483648
        %v2561 = vxor.u32 %v2497, 2147483648
        %v2562 = vxor.u32 %v2498, 2147483648
        %v2563 = vxor.u32 %v2499, 2147483648
        %v2564 = vxor.u32 %v2500, 2147483648
        %v2565 = vxor.u32 %v2501, 2147483648
        %v2566 = vxor.u32 %v2502, 2147483648
        %v2567 = vxor.u32 %v2503, 2147483648
        %v2568 = vxor.u32 %v2504, 2147483648
        %v2569 = vxor.u32 %v2505, 2147483648
        %v2570 = vxor.u32 %v2506, 2147483648
        %v2571 = vxor.u32 %v2507, 2147483648
        %v2572 = vxor.u32 %v2508, 2147483648
        %v2573 = vxor.u32 %v2509, 2147483648
        %v2574 = vxor.u32 %v2510, 2147483648
        %v2575 = vxor.u32 %v2511, 2147483648
        %v2576 = vmul.f32 %v2512, 1.442695
        %v2577 = vpow.pop %v2576
        %v2578 = vmul.f32 %v2513, 1.442695
        %v2579 = vpow.pop %v2578
        %v2580 = vmul.f32 %v2514, 1.442695
        %v2581 = vpow.pop %v2580
        %v2582 = vmul.f32 %v2515, 1.442695
        %v2583 = vpow.pop %v2582
        %v2584 = vmul.f32 %v2516, 1.442695
        %v2585 = vpow.pop %v2584
        %v2586 = vmul.f32 %v2517, 1.442695
        %v2587 = vpow.pop %v2586
        %v2588 = vmul.f32 %v2518, 1.442695
        %v2589 = vpow.pop %v2588
        %v2590 = vmul.f32 %v2519, 1.442695
        %v2591 = vpow.pop %v2590
        %v2592 = vmul.f32 %v2520, 1.442695
        %v2593 = vpow.pop %v2592
        %v2594 = vmul.f32 %v2521, 1.442695
        %v2595 = vpow.pop %v2594
        %v2596 = vmul.f32 %v2522, 1.442695
        %v2597 = vpow.pop %v2596
        %v2598 = vmul.f32 %v2523, 1.442695
        %v2599 = vpow.pop %v2598
        %v2600 = vmul.f32 %v2524, 1.442695
        %v2601 = vpow.pop %v2600
        %v2602 = vmul.f32 %v2525, 1.442695
        %v2603 = vpow.pop %v2602
        %v2604 = vmul.f32 %v2526, 1.442695
        %v2605 = vpow.pop %v2604
        %v2606 = vmul.f32 %v2527, 1.442695
        %v2607 = vpow.pop %v2606
        %v2608 = vmul.f32 %v2528, 1.442695
        %v2609 = vpow.pop %v2608
        %v2610 = vmul.f32 %v2529, 1.442695
        %v2611 = vpow.pop %v2610
        %v2612 = vmul.f32 %v2530, 1.442695
        %v2613 = vpow.pop %v2612
        %v2614 = vmul.f32 %v2531, 1.442695
        %v2615 = vpow.pop %v2614
        %v2616 = vmul.f32 %v2532, 1.442695
        %v2617 = vpow.pop %v2616
        %v2618 = vmul.f32 %v2533, 1.442695
        %v2619 = vpow.pop %v2618
        %v2620 = vmul.f32 %v2534, 1.442695
        %v2621 = vpow.pop %v2620
        %v2622 = vmul.f32 %v2535, 1.442695
        %v2623 = vpow.pop %v2622
        %v2624 = vmul.f32 %v2536, 1.442695
        %v2625 = vpow.pop %v2624
        %v2626 = vmul.f32 %v2537, 1.442695
        %v2627 = vpow.pop %v2626
        %v2628 = vmul.f32 %v2538, 1.442695
        %v2629 = vpow.pop %v2628
        %v2630 = vmul.f32 %v2539, 1.442695
        %v2631 = vpow.pop %v2630
        %v2632 = vmul.f32 %v2540, 1.442695
        %v2633 = vpow.pop %v2632
        %v2634 = vmul.f32 %v2541, 1.442695
        %v2635 = vpow.pop %v2634
        %v2636 = vmul.f32 %v2542, 1.442695
        %v2637 = vpow.pop %v2636
        %v2638 = vmul.f32 %v2543, 1.442695
        %v2639 = vpow.pop %v2638
        %v2640 = vmul.f32 %v2544, 1.442695
        %v2641 = vpow.pop %v2640
        %v2642 = vmul.f32 %v2545, 1.442695
        %v2643 = vpow.pop %v2642
        %v2644 = vmul.f32 %v2546, 1.442695
        %v2645 = vpow.pop %v2644
        %v2646 = vmul.f32 %v2547, 1.442695
        %v2647 = vpow.pop %v2646
        %v2648 = vmul.f32 %v2548, 1.442695
        %v2649 = vpow.pop %v2648
        %v2650 = vmul.f32 %v2549, 1.442695
        %v2651 = vpow.pop %v2650
        %v2652 = vmul.f32 %v2550, 1.442695
        %v2653 = vpow.pop %v2652
        %v2654 = vmul.f32 %v2551, 1.442695
        %v2655 = vpow.pop %v2654
        %v2656 = vmul.f32 %v2552, 1.442695
        %v2657 = vpow.pop %v2656
        %v2658 = vmul.f32 %v2553, 1.442695
        %v2659 = vpow.pop %v2658
        %v2660 = vmul.f32 %v2554, 1.442695
        %v2661 = vpow.pop %v2660
        %v2662 = vmul.f32 %v2555, 1.442695
        %v2663 = vpow.pop %v2662
        %v2664 = vmul.f32 %v2556, 1.442695
        %v2665 = vpow.pop %v2664
        %v2666 = vmul.f32 %v2557, 1.442695
        %v2667 = vpow.pop %v2666
        %v2668 = vmul.f32 %v2558, 1.442695
        %v2669 = vpow.pop %v2668
        %v2670 = vmul.f32 %v2559, 1.442695
        %v2671 = vpow.pop %v2670
        %v2672 = vmul.f32 %v2560, 1.442695
        %v2673 = vpow.pop %v2672
        %v2674 = vmul.f32 %v2561, 1.442695
        %v2675 = vpow.pop %v2674
        %v2676 = vmul.f32 %v2562, 1.442695
        %v2677 = vpow.pop %v2676
        %v2678 = vmul.f32 %v2563, 1.442695
        %v2679 = vpow.pop %v2678
        %v2680 = vmul.f32 %v2564, 1.442695
        %v2681 = vpow.pop %v2680
        %v2682 = vmul.f32 %v2565, 1.442695
        %v2683 = vpow.pop %v2682
        %v2684 = vmul.f32 %v2566, 1.442695
        %v2685 = vpow.pop %v2684
        %v2686 = vmul.f32 %v2567, 1.442695
        %v2687 = vpow.pop %v2686
        %v2688 = vmul.f32 %v2568, 1.442695
        %v2689 = vpow.pop %v2688
        %v2690 = vmul.f32 %v2569, 1.442695
        %v2691 = vpow.pop %v2690
        %v2692 = vmul.f32 %v2570, 1.442695
        %v2693 = vpow.pop %v2692
        %v2694 = vmul.f32 %v2571, 1.442695
        %v2695 = vpow.pop %v2694
        %v2696 = vmul.f32 %v2572, 1.442695
        %v2697 = vpow.pop %v2696
        %v2698 = vmul.f32 %v2573, 1.442695
        %v2699 = vpow.pop %v2698
        %v2700 = vmul.f32 %v2574, 1.442695
        %v2701 = vpow.pop %v2700
        %v2702 = vmul.f32 %v2575, 1.442695
        %v2703 = vpow.pop %v2702
        %v2704 = vadd.f32 %v2577, 1.0
        %v2705 = vadd.f32 %v2579, 1.0
        %v2706 = vadd.f32 %v2581, 1.0
        %v2707 = vadd.f32 %v2583, 1.0
        %v2708 = vadd.f32 %v2585, 1.0
        %v2709 = vadd.f32 %v2587, 1.0
        %v2710 = vadd.f32 %v2589, 1.0
        %v2711 = vadd.f32 %v2591, 1.0
        %v2712 = vadd.f32 %v2593, 1.0
        %v2713 = vadd.f32 %v2595, 1.0
        %v2714 = vadd.f32 %v2597, 1.0
        %v2715 = vadd.f32 %v2599, 1.0
        %v2716 = vadd.f32 %v2601, 1.0
        %v2717 = vadd.f32 %v2603, 1.0
        %v2718 = vadd.f32 %v2605, 1.0
        %v2719 = vadd.f32 %v2607, 1.0
        %v2720 = vadd.f32 %v2609, 1.0
        %v2721 = vadd.f32 %v2611, 1.0
        %v2722 = vadd.f32 %v2613, 1.0
        %v2723 = vadd.f32 %v2615, 1.0
        %v2724 = vadd.f32 %v2617, 1.0
        %v2725 = vadd.f32 %v2619, 1.0
        %v2726 = vadd.f32 %v2621, 1.0
        %v2727 = vadd.f32 %v2623, 1.0
        %v2728 = vadd.f32 %v2625, 1.0
        %v2729 = vadd.f32 %v2627, 1.0
        %v2730 = vadd.f32 %v2629, 1.0
        %v2731 = vadd.f32 %v2631, 1.0
        %v2732 = vadd.f32 %v2633, 1.0
        %v2733 = vadd.f32 %v2635, 1.0
        %v2734 = vadd.f32 %v2637, 1.0
        %v2735 = vadd.f32 %v2639, 1.0
        %v2736 = vadd.f32 %v2641, 1.0
        %v2737 = vadd.f32 %v2643, 1.0
        %v2738 = vadd.f32 %v2645, 1.0
        %v2739 = vadd.f32 %v2647, 1.0
        %v2740 = vadd.f32 %v2649, 1.0
        %v2741 = vadd.f32 %v2651, 1.0
        %v2742 = vadd.f32 %v2653, 1.0
        %v2743 = vadd.f32 %v2655, 1.0
        %v2744 = vadd.f32 %v2657, 1.0
        %v2745 = vadd.f32 %v2659, 1.0
        %v2746 = vadd.f32 %v2661, 1.0
        %v2747 = vadd.f32 %v2663, 1.0
        %v2748 = vadd.f32 %v2665, 1.0
        %v2749 = vadd.f32 %v2667, 1.0
        %v2750 = vadd.f32 %v2669, 1.0
        %v2751 = vadd.f32 %v2671, 1.0
        %v2752 = vadd.f32 %v2673, 1.0
        %v2753 = vadd.f32 %v2675, 1.0
        %v2754 = vadd.f32 %v2677, 1.0
        %v2755 = vadd.f32 %v2679, 1.0
        %v2756 = vadd.f32 %v2681, 1.0
        %v2757 = vadd.f32 %v2683, 1.0
        %v2758 = vadd.f32 %v2685, 1.0
        %v2759 = vadd.f32 %v2687, 1.0
        %v2760 = vadd.f32 %v2689, 1.0
        %v2761 = vadd.f32 %v2691, 1.0
        %v2762 = vadd.f32 %v2693, 1.0
        %v2763 = vadd.f32 %v2695, 1.0
        %v2764 = vadd.f32 %v2697, 1.0
        %v2765 = vadd.f32 %v2699, 1.0
        %v2766 = vadd.f32 %v2701, 1.0
        %v2767 = vadd.f32 %v2703, 1.0
        %v2768 = vrcp.pop %v2704
        %v2769 = vmul.f32 1.0, %v2768
        %v2770 = vrcp.pop %v2705
        %v2771 = vmul.f32 1.0, %v2770
        %v2772 = vrcp.pop %v2706
        %v2773 = vmul.f32 1.0, %v2772
        %v2774 = vrcp.pop %v2707
        %v2775 = vmul.f32 1.0, %v2774
        %v2776 = vrcp.pop %v2708
        %v2777 = vmul.f32 1.0, %v2776
        %v2778 = vrcp.pop %v2709
        %v2779 = vmul.f32 1.0, %v2778
        %v2780 = vrcp.pop %v2710
        %v2781 = vmul.f32 1.0, %v2780
        %v2782 = vrcp.pop %v2711
        %v2783 = vmul.f32 1.0, %v2782
        %v2784 = vrcp.pop %v2712
        %v2785 = vmul.f32 1.0, %v2784
        %v2786 = vrcp.pop %v2713
        %v2787 = vmul.f32 1.0, %v2786
        %v2788 = vrcp.pop %v2714
        %v2789 = vmul.f32 1.0, %v2788
        %v2790 = vrcp.pop %v2715
        %v2791 = vmul.f32 1.0, %v2790
        %v2792 = vrcp.pop %v2716
        %v2793 = vmul.f32 1.0, %v2792
        %v2794 = vrcp.pop %v2717
        %v2795 = vmul.f32 1.0, %v2794
        %v2796 = vrcp.pop %v2718
        %v2797 = vmul.f32 1.0, %v2796
        %v2798 = vrcp.pop %v2719
        %v2799 = vmul.f32 1.0, %v2798
        %v2800 = vrcp.pop %v2720
        %v2801 = vmul.f32 1.0, %v2800
        %v2802 = vrcp.pop %v2721
        %v2803 = vmul.f32 1.0, %v2802
        %v2804 = vrcp.pop %v2722
        %v2805 = vmul.f32 1.0, %v2804
        %v2806 = vrcp.pop %v2723
        %v2807 = vmul.f32 1.0, %v2806
        %v2808 = vrcp.pop %v2724
        %v2809 = vmul.f32 1.0, %v2808
        %v2810 = vrcp.pop %v2725
        %v2811 = vmul.f32 1.0, %v2810
        %v2812 = vrcp.pop %v2726
        %v2813 = vmul.f32 1.0, %v2812
        %v2814 = vrcp.pop %v2727
        %v2815 = vmul.f32 1.0, %v2814
        %v2816 = vrcp.pop %v2728
        %v2817 = vmul.f32 1.0, %v2816
        %v2818 = vrcp.pop %v2729
        %v2819 = vmul.f32 1.0, %v2818
        %v2820 = vrcp.pop %v2730
        %v2821 = vmul.f32 1.0, %v2820
        %v2822 = vrcp.pop %v2731
        %v2823 = vmul.f32 1.0, %v2822
        %v2824 = vrcp.pop %v2732
        %v2825 = vmul.f32 1.0, %v2824
        %v2826 = vrcp.pop %v2733
        %v2827 = vmul.f32 1.0, %v2826
        %v2828 = vrcp.pop %v2734
        %v2829 = vmul.f32 1.0, %v2828
        %v2830 = vrcp.pop %v2735
        %v2831 = vmul.f32 1.0, %v2830
        %v2832 = vrcp.pop %v2736
        %v2833 = vmul.f32 1.0, %v2832
        %v2834 = vrcp.pop %v2737
        %v2835 = vmul.f32 1.0, %v2834
        %v2836 = vrcp.pop %v2738
        %v2837 = vmul.f32 1.0, %v2836
        %v2838 = vrcp.pop %v2739
        %v2839 = vmul.f32 1.0, %v2838
        %v2840 = vrcp.pop %v2740
        %v2841 = vmul.f32 1.0, %v2840
        %v2842 = vrcp.pop %v2741
        %v2843 = vmul.f32 1.0, %v2842
        %v2844 = vrcp.pop %v2742
        %v2845 = vmul.f32 1.0, %v2844
        %v2846 = vrcp.pop %v2743
        %v2847 = vmul.f32 1.0, %v2846
        %v2848 = vrcp.pop %v2744
        %v2849 = vmul.f32 1.0, %v2848
        %v2850 = vrcp.pop %v2745
        %v2851 = vmul.f32 1.0, %v2850
        %v2852 = vrcp.pop %v2746
        %v2853 = vmul.f32 1.0, %v2852
        %v2854 = vrcp.pop %v2747
        %v2855 = vmul.f32 1.0, %v2854
        %v2856 = vrcp.pop %v2748
        %v2857 = vmul.f32 1.0, %v2856
        %v2858 = vrcp.pop %v2749
        %v2859 = vmul.f32 1.0, %v2858
        %v2860 = vrcp.pop %v2750
        %v2861 = vmul.f32 1.0, %v2860
        %v2862 = vrcp.pop %v2751
        %v2863 = vmul.f32 1.0, %v2862
        %v2864 = vrcp.pop %v2752
        %v2865 = vmul.f32 1.0, %v2864
        %v2866 = vrcp.pop %v2753
        %v2867 = vmul.f32 1.0, %v2866
        %v2868 = vrcp.pop %v2754
        %v2869 = vmul.f32 1.0, %v2868
        %v2870 = vrcp.pop %v2755
        %v2871 = vmul.f32 1.0, %v2870
        %v2872 = vrcp.pop %v2756
        %v2873 = vmul.f32 1.0, %v2872
        %v2874 = vrcp.pop %v2757
        %v2875 = vmul.f32 1.0, %v2874
        %v2876 = vrcp.pop %v2758
        %v2877 = vmul.f32 1.0, %v2876
        %v2878 = vrcp.pop %v2759
        %v2879 = vmul.f32 1.0, %v2878
        %v2880 = vrcp.pop %v2760
        %v2881 = vmul.f32 1.0, %v2880
        %v2882 = vrcp.pop %v2761
        %v2883 = vmul.f32 1.0, %v2882
        %v2884 = vrcp.pop %v2762
        %v2885 = vmul.f32 1.0, %v2884
        %v2886 = vrcp.pop %v2763
        %v2887 = vmul.f32 1.0, %v2886
        %v2888 = vrcp.pop %v2764
        %v2889 = vmul.f32 1.0, %v2888
        %v2890 = vrcp.pop %v2765
        %v2891 = vmul.f32 1.0, %v2890
        %v2892 = vrcp.pop %v2766
        %v2893 = vmul.f32 1.0, %v2892
        %v2894 = vrcp.pop %v2767
        %v2895 = vmul.f32 1.0, %v2894
        %v2896 = vadd.f32 %v1406, %v1843
        %v2897 = vadd.f32 %v1409, %v1847
        %v2898 = vadd.f32 %v1412, %v1853
        %v2899 = vadd.f32 %v1415, %v1857
        %v2900 = vadd.f32 %v1418, %v1863
        %v2901 = vadd.f32 %v1421, %v1867
        %v2902 = vadd.f32 %v1424, %v1873
        %v2903 = vadd.f32 %v1427, %v1877
        %v2904 = vadd.f32 %v1430, %v1883
        %v2905 = vadd.f32 %v1433, %v1887
        %v2906 = vadd.f32 %v1436, %v1893
        %v2907 = vadd.f32 %v1439, %v1897
        %v2908 = vadd.f32 %v1442, %v1903
        %v2909 = vadd.f32 %v1445, %v1907
        %v2910 = vadd.f32 %v1448, %v1913
        %v2911 = vadd.f32 %v1451, %v1917
        %v2912 = vadd.f32 %v1454, %v1923
        %v2913 = vadd.f32 %v1457, %v1927
        %v2914 = vadd.f32 %v1460, %v1933
        %v2915 = vadd.f32 %v1463, %v1937
        %v2916 = vadd.f32 %v1466, %v1943
        %v2917 = vadd.f32 %v1469, %v1947
        %v2918 = vadd.f32 %v1472, %v1953
        %v2919 = vadd.f32 %v1475, %v1957
        %v2920 = vadd.f32 %v1478, %v1963
        %v2921 = vadd.f32 %v1481, %v1967
        %v2922 = vadd.f32 %v1484, %v1973
        %v2923 = vadd.f32 %v1487, %v1977
        %v2924 = vadd.f32 %v1490, %v1983
        %v2925 = vadd.f32 %v1493, %v1987
        %v2926 = vadd.f32 %v1496, %v1993
        %v2927 = vadd.f32 %v1499, %v1997
        %v2928 = vadd.f32 %v1502, %v2003
        %v2929 = vadd.f32 %v1505, %v2007
        %v2930 = vadd.f32 %v1508, %v2013
        %v2931 = vadd.f32 %v1511, %v2017
        %v2932 = vadd.f32 %v1514, %v2023
        %v2933 = vadd.f32 %v1517, %v2027
        %v2934 = vadd.f32 %v1520, %v2033
        %v2935 = vadd.f32 %v1523, %v2037
        %v2936 = vadd.f32 %v1526, %v2043
        %v2937 = vadd.f32 %v1529, %v2047
        %v2938 = vadd.f32 %v1532, %v2053
        %v2939 = vadd.f32 %v1535, %v2057
        %v2940 = vadd.f32 %v1538, %v2063
        %v2941 = vadd.f32 %v1541, %v2067
        %v2942 = vadd.f32 %v1544, %v2073
        %v2943 = vadd.f32 %v1547, %v2077
        %v2944 = vadd.f32 %v1550, %v2083
        %v2945 = vadd.f32 %v1553, %v2087
        %v2946 = vadd.f32 %v1556, %v2093
        %v2947 = vadd.f32 %v1559, %v2097
        %v2948 = vadd.f32 %v1562, %v2103
        %v2949 = vadd.f32 %v1565, %v2107
        %v2950 = vadd.f32 %v1568, %v2113
        %v2951 = vadd.f32 %v1571, %v2117
        %v2952 = vadd.f32 %v1574, %v2123
        %v2953 = vadd.f32 %v1577, %v2127
        %v2954 = vadd.f32 %v1580, %v2133
        %v2955 = vadd.f32 %v1583, %v2137
        %v2956 = vadd.f32 %v1586, %v2143
        %v2957 = vadd.f32 %v1589, %v2147
        %v2958 = vadd.f32 %v1592, %v2153
        %v2959 = vadd.f32 %v1595, %v2157
        %v2960 = vxor.u32 %v2896, 2147483648
        %v2961 = vxor.u32 %v2897, 2147483648
        %v2962 = vxor.u32 %v2898, 2147483648
        %v2963 = vxor.u32 %v2899, 2147483648
        %v2964 = vxor.u32 %v2900, 2147483648
        %v2965 = vxor.u32 %v2901, 2147483648
        %v2966 = vxor.u32 %v2902, 2147483648
        %v2967 = vxor.u32 %v2903, 2147483648
        %v2968 = vxor.u32 %v2904, 2147483648
        %v2969 = vxor.u32 %v2905, 2147483648
        %v2970 = vxor.u32 %v2906, 2147483648
        %v2971 = vxor.u32 %v2907, 2147483648
        %v2972 = vxor.u32 %v2908, 2147483648
        %v2973 = vxor.u32 %v2909, 2147483648
        %v2974 = vxor.u32 %v2910, 2147483648
        %v2975 = vxor.u32 %v2911, 2147483648
        %v2976 = vxor.u32 %v2912, 2147483648
        %v2977 = vxor.u32 %v2913, 2147483648
        %v2978 = vxor.u32 %v2914, 2147483648
        %v2979 = vxor.u32 %v2915, 2147483648
        %v2980 = vxor.u32 %v2916, 2147483648
        %v2981 = vxor.u32 %v2917, 2147483648
        %v2982 = vxor.u32 %v2918, 2147483648
        %v2983 = vxor.u32 %v2919, 2147483648
        %v2984 = vxor.u32 %v2920, 2147483648
        %v2985 = vxor.u32 %v2921, 2147483648
        %v2986 = vxor.u32 %v2922, 2147483648
        %v2987 = vxor.u32 %v2923, 2147483648
        %v2988 = vxor.u32 %v2924, 2147483648
        %v2989 = vxor.u32 %v2925, 2147483648
        %v2990 = vxor.u32 %v2926, 2147483648
        %v2991 = vxor.u32 %v2927, 2147483648
        %v2992 = vxor.u32 %v2928, 2147483648
        %v2993 = vxor.u32 %v2929, 2147483648
        %v2994 = vxor.u32 %v2930, 2147483648
        %v2995 = vxor.u32 %v2931, 2147483648
        %v2996 = vxor.u32 %v2932, 2147483648
        %v2997 = vxor.u32 %v2933, 2147483648
        %v2998 = vxor.u32 %v2934, 2147483648
        %v2999 = vxor.u32 %v2935, 2147483648
        %v3000 = vxor.u32 %v2936, 2147483648
        %v3001 = vxor.u32 %v2937, 2147483648
        %v3002 = vxor.u32 %v2938, 2147483648
        %v3003 = vxor.u32 %v2939, 2147483648
        %v3004 = vxor.u32 %v2940, 2147483648
        %v3005 = vxor.u32 %v2941, 2147483648
        %v3006 = vxor.u32 %v2942, 2147483648
        %v3007 = vxor.u32 %v2943, 2147483648
        %v3008 = vxor.u32 %v2944, 2147483648
        %v3009 = vxor.u32 %v2945, 2147483648
        %v3010 = vxor.u32 %v2946, 2147483648
        %v3011 = vxor.u32 %v2947, 2147483648
        %v3012 = vxor.u32 %v2948, 2147483648
        %v3013 = vxor.u32 %v2949, 2147483648
        %v3014 = vxor.u32 %v2950, 2147483648
        %v3015 = vxor.u32 %v2951, 2147483648
        %v3016 = vxor.u32 %v2952, 2147483648
        %v3017 = vxor.u32 %v2953, 2147483648
        %v3018 = vxor.u32 %v2954, 2147483648
        %v3019 = vxor.u32 %v2955, 2147483648
        %v3020 = vxor.u32 %v2956, 2147483648
        %v3021 = vxor.u32 %v2957, 2147483648
        %v3022 = vxor.u32 %v2958, 2147483648
        %v3023 = vxor.u32 %v2959, 2147483648
        %v3024 = vmul.f32 %v2960, 1.442695
        %v3025 = vpow.pop %v3024
        %v3026 = vmul.f32 %v2961, 1.442695
        %v3027 = vpow.pop %v3026
        %v3028 = vmul.f32 %v2962, 1.442695
        %v3029 = vpow.pop %v3028
        %v3030 = vmul.f32 %v2963, 1.442695
        %v3031 = vpow.pop %v3030
        %v3032 = vmul.f32 %v2964, 1.442695
        %v3033 = vpow.pop %v3032
        %v3034 = vmul.f32 %v2965, 1.442695
        %v3035 = vpow.pop %v3034
        %v3036 = vmul.f32 %v2966, 1.442695
        %v3037 = vpow.pop %v3036
        %v3038 = vmul.f32 %v2967, 1.442695
        %v3039 = vpow.pop %v3038
        %v3040 = vmul.f32 %v2968, 1.442695
        %v3041 = vpow.pop %v3040
        %v3042 = vmul.f32 %v2969, 1.442695
        %v3043 = vpow.pop %v3042
        %v3044 = vmul.f32 %v2970, 1.442695
        %v3045 = vpow.pop %v3044
        %v3046 = vmul.f32 %v2971, 1.442695
        %v3047 = vpow.pop %v3046
        %v3048 = vmul.f32 %v2972, 1.442695
        %v3049 = vpow.pop %v3048
        %v3050 = vmul.f32 %v2973, 1.442695
        %v3051 = vpow.pop %v3050
        %v3052 = vmul.f32 %v2974, 1.442695
        %v3053 = vpow.pop %v3052
        %v3054 = vmul.f32 %v2975, 1.442695
        %v3055 = vpow.pop %v3054
        %v3056 = vmul.f32 %v2976, 1.442695
        %v3057 = vpow.pop %v3056
        %v3058 = vmul.f32 %v2977, 1.442695
        %v3059 = vpow.pop %v3058
        %v3060 = vmul.f32 %v2978, 1.442695
        %v3061 = vpow.pop %v3060
        %v3062 = vmul.f32 %v2979, 1.442695
        %v3063 = vpow.pop %v3062
        %v3064 = vmul.f32 %v2980, 1.442695
        %v3065 = vpow.pop %v3064
        %v3066 = vmul.f32 %v2981, 1.442695
        %v3067 = vpow.pop %v3066
        %v3068 = vmul.f32 %v2982, 1.442695
        %v3069 = vpow.pop %v3068
        %v3070 = vmul.f32 %v2983, 1.442695
        %v3071 = vpow.pop %v3070
        %v3072 = vmul.f32 %v2984, 1.442695
        %v3073 = vpow.pop %v3072
        %v3074 = vmul.f32 %v2985, 1.442695
        %v3075 = vpow.pop %v3074
        %v3076 = vmul.f32 %v2986, 1.442695
        %v3077 = vpow.pop %v3076
        %v3078 = vmul.f32 %v2987, 1.442695
        %v3079 = vpow.pop %v3078
        %v3080 = vmul.f32 %v2988, 1.442695
        %v3081 = vpow.pop %v3080
        %v3082 = vmul.f32 %v2989, 1.442695
        %v3083 = vpow.pop %v3082
        %v3084 = vmul.f32 %v2990, 1.442695
        %v3085 = vpow.pop %v3084
        %v3086 = vmul.f32 %v2991, 1.442695
        %v3087 = vpow.pop %v3086
        %v3088 = vmul.f32 %v2992, 1.442695
        %v3089 = vpow.pop %v3088
        %v3090 = vmul.f32 %v2993, 1.442695
        %v3091 = vpow.pop %v3090
        %v3092 = vmul.f32 %v2994, 1.442695
        %v3093 = vpow.pop %v3092
        %v3094 = vmul.f32 %v2995, 1.442695
        %v3095 = vpow.pop %v3094
        %v3096 = vmul.f32 %v2996, 1.442695
        %v3097 = vpow.pop %v3096
        %v3098 = vmul.f32 %v2997, 1.442695
        %v3099 = vpow.pop %v3098
        %v3100 = vmul.f32 %v2998, 1.442695
        %v3101 = vpow.pop %v3100
        %v3102 = vmul.f32 %v2999, 1.442695
        %v3103 = vpow.pop %v3102
        %v3104 = vmul.f32 %v3000, 1.442695
        %v3105 = vpow.pop %v3104
        %v3106 = vmul.f32 %v3001, 1.442695
        %v3107 = vpow.pop %v3106
        %v3108 = vmul.f32 %v3002, 1.442695
        %v3109 = vpow.pop %v3108
        %v3110 = vmul.f32 %v3003, 1.442695
        %v3111 = vpow.pop %v3110
        %v3112 = vmul.f32 %v3004, 1.442695
        %v3113 = vpow.pop %v3112
        %v3114 = vmul.f32 %v3005, 1.442695
        %v3115 = vpow.pop %v3114
        %v3116 = vmul.f32 %v3006, 1.442695
        %v3117 = vpow.pop %v3116
        %v3118 = vmul.f32 %v3007, 1.442695
        %v3119 = vpow.pop %v3118
        %v3120 = vmul.f32 %v3008, 1.442695
        %v3121 = vpow.pop %v3120
        %v3122 = vmul.f32 %v3009, 1.442695
        %v3123 = vpow.pop %v3122
        %v3124 = vmul.f32 %v3010, 1.442695
        %v3125 = vpow.pop %v3124
        %v3126 = vmul.f32 %v3011, 1.442695
        %v3127 = vpow.pop %v3126
        %v3128 = vmul.f32 %v3012, 1.442695
        %v3129 = vpow.pop %v3128
        %v3130 = vmul.f32 %v3013, 1.442695
        %v3131 = vpow.pop %v3130
        %v3132 = vmul.f32 %v3014, 1.442695
        %v3133 = vpow.pop %v3132
        %v3134 = vmul.f32 %v3015, 1.442695
        %v3135 = vpow.pop %v3134
        %v3136 = vmul.f32 %v3016, 1.442695
        %v3137 = vpow.pop %v3136
        %v3138 = vmul.f32 %v3017, 1.442695
        %v3139 = vpow.pop %v3138
        %v3140 = vmul.f32 %v3018, 1.442695
        %v3141 = vpow.pop %v3140
        %v3142 = vmul.f32 %v3019, 1.442695
        %v3143 = vpow.pop %v3142
        %v3144 = vmul.f32 %v3020, 1.442695
        %v3145 = vpow.pop %v3144
        %v3146 = vmul.f32 %v3021, 1.442695
        %v3147 = vpow.pop %v3146
        %v3148 = vmul.f32 %v3022, 1.442695
        %v3149 = vpow.pop %v3148
        %v3150 = vmul.f32 %v3023, 1.442695
        %v3151 = vpow.pop %v3150
        %v3152 = vadd.f32 %v3025, 1.0
        %v3153 = vadd.f32 %v3027, 1.0
        %v3154 = vadd.f32 %v3029, 1.0
        %v3155 = vadd.f32 %v3031, 1.0
        %v3156 = vadd.f32 %v3033, 1.0
        %v3157 = vadd.f32 %v3035, 1.0
        %v3158 = vadd.f32 %v3037, 1.0
        %v3159 = vadd.f32 %v3039, 1.0
        %v3160 = vadd.f32 %v3041, 1.0
        %v3161 = vadd.f32 %v3043, 1.0
        %v3162 = vadd.f32 %v3045, 1.0
        %v3163 = vadd.f32 %v3047, 1.0
        %v3164 = vadd.f32 %v3049, 1.0
        %v3165 = vadd.f32 %v3051, 1.0
        %v3166 = vadd.f32 %v3053, 1.0
        %v3167 = vadd.f32 %v3055, 1.0
        %v3168 = vadd.f32 %v3057, 1.0
        %v3169 = vadd.f32 %v3059, 1.0
        %v3170 = vadd.f32 %v3061, 1.0
        %v3171 = vadd.f32 %v3063, 1.0
        %v3172 = vadd.f32 %v3065, 1.0
        %v3173 = vadd.f32 %v3067, 1.0
        %v3174 = vadd.f32 %v3069, 1.0
        %v3175 = vadd.f32 %v3071, 1.0
        %v3176 = vadd.f32 %v3073, 1.0
        %v3177 = vadd.f32 %v3075, 1.0
        %v3178 = vadd.f32 %v3077, 1.0
        %v3179 = vadd.f32 %v3079, 1.0
        %v3180 = vadd.f32 %v3081, 1.0
        %v3181 = vadd.f32 %v3083, 1.0
        %v3182 = vadd.f32 %v3085, 1.0
        %v3183 = vadd.f32 %v3087, 1.0
        %v3184 = vadd.f32 %v3089, 1.0
        %v3185 = vadd.f32 %v3091, 1.0
        %v3186 = vadd.f32 %v3093, 1.0
        %v3187 = vadd.f32 %v3095, 1.0
        %v3188 = vadd.f32 %v3097, 1.0
        %v3189 = vadd.f32 %v3099, 1.0
        %v3190 = vadd.f32 %v3101, 1.0
        %v3191 = vadd.f32 %v3103, 1.0
        %v3192 = vadd.f32 %v3105, 1.0
        %v3193 = vadd.f32 %v3107, 1.0
        %v3194 = vadd.f32 %v3109, 1.0
        %v3195 = vadd.f32 %v3111, 1.0
        %v3196 = vadd.f32 %v3113, 1.0
        %v3197 = vadd.f32 %v3115, 1.0
        %v3198 = vadd.f32 %v3117, 1.0
        %v3199 = vadd.f32 %v3119, 1.0
        %v3200 = vadd.f32 %v3121, 1.0
        %v3201 = vadd.f32 %v3123, 1.0
        %v3202 = vadd.f32 %v3125, 1.0
        %v3203 = vadd.f32 %v3127, 1.0
        %v3204 = vadd.f32 %v3129, 1.0
        %v3205 = vadd.f32 %v3131, 1.0
        %v3206 = vadd.f32 %v3133, 1.0
        %v3207 = vadd.f32 %v3135, 1.0
        %v3208 = vadd.f32 %v3137, 1.0
        %v3209 = vadd.f32 %v3139, 1.0
        %v3210 = vadd.f32 %v3141, 1.0
        %v3211 = vadd.f32 %v3143, 1.0
        %v3212 = vadd.f32 %v3145, 1.0
        %v3213 = vadd.f32 %v3147, 1.0
        %v3214 = vadd.f32 %v3149, 1.0
        %v3215 = vadd.f32 %v3151, 1.0
        %v3216 = vrcp.pop %v3152
        %v3217 = vmul.f32 1.0, %v3216
        %v3218 = vrcp.pop %v3153
        %v3219 = vmul.f32 1.0, %v3218
        %v3220 = vrcp.pop %v3154
        %v3221 = vmul.f32 1.0, %v3220
        %v3222 = vrcp.pop %v3155
        %v3223 = vmul.f32 1.0, %v3222
        %v3224 = vrcp.pop %v3156
        %v3225 = vmul.f32 1.0, %v3224
        %v3226 = vrcp.pop %v3157
        %v3227 = vmul.f32 1.0, %v3226
        %v3228 = vrcp.pop %v3158
        %v3229 = vmul.f32 1.0, %v3228
        %v3230 = vrcp.pop %v3159
        %v3231 = vmul.f32 1.0, %v3230
        %v3232 = vrcp.pop %v3160
        %v3233 = vmul.f32 1.0, %v3232
        %v3234 = vrcp.pop %v3161
        %v3235 = vmul.f32 1.0, %v3234
        %v3236 = vrcp.pop %v3162
        %v3237 = vmul.f32 1.0, %v3236
        %v3238 = vrcp.pop %v3163
        %v3239 = vmul.f32 1.0, %v3238
        %v3240 = vrcp.pop %v3164
        %v3241 = vmul.f32 1.0, %v3240
        %v3242 = vrcp.pop %v3165
        %v3243 = vmul.f32 1.0, %v3242
        %v3244 = vrcp.pop %v3166
        %v3245 = vmul.f32 1.0, %v3244
        %v3246 = vrcp.pop %v3167
        %v3247 = vmul.f32 1.0, %v3246
        %v3248 = vrcp.pop %v3168
        %v3249 = vmul.f32 1.0, %v3248
        %v3250 = vrcp.pop %v3169
        %v3251 = vmul.f32 1.0, %v3250
        %v3252 = vrcp.pop %v3170
        %v3253 = vmul.f32 1.0, %v3252
        %v3254 = vrcp.pop %v3171
        %v3255 = vmul.f32 1.0, %v3254
        %v3256 = vrcp.pop %v3172
        %v3257 = vmul.f32 1.0, %v3256
        %v3258 = vrcp.pop %v3173
        %v3259 = vmul.f32 1.0, %v3258
        %v3260 = vrcp.pop %v3174
        %v3261 = vmul.f32 1.0, %v3260
        %v3262 = vrcp.pop %v3175
        %v3263 = vmul.f32 1.0, %v3262
        %v3264 = vrcp.pop %v3176
        %v3265 = vmul.f32 1.0, %v3264
        %v3266 = vrcp.pop %v3177
        %v3267 = vmul.f32 1.0, %v3266
        %v3268 = vrcp.pop %v3178
        %v3269 = vmul.f32 1.0, %v3268
        %v3270 = vrcp.pop %v3179
        %v3271 = vmul.f32 1.0, %v3270
        %v3272 = vrcp.pop %v3180
        %v3273 = vmul.f32 1.0, %v3272
        %v3274 = vrcp.pop %v3181
        %v3275 = vmul.f32 1.0, %v3274
        %v3276 = vrcp.pop %v3182
        %v3277 = vmul.f32 1.0, %v3276
        %v3278 = vrcp.pop %v3183
        %v3279 = vmul.f32 1.0, %v3278
        %v3280 = vrcp.pop %v3184
        %v3281 = vmul.f32 1.0, %v3280
        %v3282 = vrcp.pop %v3185
        %v3283 = vmul.f32 1.0, %v3282
        %v3284 = vrcp.pop %v3186
        %v3285 = vmul.f32 1.0, %v3284
        %v3286 = vrcp.pop %v3187
        %v3287 = vmul.f32 1.0, %v3286
        %v3288 = vrcp.pop %v3188
        %v3289 = vmul.f32 1.0, %v3288
        %v3290 = vrcp.pop %v3189
        %v3291 = vmul.f32 1.0, %v3290
        %v3292 = vrcp.pop %v3190
        %v3293 = vmul.f32 1.0, %v3292
        %v3294 = vrcp.pop %v3191
        %v3295 = vmul.f32 1.0, %v3294
        %v3296 = vrcp.pop %v3192
        %v3297 = vmul.f32 1.0, %v3296
        %v3298 = vrcp.pop %v3193
        %v3299 = vmul.f32 1.0, %v3298
        %v3300 = vrcp.pop %v3194
        %v3301 = vmul.f32 1.0, %v3300
        %v3302 = vrcp.pop %v3195
        %v3303 = vmul.f32 1.0, %v3302
        %v3304 = vrcp.pop %v3196
        %v3305 = vmul.f32 1.0, %v3304
        %v3306 = vrcp.pop %v3197
        %v3307 = vmul.f32 1.0, %v3306
        %v3308 = vrcp.pop %v3198
        %v3309 = vmul.f32 1.0, %v3308
        %v3310 = vrcp.pop %v3199
        %v3311 = vmul.f32 1.0, %v3310
        %v3312 = vrcp.pop %v3200
        %v3313 = vmul.f32 1.0, %v3312
        %v3314 = vrcp.pop %v3201
        %v3315 = vmul.f32 1.0, %v3314
        %v3316 = vrcp.pop %v3202
        %v3317 = vmul.f32 1.0, %v3316
        %v3318 = vrcp.pop %v3203
        %v3319 = vmul.f32 1.0, %v3318
        %v3320 = vrcp.pop %v3204
        %v3321 = vmul.f32 1.0, %v3320
        %v3322 = vrcp.pop %v3205
        %v3323 = vmul.f32 1.0, %v3322
        %v3324 = vrcp.pop %v3206
        %v3325 = vmul.f32 1.0, %v3324
        %v3326 = vrcp.pop %v3207
        %v3327 = vmul.f32 1.0, %v3326
        %v3328 = vrcp.pop %v3208
        %v3329 = vmul.f32 1.0, %v3328
        %v3330 = vrcp.pop %v3209
        %v3331 = vmul.f32 1.0, %v3330
        %v3332 = vrcp.pop %v3210
        %v3333 = vmul.f32 1.0, %v3332
        %v3334 = vrcp.pop %v3211
        %v3335 = vmul.f32 1.0, %v3334
        %v3336 = vrcp.pop %v3212
        %v3337 = vmul.f32 1.0, %v3336
        %v3338 = vrcp.pop %v3213
        %v3339 = vmul.f32 1.0, %v3338
        %v3340 = vrcp.pop %v3214
        %v3341 = vmul.f32 1.0, %v3340
        %v3342 = vrcp.pop %v3215
        %v3343 = vmul.f32 1.0, %v3342
        %v3344 = vmul.f32 %v3217, %v2194
        %v3345 = vmul.f32 %v3219, %v2197
        %v3346 = vmul.f32 %v3221, %v2202
        %v3347 = vmul.f32 %v3223, %v2205
        %v3348 = vmul.f32 %v3225, %v2210
        %v3349 = vmul.f32 %v3227, %v2213
        %v3350 = vmul.f32 %v3229, %v2218
        %v3351 = vmul.f32 %v3231, %v2221
        %v3352 = vmul.f32 %v3233, %v2226
        %v3353 = vmul.f32 %v3235, %v2229
        %v3354 = vmul.f32 %v3237, %v2234
        %v3355 = vmul.f32 %v3239, %v2237
        %v3356 = vmul.f32 %v3241, %v2242
        %v3357 = vmul.f32 %v3243, %v2245
        %v3358 = vmul.f32 %v3245, %v2250
        %v3359 = vmul.f32 %v3247, %v2253
        %v3360 = vmul.f32 %v3249, %v2258
        %v3361 = vmul.f32 %v3251, %v2261
        %v3362 = vmul.f32 %v3253, %v2266
        %v3363 = vmul.f32 %v3255, %v2269
        %v3364 = vmul.f32 %v3257, %v2274
        %v3365 = vmul.f32 %v3259, %v2277
        %v3366 = vmul.f32 %v3261, %v2282
        %v3367 = vmul.f32 %v3263, %v2285
        %v3368 = vmul.f32 %v3265, %v2290
        %v3369 = vmul.f32 %v3267, %v2293
        %v3370 = vmul.f32 %v3269, %v2298
        %v3371 = vmul.f32 %v3271, %v2301
        %v3372 = vmul.f32 %v3273, %v2306
        %v3373 = vmul.f32 %v3275, %v2309
        %v3374 = vmul.f32 %v3277, %v2314
        %v3375 = vmul.f32 %v3279, %v2317
        %v3376 = vmul.f32 %v3281, %v2322
        %v3377 = vmul.f32 %v3283, %v2325
        %v3378 = vmul.f32 %v3285, %v2330
        %v3379 = vmul.f32 %v3287, %v2333
        %v3380 = vmul.f32 %v3289, %v2338
        %v3381 = vmul.f32 %v3291, %v2341
        %v3382 = vmul.f32 %v3293, %v2346
        %v3383 = vmul.f32 %v3295, %v2349
        %v3384 = vmul.f32 %v3297, %v2354
        %v3385 = vmul.f32 %v3299, %v2357
        %v3386 = vmul.f32 %v3301, %v2362
        %v3387 = vmul.f32 %v3303, %v2365
        %v3388 = vmul.f32 %v3305, %v2370
        %v3389 = vmul.f32 %v3307, %v2373
        %v3390 = vmul.f32 %v3309, %v2378
        %v3391 = vmul.f32 %v3311, %v2381
        %v3392 = vmul.f32 %v3313, %v2386
        %v3393 = vmul.f32 %v3315, %v2389
        %v3394 = vmul.f32 %v3317, %v2394
        %v3395 = vmul.f32 %v3319, %v2397
        %v3396 = vmul.f32 %v3321, %v2402
        %v3397 = vmul.f32 %v3323, %v2405
        %v3398 = vmul.f32 %v3325, %v2410
        %v3399 = vmul.f32 %v3327, %v2413
        %v3400 = vmul.f32 %v3329, %v2418
        %v3401 = vmul.f32 %v3331, %v2421
        %v3402 = vmul.f32 %v3333, %v2426
        %v3403 = vmul.f32 %v3335, %v2429
        %v3404 = vmul.f32 %v3337, %v2434
        %v3405 = vmul.f32 %v3339, %v2437
        %v3406 = vmul.f32 %v3341, %v2442
        %v3407 = vmul.f32 %v3343, %v2445
        %v3408 = vadd.f32 %v1407, %v3344
        %v3409 = vadd.f32 %v1410, %v3345
        %v3410 = vadd.f32 %v1413, %v3346
        %v3411 = vadd.f32 %v1416, %v3347
        %v3412 = vadd.f32 %v1419, %v3348
        %v3413 = vadd.f32 %v1422, %v3349
        %v3414 = vadd.f32 %v1425, %v3350
        %v3415 = vadd.f32 %v1428, %v3351
        %v3416 = vadd.f32 %v1431, %v3352
        %v3417 = vadd.f32 %v1434, %v3353
        %v3418 = vadd.f32 %v1437, %v3354
        %v3419 = vadd.f32 %v1440, %v3355
        %v3420 = vadd.f32 %v1443, %v3356
        %v3421 = vadd.f32 %v1446, %v3357
        %v3422 = vadd.f32 %v1449, %v3358
        %v3423 = vadd.f32 %v1452, %v3359
        %v3424 = vadd.f32 %v1455, %v3360
        %v3425 = vadd.f32 %v1458, %v3361
        %v3426 = vadd.f32 %v1461, %v3362
        %v3427 = vadd.f32 %v1464, %v3363
        %v3428 = vadd.f32 %v1467, %v3364
        %v3429 = vadd.f32 %v1470, %v3365
        %v3430 = vadd.f32 %v1473, %v3366
        %v3431 = vadd.f32 %v1476, %v3367
        %v3432 = vadd.f32 %v1479, %v3368
        %v3433 = vadd.f32 %v1482, %v3369
        %v3434 = vadd.f32 %v1485, %v3370
        %v3435 = vadd.f32 %v1488, %v3371
        %v3436 = vadd.f32 %v1491, %v3372
        %v3437 = vadd.f32 %v1494, %v3373
        %v3438 = vadd.f32 %v1497, %v3374
        %v3439 = vadd.f32 %v1500, %v3375
        %v3440 = vadd.f32 %v1503, %v3376
        %v3441 = vadd.f32 %v1506, %v3377
        %v3442 = vadd.f32 %v1509, %v3378
        %v3443 = vadd.f32 %v1512, %v3379
        %v3444 = vadd.f32 %v1515, %v3380
        %v3445 = vadd.f32 %v1518, %v3381
        %v3446 = vadd.f32 %v1521, %v3382
        %v3447 = vadd.f32 %v1524, %v3383
        %v3448 = vadd.f32 %v1527, %v3384
        %v3449 = vadd.f32 %v1530, %v3385
        %v3450 = vadd.f32 %v1533, %v3386
        %v3451 = vadd.f32 %v1536, %v3387
        %v3452 = vadd.f32 %v1539, %v3388
        %v3453 = vadd.f32 %v1542, %v3389
        %v3454 = vadd.f32 %v1545, %v3390
        %v3455 = vadd.f32 %v1548, %v3391
        %v3456 = vadd.f32 %v1551, %v3392
        %v3457 = vadd.f32 %v1554, %v3393
        %v3458 = vadd.f32 %v1557, %v3394
        %v3459 = vadd.f32 %v1560, %v3395
        %v3460 = vadd.f32 %v1563, %v3396
        %v3461 = vadd.f32 %v1566, %v3397
        %v3462 = vadd.f32 %v1569, %v3398
        %v3463 = vadd.f32 %v1572, %v3399
        %v3464 = vadd.f32 %v1575, %v3400
        %v3465 = vadd.f32 %v1578, %v3401
        %v3466 = vadd.f32 %v1581, %v3402
        %v3467 = vadd.f32 %v1584, %v3403
        %v3468 = vadd.f32 %v1587, %v3404
        %v3469 = vadd.f32 %v1590, %v3405
        %v3470 = vadd.f32 %v1593, %v3406
        %v3471 = vadd.f32 %v1596, %v3407
        %v3472 = vtanh.pop %v3408
        %v3473 = vtanh.pop %v3409
        %v3474 = vtanh.pop %v3410
        %v3475 = vtanh.pop %v3411
        %v3476 = vtanh.pop %v3412
        %v3477 = vtanh.pop %v3413
        %v3478 = vtanh.pop %v3414
        %v3479 = vtanh.pop %v3415
        %v3480 = vtanh.pop %v3416
        %v3481 = vtanh.pop %v3417
        %v3482 = vtanh.pop %v3418
        %v3483 = vtanh.pop %v3419
        %v3484 = vtanh.pop %v3420
        %v3485 = vtanh.pop %v3421
        %v3486 = vtanh.pop %v3422
        %v3487 = vtanh.pop %v3423
        %v3488 = vtanh.pop %v3424
        %v3489 = vtanh.pop %v3425
        %v3490 = vtanh.pop %v3426
        %v3491 = vtanh.pop %v3427
        %v3492 = vtanh.pop %v3428
        %v3493 = vtanh.pop %v3429
        %v3494 = vtanh.pop %v3430
        %v3495 = vtanh.pop %v3431
        %v3496 = vtanh.pop %v3432
        %v3497 = vtanh.pop %v3433
        %v3498 = vtanh.pop %v3434
        %v3499 = vtanh.pop %v3435
        %v3500 = vtanh.pop %v3436
        %v3501 = vtanh.pop %v3437
        %v3502 = vtanh.pop %v3438
        %v3503 = vtanh.pop %v3439
        %v3504 = vtanh.pop %v3440
        %v3505 = vtanh.pop %v3441
        %v3506 = vtanh.pop %v3442
        %v3507 = vtanh.pop %v3443
        %v3508 = vtanh.pop %v3444
        %v3509 = vtanh.pop %v3445
        %v3510 = vtanh.pop %v3446
        %v3511 = vtanh.pop %v3447
        %v3512 = vtanh.pop %v3448
        %v3513 = vtanh.pop %v3449
        %v3514 = vtanh.pop %v3450
        %v3515 = vtanh.pop %v3451
        %v3516 = vtanh.pop %v3452
        %v3517 = vtanh.pop %v3453
        %v3518 = vtanh.pop %v3454
        %v3519 = vtanh.pop %v3455
        %v3520 = vtanh.pop %v3456
        %v3521 = vtanh.pop %v3457
        %v3522 = vtanh.pop %v3458
        %v3523 = vtanh.pop %v3459
        %v3524 = vtanh.pop %v3460
        %v3525 = vtanh.pop %v3461
        %v3526 = vtanh.pop %v3462
        %v3527 = vtanh.pop %v3463
        %v3528 = vtanh.pop %v3464
        %v3529 = vtanh.pop %v3465
        %v3530 = vtanh.pop %v3466
        %v3531 = vtanh.pop %v3467
        %v3532 = vtanh.pop %v3468
        %v3533 = vtanh.pop %v3469
        %v3534 = vtanh.pop %v3470
        %v3535 = vtanh.pop %v3471
        %v3536 = vsub.f32 %v295, %v3472
        %v3537 = vsub.f32 %v296, %v3473
        %v3538 = vsub.f32 %v297, %v3474
        %v3539 = vsub.f32 %v298, %v3475
        %v3540 = vsub.f32 %v299, %v3476
        %v3541 = vsub.f32 %v300, %v3477
        %v3542 = vsub.f32 %v301, %v3478
        %v3543 = vsub.f32 %v302, %v3479
        %v3544 = vsub.f32 %v303, %v3480
        %v3545 = vsub.f32 %v304, %v3481
        %v3546 = vsub.f32 %v305, %v3482
        %v3547 = vsub.f32 %v306, %v3483
        %v3548 = vsub.f32 %v307, %v3484
        %v3549 = vsub.f32 %v308, %v3485
        %v3550 = vsub.f32 %v309, %v3486
        %v3551 = vsub.f32 %v310, %v3487
        %v3552 = vsub.f32 %v311, %v3488
        %v3553 = vsub.f32 %v312, %v3489
        %v3554 = vsub.f32 %v313, %v3490
        %v3555 = vsub.f32 %v314, %v3491
        %v3556 = vsub.f32 %v315, %v3492
        %v3557 = vsub.f32 %v316, %v3493
        %v3558 = vsub.f32 %v317, %v3494
        %v3559 = vsub.f32 %v318, %v3495
        %v3560 = vsub.f32 %v319, %v3496
        %v3561 = vsub.f32 %v320, %v3497
        %v3562 = vsub.f32 %v321, %v3498
        %v3563 = vsub.f32 %v322, %v3499
        %v3564 = vsub.f32 %v323, %v3500
        %v3565 = vsub.f32 %v324, %v3501
        %v3566 = vsub.f32 %v325, %v3502
        %v3567 = vsub.f32 %v326, %v3503
        %v3568 = vsub.f32 %v327, %v3504
        %v3569 = vsub.f32 %v328, %v3505
        %v3570 = vsub.f32 %v329, %v3506
        %v3571 = vsub.f32 %v330, %v3507
        %v3572 = vsub.f32 %v331, %v3508
        %v3573 = vsub.f32 %v332, %v3509
        %v3574 = vsub.f32 %v333, %v3510
        %v3575 = vsub.f32 %v334, %v3511
        %v3576 = vsub.f32 %v335, %v3512
        %v3577 = vsub.f32 %v336, %v3513
        %v3578 = vsub.f32 %v337, %v3514
        %v3579 = vsub.f32 %v338, %v3515
        %v3580 = vsub.f32 %v339, %v3516
        %v3581 = vsub.f32 %v340, %v3517
        %v3582 = vsub.f32 %v341, %v3518
        %v3583 = vsub.f32 %v342, %v3519
        %v3584 = vsub.f32 %v343, %v3520
        %v3585 = vsub.f32 %v344, %v3521
        %v3586 = vsub.f32 %v345, %v3522
        %v3587 = vsub.f32 %v346, %v3523
        %v3588 = vsub.f32 %v347, %v3524
        %v3589 = vsub.f32 %v348, %v3525
        %v3590 = vsub.f32 %v349, %v3526
        %v3591 = vsub.f32 %v350, %v3527
        %v3592 = vsub.f32 %v351, %v3528
        %v3593 = vsub.f32 %v352, %v3529
        %v3594 = vsub.f32 %v353, %v3530
        %v3595 = vsub.f32 %v354, %v3531
        %v3596 = vsub.f32 %v355, %v3532
        %v3597 = vsub.f32 %v356, %v3533
        %v3598 = vsub.f32 %v357, %v3534
        %v3599 = vsub.f32 %v358, %v3535
        %v3600 = vmul.f32 %v2769, %v3536
        %v3601 = vmul.f32 %v2771, %v3537
        %v3602 = vmul.f32 %v2773, %v3538
        %v3603 = vmul.f32 %v2775, %v3539
        %v3604 = vmul.f32 %v2777, %v3540
        %v3605 = vmul.f32 %v2779, %v3541
        %v3606 = vmul.f32 %v2781, %v3542
        %v3607 = vmul.f32 %v2783, %v3543
        %v3608 = vmul.f32 %v2785, %v3544
        %v3609 = vmul.f32 %v2787, %v3545
        %v3610 = vmul.f32 %v2789, %v3546
        %v3611 = vmul.f32 %v2791, %v3547
        %v3612 = vmul.f32 %v2793, %v3548
        %v3613 = vmul.f32 %v2795, %v3549
        %v3614 = vmul.f32 %v2797, %v3550
        %v3615 = vmul.f32 %v2799, %v3551
        %v3616 = vmul.f32 %v2801, %v3552
        %v3617 = vmul.f32 %v2803, %v3553
        %v3618 = vmul.f32 %v2805, %v3554
        %v3619 = vmul.f32 %v2807, %v3555
        %v3620 = vmul.f32 %v2809, %v3556
        %v3621 = vmul.f32 %v2811, %v3557
        %v3622 = vmul.f32 %v2813, %v3558
        %v3623 = vmul.f32 %v2815, %v3559
        %v3624 = vmul.f32 %v2817, %v3560
        %v3625 = vmul.f32 %v2819, %v3561
        %v3626 = vmul.f32 %v2821, %v3562
        %v3627 = vmul.f32 %v2823, %v3563
        %v3628 = vmul.f32 %v2825, %v3564
        %v3629 = vmul.f32 %v2827, %v3565
        %v3630 = vmul.f32 %v2829, %v3566
        %v3631 = vmul.f32 %v2831, %v3567
        %v3632 = vmul.f32 %v2833, %v3568
        %v3633 = vmul.f32 %v2835, %v3569
        %v3634 = vmul.f32 %v2837, %v3570
        %v3635 = vmul.f32 %v2839, %v3571
        %v3636 = vmul.f32 %v2841, %v3572
        %v3637 = vmul.f32 %v2843, %v3573
        %v3638 = vmul.f32 %v2845, %v3574
        %v3639 = vmul.f32 %v2847, %v3575
        %v3640 = vmul.f32 %v2849, %v3576
        %v3641 = vmul.f32 %v2851, %v3577
        %v3642 = vmul.f32 %v2853, %v3578
        %v3643 = vmul.f32 %v2855, %v3579
        %v3644 = vmul.f32 %v2857, %v3580
        %v3645 = vmul.f32 %v2859, %v3581
        %v3646 = vmul.f32 %v2861, %v3582
        %v3647 = vmul.f32 %v2863, %v3583
        %v3648 = vmul.f32 %v2865, %v3584
        %v3649 = vmul.f32 %v2867, %v3585
        %v3650 = vmul.f32 %v2869, %v3586
        %v3651 = vmul.f32 %v2871, %v3587
        %v3652 = vmul.f32 %v2873, %v3588
        %v3653 = vmul.f32 %v2875, %v3589
        %v3654 = vmul.f32 %v2877, %v3590
        %v3655 = vmul.f32 %v2879, %v3591
        %v3656 = vmul.f32 %v2881, %v3592
        %v3657 = vmul.f32 %v2883, %v3593
        %v3658 = vmul.f32 %v2885, %v3594
        %v3659 = vmul.f32 %v2887, %v3595
        %v3660 = vmul.f32 %v2889, %v3596
        %v3661 = vmul.f32 %v2891, %v3597
        %v3662 = vmul.f32 %v2893, %v3598
        %v3663 = vmul.f32 %v2895, %v3599
        %v3664 = vadd.f32 %v3472, %v3600
        %v3665 = vadd.f32 %v3473, %v3601
        %v3666 = vadd.f32 %v3474, %v3602
        %v3667 = vadd.f32 %v3475, %v3603
        %v3668 = vadd.f32 %v3476, %v3604
        %v3669 = vadd.f32 %v3477, %v3605
        %v3670 = vadd.f32 %v3478, %v3606
        %v3671 = vadd.f32 %v3479, %v3607
        %v3672 = vadd.f32 %v3480, %v3608
        %v3673 = vadd.f32 %v3481, %v3609
        %v3674 = vadd.f32 %v3482, %v3610
        %v3675 = vadd.f32 %v3483, %v3611
        %v3676 = vadd.f32 %v3484, %v3612
        %v3677 = vadd.f32 %v3485, %v3613
        %v3678 = vadd.f32 %v3486, %v3614
        %v3679 = vadd.f32 %v3487, %v3615
        %v3680 = vadd.f32 %v3488, %v3616
        %v3681 = vadd.f32 %v3489, %v3617
        %v3682 = vadd.f32 %v3490, %v3618
        %v3683 = vadd.f32 %v3491, %v3619
        %v3684 = vadd.f32 %v3492, %v3620
        %v3685 = vadd.f32 %v3493, %v3621
        %v3686 = vadd.f32 %v3494, %v3622
        %v3687 = vadd.f32 %v3495, %v3623
        %v3688 = vadd.f32 %v3496, %v3624
        %v3689 = vadd.f32 %v3497, %v3625
        %v3690 = vadd.f32 %v3498, %v3626
        %v3691 = vadd.f32 %v3499, %v3627
        %v3692 = vadd.f32 %v3500, %v3628
        %v3693 = vadd.f32 %v3501, %v3629
        %v3694 = vadd.f32 %v3502, %v3630
        %v3695 = vadd.f32 %v3503, %v3631
        %v3696 = vadd.f32 %v3504, %v3632
        %v3697 = vadd.f32 %v3505, %v3633
        %v3698 = vadd.f32 %v3506, %v3634
        %v3699 = vadd.f32 %v3507, %v3635
        %v3700 = vadd.f32 %v3508, %v3636
        %v3701 = vadd.f32 %v3509, %v3637
        %v3702 = vadd.f32 %v3510, %v3638
        %v3703 = vadd.f32 %v3511, %v3639
        %v3704 = vadd.f32 %v3512, %v3640
        %v3705 = vadd.f32 %v3513, %v3641
        %v3706 = vadd.f32 %v3514, %v3642
        %v3707 = vadd.f32 %v3515, %v3643
        %v3708 = vadd.f32 %v3516, %v3644
        %v3709 = vadd.f32 %v3517, %v3645
        %v3710 = vadd.f32 %v3518, %v3646
        %v3711 = vadd.f32 %v3519, %v3647
        %v3712 = vadd.f32 %v3520, %v3648
        %v3713 = vadd.f32 %v3521, %v3649
        %v3714 = vadd.f32 %v3522, %v3650
        %v3715 = vadd.f32 %v3523, %v3651
        %v3716 = vadd.f32 %v3524, %v3652
        %v3717 = vadd.f32 %v3525, %v3653
        %v3718 = vadd.f32 %v3526, %v3654
        %v3719 = vadd.f32 %v3527, %v3655
        %v3720 = vadd.f32 %v3528, %v3656
        %v3721 = vadd.f32 %v3529, %v3657
        %v3722 = vadd.f32 %v3530, %v3658
        %v3723 = vadd.f32 %v3531, %v3659
        %v3724 = vadd.f32 %v3532, %v3660
        %v3725 = vadd.f32 %v3533, %v3661
        %v3726 = vadd.f32 %v3534, %v3662
        %v3727 = vadd.f32 %v3535, %v3663
        %3728 = vst [vmem:[%s285] sm:$0xff] %v3664
        %3729 = vst [vmem:[%s285 + $0x8] sm:$0xff] %v3665
        %3730 = vst [vmem:[%s285 + $0x10] sm:$0xff] %v3666
        %3731 = vst [vmem:[%s285 + $0x18] sm:$0xff] %v3667
        %3732 = vst [vmem:[%s285 + $0x20] sm:$0xff] %v3668
        %3733 = vst [vmem:[%s285 + $0x28] sm:$0xff] %v3669
        %3734 = vst [vmem:[%s285 + $0x30] sm:$0xff] %v3670
        %3735 = vst [vmem:[%s285 + $0x38] sm:$0xff] %v3671
        %3736 = vst [vmem:[%s285 + $0x40] sm:$0xff] %v3672
        %3737 = vst [vmem:[%s285 + $0x48] sm:$0xff] %v3673
        %3738 = vst [vmem:[%s285 + $0x50] sm:$0xff] %v3674
        %3739 = vst [vmem:[%s285 + $0x58] sm:$0xff] %v3675
        %3740 = vst [vmem:[%s285 + $0x60] sm:$0xff] %v3676
        %3741 = vst [vmem:[%s285 + $0x68] sm:$0xff] %v3677
        %3742 = vst [vmem:[%s285 + $0x70] sm:$0xff] %v3678
        %3743 = vst [vmem:[%s285 + $0x78] sm:$0xff] %v3679
        %3744 = vst [vmem:[%s285 + $0x80] sm:$0xff] %v3680
        %3745 = vst [vmem:[%s285 + $0x88] sm:$0xff] %v3681
        %3746 = vst [vmem:[%s285 + $0x90] sm:$0xff] %v3682
        %3747 = vst [vmem:[%s285 + $0x98] sm:$0xff] %v3683
        %3748 = vst [vmem:[%s285 + $0xa0] sm:$0xff] %v3684
        %3749 = vst [vmem:[%s285 + $0xa8] sm:$0xff] %v3685
        %3750 = vst [vmem:[%s285 + $0xb0] sm:$0xff] %v3686
        %3751 = vst [vmem:[%s285 + $0xb8] sm:$0xff] %v3687
        %3752 = vst [vmem:[%s285 + $0xc0] sm:$0xff] %v3688
        %3753 = vst [vmem:[%s285 + $0xc8] sm:$0xff] %v3689
        %3754 = vst [vmem:[%s285 + $0xd0] sm:$0xff] %v3690
        %3755 = vst [vmem:[%s285 + $0xd8] sm:$0xff] %v3691
        %3756 = vst [vmem:[%s285 + $0xe0] sm:$0xff] %v3692
        %3757 = vst [vmem:[%s285 + $0xe8] sm:$0xff] %v3693
        %3758 = vst [vmem:[%s285 + $0xf0] sm:$0xff] %v3694
        %3759 = vst [vmem:[%s285 + $0xf8] sm:$0xff] %v3695
        %3760 = vst [vmem:[%s285 + $0x100] sm:$0xff] %v3696
        %3761 = vst [vmem:[%s285 + $0x108] sm:$0xff] %v3697
        %3762 = vst [vmem:[%s285 + $0x110] sm:$0xff] %v3698
        %3763 = vst [vmem:[%s285 + $0x118] sm:$0xff] %v3699
        %3764 = vst [vmem:[%s285 + $0x120] sm:$0xff] %v3700
        %3765 = vst [vmem:[%s285 + $0x128] sm:$0xff] %v3701
        %3766 = vst [vmem:[%s285 + $0x130] sm:$0xff] %v3702
        %3767 = vst [vmem:[%s285 + $0x138] sm:$0xff] %v3703
        %3768 = vst [vmem:[%s285 + $0x140] sm:$0xff] %v3704
        %3769 = vst [vmem:[%s285 + $0x148] sm:$0xff] %v3705
        %3770 = vst [vmem:[%s285 + $0x150] sm:$0xff] %v3706
        %3771 = vst [vmem:[%s285 + $0x158] sm:$0xff] %v3707
        %3772 = vst [vmem:[%s285 + $0x160] sm:$0xff] %v3708
        %3773 = vst [vmem:[%s285 + $0x168] sm:$0xff] %v3709
        %3774 = vst [vmem:[%s285 + $0x170] sm:$0xff] %v3710
        %3775 = vst [vmem:[%s285 + $0x178] sm:$0xff] %v3711
        %3776 = vst [vmem:[%s285 + $0x180] sm:$0xff] %v3712
        %3777 = vst [vmem:[%s285 + $0x188] sm:$0xff] %v3713
        %3778 = vst [vmem:[%s285 + $0x190] sm:$0xff] %v3714
        %3779 = vst [vmem:[%s285 + $0x198] sm:$0xff] %v3715
        %3780 = vst [vmem:[%s285 + $0x1a0] sm:$0xff] %v3716
        %3781 = vst [vmem:[%s285 + $0x1a8] sm:$0xff] %v3717
        %3782 = vst [vmem:[%s285 + $0x1b0] sm:$0xff] %v3718
        %3783 = vst [vmem:[%s285 + $0x1b8] sm:$0xff] %v3719
        %3784 = vst [vmem:[%s285 + $0x1c0] sm:$0xff] %v3720
        %3785 = vst [vmem:[%s285 + $0x1c8] sm:$0xff] %v3721
        %3786 = vst [vmem:[%s285 + $0x1d0] sm:$0xff] %v3722
        %3787 = vst [vmem:[%s285 + $0x1d8] sm:$0xff] %v3723
        %3788 = vst [vmem:[%s285 + $0x1e0] sm:$0xff] %v3724
        %3789 = vst [vmem:[%s285 + $0x1e8] sm:$0xff] %v3725
        %3790 = vst [vmem:[%s285 + $0x1f0] sm:$0xff] %v3726
        %3791 = vst [vmem:[%s285 + $0x1f8] sm:$0xff] %v3727
        %s3792 = sand.u32 %s167, 1
        %s3793 = scalar_lea.sflag [#allocation4], %s3792
        %s3794 = sand.u32 %s167, 1
        %s3795 = smul.addr %s3794, 512
        %s3796 = scalar_lea.vmem [#allocation5], %s3795
        // Predicated region
        $region49: #{tpu_custom_call.1} parent=43 // pred_check
          %p3797 = pneg %p177
        $region50: #{tpu_custom_call.1} parent=43 // pred_check_branch
          %3799 = sbr.rel (%p3797) target = $region52
        $region51: #{tpu_custom_call.1} parent=43 // pred_region
          %s3800 = smul.u32 64, %s23
          %s3802 = ssub.s32 8192, 8192
          %3803 = vsyncadd %s3793, %s3802
          %s3804 = smul.addr %s3800, 128
          %s3805 = scalar_lea.hbm %s6, %s3804
          %s3806 = sshll.u32 %s3796, 4
          %s3807 = int_to_ptr.vmem [resolvable:$true] %s3806
          %3812 = dma.vmem_to_hbm [thread:$0]  %s3807, 8192, %s3805, %s3793, 128, 128, 8
        $region52: #{tpu_custom_call.1} parent=43 // pred_fallthru
          _
      $region44: #{tpu_custom_call.1} parent=5 // pred_fallthru
        _
      %p3813 = scmp.le.s32.totalorder 2, %s18
      // Predicated region
      $region53: #{tpu_custom_call.1} parent=5 // pred_check
        %p3814 = pneg %p3813
      $region54: #{tpu_custom_call.1} parent=5 // pred_check_branch
        %3816 = sbr.rel (%p3814) target = $region56
      $region55: #{tpu_custom_call.1} parent=5 // pred_region
        %s3817 = ssub.s32 %s18, 2
        // Predicated region
        $region57: #{tpu_custom_call.1} parent=55 // pred_check
          %p3818 = pneg %p183
        $region58: #{tpu_custom_call.1} parent=55 // pred_check_branch
          %3820 = sbr.rel (%p3818) target = $region60
        $region59: #{tpu_custom_call.1} parent=55 // pred_region
          %s3821 = sand.u32 %s168, 1
          %s3822 = scalar_lea.sflag [#allocation4], %s3821
          %s3823 = sand.u32 %s168, 1
          %s3824 = smul.addr %s3823, 512
          %s3825 = scalar_lea.vmem [#allocation5], %s3824
          %3826 = dma.done %s3822, 8192
        $region60: #{tpu_custom_call.1} parent=55 // pred_fallthru
          _
      $region56: #{tpu_custom_call.1} parent=5 // pred_fallthru
        _
    $region6: #{tpu_custom_call.1} parent=1 // loop_footer
      %s22 = sadd.s32 1, %s18
    $region7: #{tpu_custom_call.1} parent=1 // loop_footer_branch
      %17 = sbr.rel target = $region3
    $region8: #{tpu_custom_call.1} parent=1 // loop_exit
      _
    %3827 = vsyncpa [#allocation3], 1
    %s3828 = scalar_lea.sflag [#allocation3], 1
    %3829 = vsyncpa %s3828, 1
    %3830 = vsyncpa [#allocation4], 1
    %s3831 = scalar_lea.sflag [#allocation4], 1
    %3832 = vsyncpa %s3831, 1

</llo_original>
